<compile_context>
chip_gen: v5e
topology: v5e:2x2
jax: 0.10.0
libtpu: 0.0.40
codegen_flags: <defaults>
</compile_context>

<pallas_src>
import functools

import jax
import jax.numpy as jnp
from jax.experimental import pallas as pl
from jax.experimental.pallas import tpu as pltpu

EPS = 1e-5
COMPUTE_DTYPE = jnp.bfloat16   # MXU operand dtype (accumulation stays f32)


# ----------------------------------------------------------------------------
# Small helpers
# ----------------------------------------------------------------------------
def _round_up(x, m):
    return ((x + m - 1) // m) * m


def _pick_tile(dim, target, align):
    """Largest tile <= target that divides dim and is a multiple of align,
    falling back to the full dim (always legal for a BlockSpec)."""
    if dim <= target:
        return dim
    t = (min(target, dim) // align) * align
    while t >= align:
        if dim % t == 0:
            return t
        t -= align
    return dim


# ----------------------------------------------------------------------------
# Kernel 1: conv1(1x1)+bn1+relu -> padded VMEM scratch -> conv2(3x3,s)+bn2+relu
# ----------------------------------------------------------------------------
def _fused_conv1_conv2_kernel(x_ref, w1_ref, s1_ref, b1_ref,
                              w2_ref, s2_ref, b2_ref,
                              o_ref, scr_ref, *,
                              stride, H, W, Ho, Wo, th1, th2):
    cin = x_ref.shape[-1]
    planes = w1_ref.shape[1]
    Hp, Wp, _ = scr_ref.shape

    # Zero the scratch once per image (padding ring + alignment columns).
    scr_ref[...] = jnp.zeros(scr_ref.shape, scr_ref.dtype)

    # ---- conv1 (1x1) + bn1 + relu, row-tiled; interior pixels only, written
    # into the padded scratch at offset (1, 1).
    def conv1_step(t, carry):
        r0 = t * th1
        xt = x_ref[pl.ds(r0, th1), :, :].reshape(th1 * W, cin)
        h = jnp.dot(xt, w1_ref[...], preferred_element_type=jnp.float32)
        h = jnp.maximum(h * s1_ref[...] + b1_ref[...], 0.0)
        scr_ref[pl.ds(r0 + 1, th1), 1:W + 1, :] = (
            h.reshape(th1, W, planes).astype(scr_ref.dtype))
        return carry

    jax.lax.fori_loop(0, H // th1, conv1_step, 0)

    # ---- conv2 (3x3, stride) + bn2 + relu, row-tiled; one K = 9*planes
    # im2col matmul per row tile (no strided ref reads: decimation is done by
    # reshape on the contiguously loaded rows).
    rows_in = th2 * stride + 2

    def conv2_step(t, carry):
        r0 = t * th2
        patch = scr_ref[pl.ds(r0 * stride, rows_in), :, :]   # (rows_in, Wp, planes)
        taps = []
        for kh in range(3):
            ph = patch[kh:kh + th2 * stride]
            if stride > 1:
                ph = ph.reshape(th2, stride, Wp, planes)[:, 0]
            for kw in range(3):
                pw = ph[:, kw:kw + Wo * stride]
                if stride > 1:
                    pw = pw.reshape(th2, Wo, stride, planes)[:, :, 0]
                taps.append(pw)                               # (th2, Wo, planes)
        col = jnp.concatenate(taps, axis=-1).reshape(th2 * Wo, 9 * planes)
        acc = jnp.dot(col, w2_ref[...], preferred_element_type=jnp.float32)
        out = jnp.maximum(acc * s2_ref[...] + b2_ref[...], 0.0)
        o_ref[pl.ds(r0 * Wo, th2 * Wo), :] = out.astype(o_ref.dtype)
        return carry

    jax.lax.fori_loop(0, Ho // th2, conv2_step, 0)


def fused_conv1_conv2(x_nhwc, w1, s1, b1, w2p, s2, b2, *, stride):
    N, H, W, Cin = x_nhwc.shape
    planes = w1.shape[1]
    Ho = (H - 1) // stride + 1
    Wo = (W - 1) // stride + 1
    Hp = Ho * stride + 2
    Wp = _round_up(Wo * stride + 2, 8)        # sublane-aligned padded width
    th1 = _pick_tile(H, 8, 1)                 # conv1 row tile
    th2 = _pick_tile(Ho, 8, 1)                # conv2 output-row tile

    kernel = functools.partial(
        _fused_conv1_conv2_kernel, stride=stride,
        H=H, W=W, Ho=Ho, Wo=Wo, th1=th1, th2=th2)

    return pl.pallas_call(
        kernel,
        out_shape=jax.ShapeDtypeStruct((N * Ho * Wo, planes), COMPUTE_DTYPE),
        grid=(N,),
        in_specs=[
            pl.BlockSpec((None, H, W, Cin), lambda n: (n, 0, 0, 0)),
            pl.BlockSpec((Cin, planes), lambda n: (0, 0)),
            pl.BlockSpec((1, planes), lambda n: (0, 0)),
            pl.BlockSpec((1, planes), lambda n: (0, 0)),
            pl.BlockSpec((9 * planes, planes), lambda n: (0, 0)),
            pl.BlockSpec((1, planes), lambda n: (0, 0)),
            pl.BlockSpec((1, planes), lambda n: (0, 0)),
        ],
        out_specs=pl.BlockSpec((Ho * Wo, planes), lambda n: (n, 0)),
        scratch_shapes=[pltpu.VMEM((Hp, Wp, planes), COMPUTE_DTYPE)],
        compiler_params=pltpu.CompilerParams(
            dimension_semantics=("parallel",),
            vmem_limit_bytes=32 * 1024 * 1024),
    )(x_nhwc, w1, s1, b1, w2p, s2, b2)


# ----------------------------------------------------------------------------
# Kernel 2: conv3 (1x1) + bn3 + shortcut (projection or identity) + add + relu
# ----------------------------------------------------------------------------
def _conv3_proj_kernel(x1_ref, xs_ref, w3_ref, ws_ref,
                       s3_ref, b3_ref, ss_ref, bs_ref, o_ref):
    a = jnp.dot(x1_ref[...], w3_ref[...], preferred_element_type=jnp.float32)
    s = jnp.dot(xs_ref[...], ws_ref[...], preferred_element_type=jnp.float32)
    out = (a * s3_ref[...] + b3_ref[...]) + (s * ss_ref[...] + bs_ref[...])
    o_ref[...] = jnp.maximum(out, 0.0).astype(o_ref.dtype)


def _conv3_ident_kernel(x1_ref, xs_ref, w3_ref, s3_ref, b3_ref, o_ref):
    a = jnp.dot(x1_ref[...], w3_ref[...], preferred_element_type=jnp.float32)
    out = a * s3_ref[...] + b3_ref[...] + xs_ref[...].astype(jnp.float32)
    o_ref[...] = jnp.maximum(out, 0.0).astype(o_ref.dtype)


def conv3_shortcut(x1, xs, w3, s3, b3, ws=None, ss=None, bs=None, *,
                   out_dtype=jnp.float32, tm=512, tn=512):
    M, K3 = x1.shape
    Nc = w3.shape[1]
    TM = _pick_tile(M, tm, 16)        # 16-aligned: bf16 sublane packing
    TN = _pick_tile(Nc, tn, 128)
    grid = (M // TM, Nc // TN)

    if ws is not None:
        Ks = xs.shape[1]
        kernel = _conv3_proj_kernel
        in_specs = [
            pl.BlockSpec((TM, K3), lambda i, j: (i, 0)),
            pl.BlockSpec((TM, Ks), lambda i, j: (i, 0)),
            pl.BlockSpec((K3, TN), lambda i, j: (0, j)),
            pl.BlockSpec((Ks, TN), lambda i, j: (0, j)),
            pl.BlockSpec((1, TN), lambda i, j: (0, j)),
            pl.BlockSpec((1, TN), lambda i, j: (0, j)),
            pl.BlockSpec((1, TN), lambda i, j: (0, j)),
            pl.BlockSpec((1, TN), lambda i, j: (0, j)),
        ]
        args = (x1, xs, w3, ws, s3, b3, ss, bs)
    else:
        kernel = _conv3_ident_kernel
        in_specs = [
            pl.BlockSpec((TM, K3), lambda i, j: (i, 0)),
            pl.BlockSpec((TM, TN), lambda i, j: (i, j)),
            pl.BlockSpec((K3, TN), lambda i, j: (0, j)),
            pl.BlockSpec((1, TN), lambda i, j: (0, j)),
            pl.BlockSpec((1, TN), lambda i, j: (0, j)),
        ]
        args = (x1, xs, w3, s3, b3)

    return pl.pallas_call(
        kernel,
        out_shape=jax.ShapeDtypeStruct((M, Nc), out_dtype),
        grid=grid,
        in_specs=in_specs,
        out_specs=pl.BlockSpec((TM, TN), lambda i, j: (i, j)),
        compiler_params=pltpu.CompilerParams(
            dimension_semantics=("parallel", "parallel"),
            vmem_limit_bytes=32 * 1024 * 1024),
    )(*args)


# ----------------------------------------------------------------------------
# Bottleneck forward
# ----------------------------------------------------------------------------
def _fold_bn(bn):
    scale = bn["gamma"] / jnp.sqrt(bn["var"] + EPS)
    bias = bn["beta"] - bn["mean"] * scale
    return (scale.reshape(1, -1).astype(jnp.float32),
            bias.reshape(1, -1).astype(jnp.float32))


def bottleneck_forward(x_nchw, params, stride, out_dtype=jnp.float32):
    x = jnp.transpose(x_nchw, (0, 2, 3, 1)).astype(COMPUTE_DTYPE)  # -> NHWC
    N, H, W, Cin = x.shape
    planes = params["w1"].shape[1]
    exp_planes = params["w3"].shape[1]
    needs_proj = (stride != 1) or (Cin != exp_planes)

    w1 = params["w1"].astype(COMPUTE_DTYPE)
    w2p = params["w2"].reshape(9 * planes, planes).astype(COMPUTE_DTYPE)
    w3 = params["w3"].astype(COMPUTE_DTYPE)
    s1, b1 = _fold_bn(params["bn1"])
    s2, b2 = _fold_bn(params["bn2"])
    s3, b3 = _fold_bn(params["bn3"])

    # conv1 + bn1 + relu + pad + conv2(3x3, stride) + bn2 + relu (one kernel).
    out2 = fused_conv1_conv2(x, w1, s1, b1, w2p, s2, b2, stride=stride)
    Ho = (H - 1) // stride + 1
    Wo = (W - 1) // stride + 1
    M = N * Ho * Wo

    # conv3 + bn3 + shortcut + residual + relu (one kernel).
    if needs_proj:
        ws = params["ws"].astype(COMPUTE_DTYPE)
        ss, bs = _fold_bn(params["bns"])
        xs = x if stride == 1 else x[:, ::stride, ::stride, :]
        out = conv3_shortcut(out2, xs.reshape(M, Cin), w3, s3, b3,
                             ws, ss, bs, out_dtype=out_dtype)
    else:
        out = conv3_shortcut(out2, x.reshape(M, exp_planes), w3, s3, b3,
                             out_dtype=out_dtype)

    out = out.reshape(N, Ho, Wo, exp_planes)
    return jnp.transpose(out, (0, 3, 1, 2))   # -> NCHW


# ----------------------------------------------------------------------------
# Pure-JAX reference (for correctness check)
# ----------------------------------------------------------------------------
def _ref_conv(x_nchw, w_hwio, stride, padding):
    return jax.lax.conv_general_dilated(
        x_nchw, w_hwio, window_strides=(stride, stride), padding=padding,
        dimension_numbers=("NCHW", "HWIO", "NCHW"))


def _ref_bn(x_nchw, bn):
    s = bn["gamma"] / jnp.sqrt(bn["var"] + EPS)
    b = bn["beta"] - bn["mean"] * s
    return x_nchw * s[None, :, None, None] + b[None, :, None, None]


def ref_bottleneck(x, params, stride):
    in_planes = x.shape[1]
    planes = params["w1"].shape[1]
    exp_planes = params["w3"].shape[1]
    w1 = params["w1"].reshape(1, 1, in_planes, planes)
    w2 = params["w2"]  # (3,3,planes,planes) HWIO
    w3 = params["w3"].reshape(1, 1, planes, exp_planes)

    out = jax.nn.relu(_ref_bn(_ref_conv(x, w1, 1, "VALID"), params["bn1"]))
    out = jax.nn.relu(_ref_bn(_ref_conv(out, w2, stride, ((1, 1), (1, 1))),
                              params["bn2"]))
    out = _ref_bn(_ref_conv(out, w3, 1, "VALID"), params["bn3"])
    if stride != 1 or in_planes != exp_planes:
        ws = params["ws"].reshape(1, 1, in_planes, exp_planes)
        sc = _ref_bn(_ref_conv(x, ws, stride, "VALID"), params["bns"])
    else:
        sc = x
    return jax.nn.relu(out + sc)


# ----------------------------------------------------------------------------
# Parameter construction
# ----------------------------------------------------------------------------
def make_params(key, in_planes, planes, stride):
    exp_planes = 4 * planes
    keys = jax.random.split(key, 12)

    def bn(kg, kb, c):
        return {
            "gamma": jax.random.uniform(kg, (c,), jnp.float32, 0.5, 1.5),
            "beta": 0.1 * jax.random.normal(kb, (c,), jnp.float32),
            "mean": 0.05 * jax.random.normal(kg, (c,), jnp.float32),
            "var": jax.random.uniform(kb, (c,), jnp.float32, 0.5, 1.5),
        }

    params = {
        "w1": 0.2 * jax.random.normal(keys[0], (in_planes, planes), jnp.float32),
        "w2": 0.2 * jax.random.normal(keys[1], (3, 3, planes, planes), jnp.float32),
        "w3": 0.2 * jax.random.normal(keys[2], (planes, exp_planes), jnp.float32),
        "bn1": bn(keys[3], keys[4], planes),
        "bn2": bn(keys[5], keys[6], planes),
        "bn3": bn(keys[7], keys[8], exp_planes),
    }
    if stride != 1 or in_planes != exp_planes:
        params["ws"] = 0.2 * jax.random.normal(
            keys[9], (in_planes, exp_planes), jnp.float32)
        params["bns"] = bn(keys[10], keys[11], exp_planes)
    return params


# ----------------------------------------------------------------------------
if __name__ == "__main__":
    key = jax.random.PRNGKey(0)
    fwd = jax.jit(bottleneck_forward, static_argnums=2)

    # (in_planes, planes, stride, H): projection+stride, identity, projection.
    cases = [(4, 4, 2, 16), (16, 4, 1, 16), (8, 4, 1, 16)]
    for idx, (in_planes, planes, stride, hw) in enumerate(cases):
        kx, kp = jax.random.split(jax.random.fold_in(key, idx))
        x = jax.random.normal(kx, (2, in_planes, hw, hw), jnp.float32)  # NCHW
        params = make_params(kp, in_planes, planes, stride)

        out = jax.block_until_ready(fwd(x, params, stride))
        ref = jax.block_until_ready(ref_bottleneck(x, params, stride))
        assert out.shape == ref.shape, (out.shape, ref.shape)
        # bf16 MXU operands (f32 accumulation) -> bf16-level tolerance.
        if not jnp.allclose(out, ref, rtol=3e-2, atol=3e-2):
            err = float(jnp.max(jnp.abs(out - ref)))
            raise AssertionError(
                f"case {idx} mismatch vs JAX reference (max abs err {err})")

    print("KERNEL_OK")
</pallas_src>

<mosaic_0001>
module attributes {stable_mosaic.version = 11 : i64} {
  func.func @_fused_conv1_conv2_kernel(%arg0: i32, %arg1: memref<1x16x16x4xbf16, #tpu.memory_space<vmem>>, %arg2: memref<4x4xbf16, #tpu.memory_space<vmem>>, %arg3: memref<1x4xf32, #tpu.memory_space<vmem>>, %arg4: memref<1x4xf32, #tpu.memory_space<vmem>>, %arg5: memref<36x4xbf16, #tpu.memory_space<vmem>>, %arg6: memref<1x4xf32, #tpu.memory_space<vmem>>, %arg7: memref<1x4xf32, #tpu.memory_space<vmem>>, %arg8: memref<64x4xbf16, #tpu.memory_space<vmem>>, %arg9: memref<18x24x4xbf16, #tpu.memory_space<vmem>>) attributes {dimension_semantics = [#tpu.dimension_semantics<parallel>], iteration_bounds = array<i64: 2>, scalar_prefetch = 0 : i64, scratch_operands = 1 : i64, tpu.core_type = #tpu.core_type<tc>, window_params = [{transform_indices = @transform_0, window_bounds = array<i64: 1, 16, 16, 4>}, {pipeline_mode = #tpu.pipeline_mode<synchronous>, transform_indices = @transform_1, window_bounds = array<i64: 4, 4>}, {pipeline_mode = #tpu.pipeline_mode<synchronous>, transform_indices = @transform_2, window_bounds = array<i64: 1, 4>}, {pipeline_mode = #tpu.pipeline_mode<synchronous>, transform_indices = @transform_3, window_bounds = array<i64: 1, 4>}, {pipeline_mode = #tpu.pipeline_mode<synchronous>, transform_indices = @transform_4, window_bounds = array<i64: 36, 4>}, {pipeline_mode = #tpu.pipeline_mode<synchronous>, transform_indices = @transform_5, window_bounds = array<i64: 1, 4>}, {pipeline_mode = #tpu.pipeline_mode<synchronous>, transform_indices = @transform_6, window_bounds = array<i64: 1, 4>}, {transform_indices = @transform_7, window_bounds = array<i64: 64, 4>}]} {
    %cst = arith.constant 0.000000e+00 : bf16
    %0 = vector.broadcast %cst : bf16 to vector<18x24x4xbf16>
    %c0 = arith.constant 0 : index
    %c0_0 = arith.constant 0 : index
    %c0_1 = arith.constant 0 : index
    %1 = vector.load %arg9[%c0, %c0_0, %c0_1] : memref<18x24x4xbf16, #tpu.memory_space<vmem>>, vector<18x24x4xbf16>
    tpu.vector_store %arg9[%c0, %c0_0, %c0_1], %0 {strides = array<i32>} : memref<18x24x4xbf16, #tpu.memory_space<vmem>>, vector<18x24x4xbf16>,
    %c0_i32 = arith.constant 0 : i32
    %c2_i32 = arith.constant 2 : i32
    %2 = arith.addi %c0_i32, %c2_i32 : i32
    %c1_i32 = arith.constant 1 : i32
    scf.for %arg10 = %c0_i32 to %2 step %c1_i32  : i32 {
      %c8_i32_18 = arith.constant 8 : i32
      %71 = arith.muli %arg10, %c8_i32_18 : i32
      %c0_19 = arith.constant 0 : index
      %72 = arith.index_cast %71 : i32 to index
      %c0_20 = arith.constant 0 : index
      %c0_21 = arith.constant 0 : index
      %73 = vector.load %arg1[%c0_19, %72, %c0_20, %c0_21] : memref<1x16x16x4xbf16, #tpu.memory_space<vmem>>, vector<1x8x16x4xbf16>
      %74 = vector.shape_cast %73 : vector<1x8x16x4xbf16> to vector<8x16x4xbf16>
      %75 = vector.shape_cast %74 : vector<8x16x4xbf16> to vector<128x4xbf16>
      %c0_22 = arith.constant 0 : index
      %c0_23 = arith.constant 0 : index
      %76 = vector.load %arg2[%c0_22, %c0_23] : memref<4x4xbf16, #tpu.memory_space<vmem>>, vector<4x4xbf16>
      %cst_24 = arith.constant dense<0.000000e+00> : vector<128x4xf32>
      %77 = tpu.matmul %75, %76, %cst_24 {dimension_numbers = #tpu.dot_dimension_numbers<[1], [0], [0], [1], [0, 0, 1, 1], [], []>} : vector<128x4xbf16>, vector<4x4xbf16>, vector<128x4xf32> -> vector<128x4xf32>
      %c0_25 = arith.constant 0 : index
      %c0_26 = arith.constant 0 : index
      %78 = vector.load %arg3[%c0_25, %c0_26] : memref<1x4xf32, #tpu.memory_space<vmem>>, vector<1x4xf32>
      %79 = vector.broadcast %78 : vector<1x4xf32> to vector<128x4xf32>
      %80 = arith.mulf %77, %79 : vector<128x4xf32>
      %c0_27 = arith.constant 0 : index
      %c0_28 = arith.constant 0 : index
      %81 = vector.load %arg4[%c0_27, %c0_28] : memref<1x4xf32, #tpu.memory_space<vmem>>, vector<1x4xf32>
      %82 = vector.broadcast %81 : vector<1x4xf32> to vector<128x4xf32>
      %83 = arith.addf %80, %82 : vector<128x4xf32>
      %cst_29 = arith.constant 0.000000e+00 : f32
      %84 = vector.broadcast %cst_29 : f32 to vector<128x4xf32>
      %85 = arith.maximumf %83, %84 : vector<128x4xf32>
      %86 = vector.shape_cast %85 : vector<128x4xf32> to vector<8x16x4xf32>
      %87 = arith.truncf %86 : vector<8x16x4xf32> to vector<8x16x4xbf16>
      %c1_i32_30 = arith.constant 1 : i32
      %88 = arith.addi %71, %c1_i32_30 : i32
      %89 = arith.index_cast %88 : i32 to index
      %c1 = arith.constant 1 : index
      %c0_31 = arith.constant 0 : index
      %90 = vector.load %arg9[%89, %c1, %c0_31] : memref<18x24x4xbf16, #tpu.memory_space<vmem>>, vector<8x16x4xbf16>
      tpu.vector_store %arg9[%89, %c1, %c0_31], %87 {strides = array<i32>} : memref<18x24x4xbf16, #tpu.memory_space<vmem>>, vector<8x16x4xbf16>,
    }
    %c2_i32_2 = arith.constant 2 : i32
    %c0_i32_3 = arith.constant 0 : i32
    %c8_i32 = arith.constant 8 : i32
    %3 = arith.muli %c0_i32_3, %c8_i32 : i32
    %c2_i32_4 = arith.constant 2 : i32
    %4 = arith.muli %3, %c2_i32_4 : i32
    %5 = arith.index_cast %4 : i32 to index
    %c0_5 = arith.constant 0 : index
    %c0_6 = arith.constant 0 : index
    %6 = vector.load %arg9[%5, %c0_5, %c0_6] : memref<18x24x4xbf16, #tpu.memory_space<vmem>>, vector<18x24x4xbf16>
    %7 = vector.extract_strided_slice %6 {offsets = [0, 0, 0], sizes = [16, 24, 4], strides = [1, 1, 1]} : vector<18x24x4xbf16> to vector<16x24x4xbf16>
    %8 = vector.shape_cast %7 : vector<16x24x4xbf16> to vector<8x2x24x4xbf16>
    %9 = vector.extract_strided_slice %8 {offsets = [0, 0, 0, 0], sizes = [8, 1, 24, 4], strides = [1, 1, 1, 1]} : vector<8x2x24x4xbf16> to vector<8x1x24x4xbf16>
    %10 = vector.shape_cast %9 : vector<8x1x24x4xbf16> to vector<8x24x4xbf16>
    %11 = vector.extract_strided_slice %10 {offsets = [0, 0, 0], sizes = [8, 16, 4], strides = [1, 1, 1]} : vector<8x24x4xbf16> to vector<8x16x4xbf16>
    %12 = vector.shape_cast %11 : vector<8x16x4xbf16> to vector<8x8x2x4xbf16>
    %13 = vector.extract_strided_slice %12 {offsets = [0, 0, 0, 0], sizes = [8, 8, 1, 4], strides = [1, 1, 1, 1]} : vector<8x8x2x4xbf16> to vector<8x8x1x4xbf16>
    %14 = vector.shape_cast %13 : vector<8x8x1x4xbf16> to vector<8x8x4xbf16>
    %15 = vector.extract_strided_slice %10 {offsets = [0, 1, 0], sizes = [8, 16, 4], strides = [1, 1, 1]} : vector<8x24x4xbf16> to vector<8x16x4xbf16>
    %16 = vector.shape_cast %15 : vector<8x16x4xbf16> to vector<8x8x2x4xbf16>
    %17 = vector.extract_strided_slice %16 {offsets = [0, 0, 0, 0], sizes = [8, 8, 1, 4], strides = [1, 1, 1, 1]} : vector<8x8x2x4xbf16> to vector<8x8x1x4xbf16>
    %18 = vector.shape_cast %17 : vector<8x8x1x4xbf16> to vector<8x8x4xbf16>
    %19 = vector.extract_strided_slice %10 {offsets = [0, 2, 0], sizes = [8, 16, 4], strides = [1, 1, 1]} : vector<8x24x4xbf16> to vector<8x16x4xbf16>
    %20 = vector.shape_cast %19 : vector<8x16x4xbf16> to vector<8x8x2x4xbf16>
    %21 = vector.extract_strided_slice %20 {offsets = [0, 0, 0, 0], sizes = [8, 8, 1, 4], strides = [1, 1, 1, 1]} : vector<8x8x2x4xbf16> to vector<8x8x1x4xbf16>
    %22 = vector.shape_cast %21 : vector<8x8x1x4xbf16> to vector<8x8x4xbf16>
    %23 = vector.extract_strided_slice %6 {offsets = [1, 0, 0], sizes = [16, 24, 4], strides = [1, 1, 1]} : vector<18x24x4xbf16> to vector<16x24x4xbf16>
    %24 = vector.shape_cast %23 : vector<16x24x4xbf16> to vector<8x2x24x4xbf16>
    %25 = vector.extract_strided_slice %24 {offsets = [0, 0, 0, 0], sizes = [8, 1, 24, 4], strides = [1, 1, 1, 1]} : vector<8x2x24x4xbf16> to vector<8x1x24x4xbf16>
    %26 = vector.shape_cast %25 : vector<8x1x24x4xbf16> to vector<8x24x4xbf16>
    %27 = vector.extract_strided_slice %26 {offsets = [0, 0, 0], sizes = [8, 16, 4], strides = [1, 1, 1]} : vector<8x24x4xbf16> to vector<8x16x4xbf16>
    %28 = vector.shape_cast %27 : vector<8x16x4xbf16> to vector<8x8x2x4xbf16>
    %29 = vector.extract_strided_slice %28 {offsets = [0, 0, 0, 0], sizes = [8, 8, 1, 4], strides = [1, 1, 1, 1]} : vector<8x8x2x4xbf16> to vector<8x8x1x4xbf16>
    %30 = vector.shape_cast %29 : vector<8x8x1x4xbf16> to vector<8x8x4xbf16>
    %31 = vector.extract_strided_slice %26 {offsets = [0, 1, 0], sizes = [8, 16, 4], strides = [1, 1, 1]} : vector<8x24x4xbf16> to vector<8x16x4xbf16>
    %32 = vector.shape_cast %31 : vector<8x16x4xbf16> to vector<8x8x2x4xbf16>
    %33 = vector.extract_strided_slice %32 {offsets = [0, 0, 0, 0], sizes = [8, 8, 1, 4], strides = [1, 1, 1, 1]} : vector<8x8x2x4xbf16> to vector<8x8x1x4xbf16>
    %34 = vector.shape_cast %33 : vector<8x8x1x4xbf16> to vector<8x8x4xbf16>
    %35 = vector.extract_strided_slice %26 {offsets = [0, 2, 0], sizes = [8, 16, 4], strides = [1, 1, 1]} : vector<8x24x4xbf16> to vector<8x16x4xbf16>
    %36 = vector.shape_cast %35 : vector<8x16x4xbf16> to vector<8x8x2x4xbf16>
    %37 = vector.extract_strided_slice %36 {offsets = [0, 0, 0, 0], sizes = [8, 8, 1, 4], strides = [1, 1, 1, 1]} : vector<8x8x2x4xbf16> to vector<8x8x1x4xbf16>
    %38 = vector.shape_cast %37 : vector<8x8x1x4xbf16> to vector<8x8x4xbf16>
    %39 = vector.extract_strided_slice %6 {offsets = [2, 0, 0], sizes = [16, 24, 4], strides = [1, 1, 1]} : vector<18x24x4xbf16> to vector<16x24x4xbf16>
    %40 = vector.shape_cast %39 : vector<16x24x4xbf16> to vector<8x2x24x4xbf16>
    %41 = vector.extract_strided_slice %40 {offsets = [0, 0, 0, 0], sizes = [8, 1, 24, 4], strides = [1, 1, 1, 1]} : vector<8x2x24x4xbf16> to vector<8x1x24x4xbf16>
    %42 = vector.shape_cast %41 : vector<8x1x24x4xbf16> to vector<8x24x4xbf16>
    %43 = vector.extract_strided_slice %42 {offsets = [0, 0, 0], sizes = [8, 16, 4], strides = [1, 1, 1]} : vector<8x24x4xbf16> to vector<8x16x4xbf16>
    %44 = vector.shape_cast %43 : vector<8x16x4xbf16> to vector<8x8x2x4xbf16>
    %45 = vector.extract_strided_slice %44 {offsets = [0, 0, 0, 0], sizes = [8, 8, 1, 4], strides = [1, 1, 1, 1]} : vector<8x8x2x4xbf16> to vector<8x8x1x4xbf16>
    %46 = vector.shape_cast %45 : vector<8x8x1x4xbf16> to vector<8x8x4xbf16>
    %47 = vector.extract_strided_slice %42 {offsets = [0, 1, 0], sizes = [8, 16, 4], strides = [1, 1, 1]} : vector<8x24x4xbf16> to vector<8x16x4xbf16>
    %48 = vector.shape_cast %47 : vector<8x16x4xbf16> to vector<8x8x2x4xbf16>
    %49 = vector.extract_strided_slice %48 {offsets = [0, 0, 0, 0], sizes = [8, 8, 1, 4], strides = [1, 1, 1, 1]} : vector<8x8x2x4xbf16> to vector<8x8x1x4xbf16>
    %50 = vector.shape_cast %49 : vector<8x8x1x4xbf16> to vector<8x8x4xbf16>
    %51 = vector.extract_strided_slice %42 {offsets = [0, 2, 0], sizes = [8, 16, 4], strides = [1, 1, 1]} : vector<8x24x4xbf16> to vector<8x16x4xbf16>
    %52 = vector.shape_cast %51 : vector<8x16x4xbf16> to vector<8x8x2x4xbf16>
    %53 = vector.extract_strided_slice %52 {offsets = [0, 0, 0, 0], sizes = [8, 8, 1, 4], strides = [1, 1, 1, 1]} : vector<8x8x2x4xbf16> to vector<8x8x1x4xbf16>
    %54 = vector.shape_cast %53 : vector<8x8x1x4xbf16> to vector<8x8x4xbf16>
    %55 = tpu.concatenate %14, %18, %22, %30, %34, %38, %46, %50, %54 in 2 : vector<8x8x4xbf16>, vector<8x8x4xbf16>, vector<8x8x4xbf16>, vector<8x8x4xbf16>, vector<8x8x4xbf16>, vector<8x8x4xbf16>, vector<8x8x4xbf16>, vector<8x8x4xbf16>, vector<8x8x4xbf16> -> vector<8x8x36xbf16>
    %56 = vector.shape_cast %55 : vector<8x8x36xbf16> to vector<64x36xbf16>
    %c0_7 = arith.constant 0 : index
    %c0_8 = arith.constant 0 : index
    %57 = vector.load %arg5[%c0_7, %c0_8] : memref<36x4xbf16, #tpu.memory_space<vmem>>, vector<36x4xbf16>
    %cst_9 = arith.constant dense<0.000000e+00> : vector<64x4xf32>
    %58 = tpu.matmul %56, %57, %cst_9 {dimension_numbers = #tpu.dot_dimension_numbers<[1], [0], [0], [1], [0, 0, 1, 1], [], []>} : vector<64x36xbf16>, vector<36x4xbf16>, vector<64x4xf32> -> vector<64x4xf32>
    %c0_10 = arith.constant 0 : index
    %c0_11 = arith.constant 0 : index
    %59 = vector.load %arg6[%c0_10, %c0_11] : memref<1x4xf32, #tpu.memory_space<vmem>>, vector<1x4xf32>
    %60 = vector.broadcast %59 : vector<1x4xf32> to vector<64x4xf32>
    %61 = arith.mulf %58, %60 : vector<64x4xf32>
    %c0_12 = arith.constant 0 : index
    %c0_13 = arith.constant 0 : index
    %62 = vector.load %arg7[%c0_12, %c0_13] : memref<1x4xf32, #tpu.memory_space<vmem>>, vector<1x4xf32>
    %63 = vector.broadcast %62 : vector<1x4xf32> to vector<64x4xf32>
    %64 = arith.addf %61, %63 : vector<64x4xf32>
    %cst_14 = arith.constant 0.000000e+00 : f32
    %65 = vector.broadcast %cst_14 : f32 to vector<64x4xf32>
    %66 = arith.maximumf %64, %65 : vector<64x4xf32>
    %67 = arith.truncf %66 : vector<64x4xf32> to vector<64x4xbf16>
    %c8_i32_15 = arith.constant 8 : i32
    %68 = arith.muli %3, %c8_i32_15 : i32
    %69 = arith.index_cast %68 : i32 to index
    %c0_16 = arith.constant 0 : index
    %70 = vector.load %arg8[%69, %c0_16] : memref<64x4xbf16, #tpu.memory_space<vmem>>, vector<64x4xbf16>
    tpu.vector_store %arg8[%69, %c0_16], %67 {strides = array<i32>} : memref<64x4xbf16, #tpu.memory_space<vmem>>, vector<64x4xbf16>,
    %c1_i32_17 = arith.constant 1 : i32
    return
  }
  func.func @transform_0(%arg0: i32) -> (i32, i32, i32, i32) {
    %c0_i32 = arith.constant 0 : i32
    %c0_i32_0 = arith.constant 0 : i32
    %c0_i32_1 = arith.constant 0 : i32
    %c0_i32_2 = arith.constant 0 : i32
    return %arg0, %c0_i32, %c0_i32_0, %c0_i32_1 : i32, i32, i32, i32
  }
  func.func @transform_1(%arg0: i32) -> (i32, i32) {
    %c0_i32 = arith.constant 0 : i32
    %c0_i32_0 = arith.constant 0 : i32
    %c0_i32_1 = arith.constant 0 : i32
    return %c0_i32, %c0_i32_0 : i32, i32
  }
  func.func @transform_2(%arg0: i32) -> (i32, i32) {
    %c0_i32 = arith.constant 0 : i32
    %c0_i32_0 = arith.constant 0 : i32
    %c0_i32_1 = arith.constant 0 : i32
    return %c0_i32, %c0_i32_0 : i32, i32
  }
  func.func @transform_3(%arg0: i32) -> (i32, i32) {
    %c0_i32 = arith.constant 0 : i32
    %c0_i32_0 = arith.constant 0 : i32
    %c0_i32_1 = arith.constant 0 : i32
    return %c0_i32, %c0_i32_0 : i32, i32
  }
  func.func @transform_4(%arg0: i32) -> (i32, i32) {
    %c0_i32 = arith.constant 0 : i32
    %c0_i32_0 = arith.constant 0 : i32
    %c0_i32_1 = arith.constant 0 : i32
    return %c0_i32, %c0_i32_0 : i32, i32
  }
  func.func @transform_5(%arg0: i32) -> (i32, i32) {
    %c0_i32 = arith.constant 0 : i32
    %c0_i32_0 = arith.constant 0 : i32
    %c0_i32_1 = arith.constant 0 : i32
    return %c0_i32, %c0_i32_0 : i32, i32
  }
  func.func @transform_6(%arg0: i32) -> (i32, i32) {
    %c0_i32 = arith.constant 0 : i32
    %c0_i32_0 = arith.constant 0 : i32
    %c0_i32_1 = arith.constant 0 : i32
    return %c0_i32, %c0_i32_0 : i32, i32
  }
  func.func @transform_7(%arg0: i32) -> (i32, i32) {
    %c0_i32 = arith.constant 0 : i32
    %c0_i32_0 = arith.constant 0 : i32
    return %arg0, %c0_i32 : i32, i32
  }
}

module attributes {stable_mosaic.version = 11 : i64} {
  func.func @_conv3_proj_kernel(%arg0: i32, %arg1: i32, %arg2: memref<128x4xbf16, #tpu.memory_space<vmem>>, %arg3: memref<128x4xbf16, #tpu.memory_space<vmem>>, %arg4: memref<4x16xbf16, #tpu.memory_space<vmem>>, %arg5: memref<4x16xbf16, #tpu.memory_space<vmem>>, %arg6: memref<1x16xf32, #tpu.memory_space<vmem>>, %arg7: memref<1x16xf32, #tpu.memory_space<vmem>>, %arg8: memref<1x16xf32, #tpu.memory_space<vmem>>, %arg9: memref<1x16xf32, #tpu.memory_space<vmem>>, %arg10: memref<128x16xf32, #tpu.memory_space<vmem>>) attributes {dimension_semantics = [#tpu.dimension_semantics<parallel>, #tpu.dimension_semantics<parallel>], iteration_bounds = array<i64: 1, 1>, scalar_prefetch = 0 : i64, scratch_operands = 0 : i64, tpu.core_type = #tpu.core_type<tc>, window_params = [{transform_indices = @transform_0, window_bounds = array<i64: 128, 4>}, {transform_indices = @transform_1, window_bounds = array<i64: 128, 4>}, {transform_indices = @transform_2, window_bounds = array<i64: 4, 16>}, {transform_indices = @transform_3, window_bounds = array<i64: 4, 16>}, {transform_indices = @transform_4, window_bounds = array<i64: 1, 16>}, {transform_indices = @transform_5, window_bounds = array<i64: 1, 16>}, {transform_indices = @transform_6, window_bounds = array<i64: 1, 16>}, {transform_indices = @transform_7, window_bounds = array<i64: 1, 16>}, {transform_indices = @transform_8, window_bounds = array<i64: 128, 16>}]} {
    %c0 = arith.constant 0 : index
    %c0_0 = arith.constant 0 : index
    %0 = vector.load %arg2[%c0, %c0_0] : memref<128x4xbf16, #tpu.memory_space<vmem>>, vector<128x4xbf16>
    %c0_1 = arith.constant 0 : index
    %c0_2 = arith.constant 0 : index
    %1 = vector.load %arg4[%c0_1, %c0_2] : memref<4x16xbf16, #tpu.memory_space<vmem>>, vector<4x16xbf16>
    %cst = arith.constant dense<0.000000e+00> : vector<128x16xf32>
    %2 = tpu.matmul %0, %1, %cst {dimension_numbers = #tpu.dot_dimension_numbers<[1], [0], [0], [1], [0, 0, 1, 1], [], []>} : vector<128x4xbf16>, vector<4x16xbf16>, vector<128x16xf32> -> vector<128x16xf32>
    %c0_3 = arith.constant 0 : index
    %c0_4 = arith.constant 0 : index
    %3 = vector.load %arg3[%c0_3, %c0_4] : memref<128x4xbf16, #tpu.memory_space<vmem>>, vector<128x4xbf16>
    %c0_5 = arith.constant 0 : index
    %c0_6 = arith.constant 0 : index
    %4 = vector.load %arg5[%c0_5, %c0_6] : memref<4x16xbf16, #tpu.memory_space<vmem>>, vector<4x16xbf16>
    %cst_7 = arith.constant dense<0.000000e+00> : vector<128x16xf32>
    %5 = tpu.matmul %3, %4, %cst_7 {dimension_numbers = #tpu.dot_dimension_numbers<[1], [0], [0], [1], [0, 0, 1, 1], [], []>} : vector<128x4xbf16>, vector<4x16xbf16>, vector<128x16xf32> -> vector<128x16xf32>
    %c0_8 = arith.constant 0 : index
    %c0_9 = arith.constant 0 : index
    %6 = vector.load %arg6[%c0_8, %c0_9] : memref<1x16xf32, #tpu.memory_space<vmem>>, vector<1x16xf32>
    %7 = vector.broadcast %6 : vector<1x16xf32> to vector<128x16xf32>
    %8 = arith.mulf %2, %7 : vector<128x16xf32>
    %c0_10 = arith.constant 0 : index
    %c0_11 = arith.constant 0 : index
    %9 = vector.load %arg7[%c0_10, %c0_11] : memref<1x16xf32, #tpu.memory_space<vmem>>, vector<1x16xf32>
    %10 = vector.broadcast %9 : vector<1x16xf32> to vector<128x16xf32>
    %11 = arith.addf %8, %10 : vector<128x16xf32>
    %c0_12 = arith.constant 0 : index
    %c0_13 = arith.constant 0 : index
    %12 = vector.load %arg8[%c0_12, %c0_13] : memref<1x16xf32, #tpu.memory_space<vmem>>, vector<1x16xf32>
    %13 = vector.broadcast %12 : vector<1x16xf32> to vector<128x16xf32>
    %14 = arith.mulf %5, %13 : vector<128x16xf32>
    %c0_14 = arith.constant 0 : index
    %c0_15 = arith.constant 0 : index
    %15 = vector.load %arg9[%c0_14, %c0_15] : memref<1x16xf32, #tpu.memory_space<vmem>>, vector<1x16xf32>
    %16 = vector.broadcast %15 : vector<1x16xf32> to vector<128x16xf32>
    %17 = arith.addf %14, %16 : vector<128x16xf32>
    %18 = arith.addf %11, %17 : vector<128x16xf32>
    %cst_16 = arith.constant 0.000000e+00 : f32
    %19 = vector.broadcast %cst_16 : f32 to vector<128x16xf32>
    %20 = arith.maximumf %18, %19 : vector<128x16xf32>
    %c0_17 = arith.constant 0 : index
    %c0_18 = arith.constant 0 : index
    %21 = vector.load %arg10[%c0_17, %c0_18] : memref<128x16xf32, #tpu.memory_space<vmem>>, vector<128x16xf32>
    tpu.vector_store %arg10[%c0_17, %c0_18], %20 {strides = array<i32>} : memref<128x16xf32, #tpu.memory_space<vmem>>, vector<128x16xf32>,
    return
  }
  func.func @transform_0(%arg0: i32, %arg1: i32) -> (i32, i32) {
    %c0_i32 = arith.constant 0 : i32
    %c0_i32_0 = arith.constant 0 : i32
    return %arg0, %c0_i32 : i32, i32
  }
  func.func @transform_1(%arg0: i32, %arg1: i32) -> (i32, i32) {
    %c0_i32 = arith.constant 0 : i32
    %c0_i32_0 = arith.constant 0 : i32
    return %arg0, %c0_i32 : i32, i32
  }
  func.func @transform_2(%arg0: i32, %arg1: i32) -> (i32, i32) {
    %c0_i32 = arith.constant 0 : i32
    %c0_i32_0 = arith.constant 0 : i32
    return %c0_i32, %arg1 : i32, i32
  }
  func.func @transform_3(%arg0: i32, %arg1: i32) -> (i32, i32) {
    %c0_i32 = arith.constant 0 : i32
    %c0_i32_0 = arith.constant 0 : i32
    return %c0_i32, %arg1 : i32, i32
  }
  func.func @transform_4(%arg0: i32, %arg1: i32) -> (i32, i32) {
    %c0_i32 = arith.constant 0 : i32
    %c0_i32_0 = arith.constant 0 : i32
    return %c0_i32, %arg1 : i32, i32
  }
  func.func @transform_5(%arg0: i32, %arg1: i32) -> (i32, i32) {
    %c0_i32 = arith.constant 0 : i32
    %c0_i32_0 = arith.constant 0 : i32
    return %c0_i32, %arg1 : i32, i32
  }
  func.func @transform_6(%arg0: i32, %arg1: i32) -> (i32, i32) {
    %c0_i32 = arith.constant 0 : i32
    %c0_i32_0 = arith.constant 0 : i32
    return %c0_i32, %arg1 : i32, i32
  }
  func.func @transform_7(%arg0: i32, %arg1: i32) -> (i32, i32) {
    %c0_i32 = arith.constant 0 : i32
    %c0_i32_0 = arith.constant 0 : i32
    return %c0_i32, %arg1 : i32, i32
  }
  func.func @transform_8(%arg0: i32, %arg1: i32) -> (i32, i32) {
    %c0_i32 = arith.constant 0 : i32
    return %arg0, %arg1 : i32, i32
  }
}

</mosaic_0001>

<llo_original>
// kernel: bottleneck_forward.3
$region0: #{bottleneck_forward.3}
  #allocation0 [shape = 'u32[]', space=smem, size = 0x4, offset = 0x4, fixed_abs, tag = 'smem constant byte address 0x4 - core index']
  #allocation1 [shape = 'u32[72,128]{1,0:T(1,128)}', space=vmem, size = 0x9000, scoped, tag = 'internal scratch']
  %s0 = inlined_call_operand.vmem [shape: bf16[128,4], index: 0, kind: input, shape index: {}]
  %s1 = inlined_call_operand.vmem [shape: bf16[128,4], index: 1, kind: input, shape index: {}]
  %s2 = inlined_call_operand.vmem [shape: bf16[4,16], index: 2, kind: input, shape index: {}]
  %s3 = inlined_call_operand.vmem [shape: bf16[4,16], index: 3, kind: input, shape index: {}]
  %s4 = inlined_call_operand.vmem [shape: f32[1,16], index: 4, kind: input, shape index: {}]
  %s5 = inlined_call_operand.vmem [shape: f32[1,16], index: 5, kind: input, shape index: {}]
  %s6 = inlined_call_operand.vmem [shape: f32[1,16], index: 6, kind: input, shape index: {}]
  %s7 = inlined_call_operand.vmem [shape: f32[1,16], index: 7, kind: input, shape index: {}]
  %s8 = inlined_call_operand.hbm [shape: f32[128,16], index: 8, kind: output, shape index: {}]
  %s9 = sld [smem:[#allocation0]]
  $region42: #{bottleneck_forward.3} parent=0
    _
  %s11 = ssub.s32 1, %s9
  %s12 = scalar_select 0, %s11, %s9
  $region1: #{bottleneck_forward.3} parent=0
    #allocation2 [shape = 'u8[65536]{0}', space=vmem, size = 0x10000, scoped, tag = 'output window, operand 0, single buffered']
    #allocation3 [shape = 's32[1]{0}', space=sflag, size = 0x4, scoped, tag = 'scoped memory for bottleneck_forward.3']
    %13 = vsyncpa [#allocation3], 0
    // Predicated region
    $region2: #{bottleneck_forward.3} parent=1 // pred_check
      _
    $region3: #{bottleneck_forward.3} parent=1 // pred_check_branch
      %15 = sbr.rel (0) target = $region5
    $region4: #{bottleneck_forward.3} parent=1 // pred_region
      _
    $region5: #{bottleneck_forward.3} parent=1 // pred_fallthru
      _
    // Predicated region
    $region6: #{bottleneck_forward.3} parent=1 // pred_check
      _
    $region7: #{bottleneck_forward.3} parent=1 // pred_check_branch
      %17 = sbr.rel (0) target = $region9
    $region8: #{bottleneck_forward.3} parent=1 // pred_region
      _
    $region9: #{bottleneck_forward.3} parent=1 // pred_fallthru
      _
    // Predicated region
    $region10: #{bottleneck_forward.3} parent=1 // pred_check
      _
    $region11: #{bottleneck_forward.3} parent=1 // pred_check_branch
      %19 = sbr.rel (0) target = $region13
    $region12: #{bottleneck_forward.3} parent=1 // pred_region
      _
    $region13: #{bottleneck_forward.3} parent=1 // pred_fallthru
      _
    // Predicated region
    $region14: #{bottleneck_forward.3} parent=1 // pred_check
      _
    $region15: #{bottleneck_forward.3} parent=1 // pred_check_branch
      %21 = sbr.rel (0) target = $region17
    $region16: #{bottleneck_forward.3} parent=1 // pred_region
      _
    $region17: #{bottleneck_forward.3} parent=1 // pred_fallthru
      _
    // Predicated region
    $region18: #{bottleneck_forward.3} parent=1 // pred_check
      _
    $region19: #{bottleneck_forward.3} parent=1 // pred_check_branch
      %23 = sbr.rel (0) target = $region21
    $region20: #{bottleneck_forward.3} parent=1 // pred_region
      _
    $region21: #{bottleneck_forward.3} parent=1 // pred_fallthru
      _
    // Predicated region
    $region22: #{bottleneck_forward.3} parent=1 // pred_check
      _
    $region23: #{bottleneck_forward.3} parent=1 // pred_check_branch
      %25 = sbr.rel (0) target = $region25
    $region24: #{bottleneck_forward.3} parent=1 // pred_region
      _
    $region25: #{bottleneck_forward.3} parent=1 // pred_fallthru
      _
    // Predicated region
    $region26: #{bottleneck_forward.3} parent=1 // pred_check
      _
    $region27: #{bottleneck_forward.3} parent=1 // pred_check_branch
      %27 = sbr.rel (0) target = $region29
    $region28: #{bottleneck_forward.3} parent=1 // pred_region
      _
    $region29: #{bottleneck_forward.3} parent=1 // pred_fallthru
      _
    // Predicated region
    $region30: #{bottleneck_forward.3} parent=1 // pred_check
      _
    $region31: #{bottleneck_forward.3} parent=1 // pred_check_branch
      %29 = sbr.rel (0) target = $region33
    $region32: #{bottleneck_forward.3} parent=1 // pred_region
      _
    $region33: #{bottleneck_forward.3} parent=1 // pred_fallthru
      _
    %v31 = vld [vmem:[%s0] sm:$0xf]
    %v32 = vld [vmem:[%s0 + $0x4] sm:$0xf]
    %v33 = vld [vmem:[%s0 + $0x8] sm:$0xf]
    %v34 = vld [vmem:[%s0 + $0xc] sm:$0xf]
    %v35 = vld [vmem:[%s0 + $0x10] sm:$0xf]
    %v36 = vld [vmem:[%s0 + $0x14] sm:$0xf]
    %v37 = vld [vmem:[%s0 + $0x18] sm:$0xf]
    %v38 = vld [vmem:[%s0 + $0x1c] sm:$0xf]
    %v39 = vld [vmem:[%s0 + $0x20] sm:$0xf]
    %v40 = vld [vmem:[%s0 + $0x24] sm:$0xf]
    %v41 = vld [vmem:[%s0 + $0x28] sm:$0xf]
    %v42 = vld [vmem:[%s0 + $0x2c] sm:$0xf]
    %v43 = vld [vmem:[%s0 + $0x30] sm:$0xf]
    %v44 = vld [vmem:[%s0 + $0x34] sm:$0xf]
    %v45 = vld [vmem:[%s0 + $0x38] sm:$0xf]
    %v46 = vld [vmem:[%s0 + $0x3c] sm:$0xf]
    %v47 = vld [vmem:[%s2] sm:$0x3]
    %v64 = vunpack.c.l.b16 %v31
    %v65 = vunpack.c.l.b16 %v32
    %v66 = vunpack.c.l.b16 %v33
    %v67 = vunpack.c.l.b16 %v34
    %v68 = vunpack.c.l.b16 %v35
    %v69 = vunpack.c.l.b16 %v36
    %v70 = vunpack.c.l.b16 %v37
    %v71 = vunpack.c.l.b16 %v38
    %v72 = vunpack.c.l.b16 %v39
    %v73 = vunpack.c.l.b16 %v40
    %v74 = vunpack.c.l.b16 %v41
    %v75 = vunpack.c.l.b16 %v42
    %v76 = vunpack.c.l.b16 %v43
    %v77 = vunpack.c.l.b16 %v44
    %v78 = vunpack.c.l.b16 %v45
    %v79 = vunpack.c.l.b16 %v46
    %v80 = vpack.c.b16 %v65, %v64
    %v81 = vpack.c.b16 %v67, %v66
    %v82 = vpack.c.b16 %v69, %v68
    %v83 = vpack.c.b16 %v71, %v70
    %v84 = vpack.c.b16 %v73, %v72
    %v85 = vpack.c.b16 %v75, %v74
    %v86 = vpack.c.b16 %v77, %v76
    %v87 = vpack.c.b16 %v79, %v78
    %vm88 = vcmask 31744
    %v90 = vsel %vm88, %v80, 0
    %v93 = vsel %vm88, %v81, 0
    %v96 = vsel %vm88, %v82, 0
    %v99 = vsel %vm88, %v83, 0
    %v102 = vsel %vm88, %v84, 0
    %v105 = vsel %vm88, %v85, 0
    %v108 = vsel %vm88, %v86, 0
    %v111 = vsel %vm88, %v87, 0
    %vm113 = vcmask 1041408
    %v115 = vsel %vm113, %v47, 0
    %117 = vmatpush.bf16.msra.mxu0 0
    %118 = vmatpush.bf16.msra.mxu0 0
    %119 = vmatpush.bf16.msra.mxu0 0
    %120 = vmatpush.bf16.msra.mxu0 0
    %121 = vmatpush.bf16.msra.mxu0 0
    %122 = vmatpush.bf16.msra.mxu0 0
    %123 = vmatpush.bf16.msra.mxu0 0
    %124 = vmatpush.bf16.msra.mxu0 %v115
    %125 = vmatmul.bf16.gmra.mxu0 %v90
    %v126 = vpop.f32.mrf.mxu0
    %v127 = vadd.f32 0.0, %v126
    %v128 = vpop.f32.mrf.mxu0
    %v129 = vadd.f32 0.0, %v128
    %130 = vmatmul.bf16.gmra.mxu0 %v93
    %v131 = vpop.f32.mrf.mxu0
    %v132 = vadd.f32 0.0, %v131
    %v133 = vpop.f32.mrf.mxu0
    %v134 = vadd.f32 0.0, %v133
    %135 = vmatmul.bf16.gmra.mxu0 %v96
    %v136 = vpop.f32.mrf.mxu0
    %v137 = vadd.f32 0.0, %v136
    %v138 = vpop.f32.mrf.mxu0
    %v139 = vadd.f32 0.0, %v138
    %140 = vmatmul.bf16.gmra.mxu0 %v99
    %v141 = vpop.f32.mrf.mxu0
    %v142 = vadd.f32 0.0, %v141
    %v143 = vpop.f32.mrf.mxu0
    %v144 = vadd.f32 0.0, %v143
    %145 = vmatmul.bf16.gmra.mxu0 %v102
    %v146 = vpop.f32.mrf.mxu0
    %v147 = vadd.f32 0.0, %v146
    %v148 = vpop.f32.mrf.mxu0
    %v149 = vadd.f32 0.0, %v148
    %150 = vmatmul.bf16.gmra.mxu0 %v105
    %v151 = vpop.f32.mrf.mxu0
    %v152 = vadd.f32 0.0, %v151
    %v153 = vpop.f32.mrf.mxu0
    %v154 = vadd.f32 0.0, %v153
    %155 = vmatmul.bf16.gmra.mxu0 %v108
    %v156 = vpop.f32.mrf.mxu0
    %v157 = vadd.f32 0.0, %v156
    %v158 = vpop.f32.mrf.mxu0
    %v159 = vadd.f32 0.0, %v158
    %160 = vmatmul.bf16.gmra.mxu0 %v111
    %v161 = vpop.f32.mrf.mxu0
    %v162 = vadd.f32 0.0, %v161
    %v163 = vpop.f32.mrf.mxu0
    %v164 = vadd.f32 0.0, %v163
    %165 = vdwg.mxu0
    %v166 = vld [vmem:[%s1] sm:$0xf]
    %v167 = vld [vmem:[%s1 + $0x4] sm:$0xf]
    %v168 = vld [vmem:[%s1 + $0x8] sm:$0xf]
    %v169 = vld [vmem:[%s1 + $0xc] sm:$0xf]
    %v170 = vld [vmem:[%s1 + $0x10] sm:$0xf]
    %v171 = vld [vmem:[%s1 + $0x14] sm:$0xf]
    %v172 = vld [vmem:[%s1 + $0x18] sm:$0xf]
    %v173 = vld [vmem:[%s1 + $0x1c] sm:$0xf]
    %v174 = vld [vmem:[%s1 + $0x20] sm:$0xf]
    %v175 = vld [vmem:[%s1 + $0x24] sm:$0xf]
    %v176 = vld [vmem:[%s1 + $0x28] sm:$0xf]
    %v177 = vld [vmem:[%s1 + $0x2c] sm:$0xf]
    %v178 = vld [vmem:[%s1 + $0x30] sm:$0xf]
    %v179 = vld [vmem:[%s1 + $0x34] sm:$0xf]
    %v180 = vld [vmem:[%s1 + $0x38] sm:$0xf]
    %v181 = vld [vmem:[%s1 + $0x3c] sm:$0xf]
    %v182 = vld [vmem:[%s3] sm:$0x3]
    %v199 = vunpack.c.l.b16 %v166
    %v200 = vunpack.c.l.b16 %v167
    %v201 = vunpack.c.l.b16 %v168
    %v202 = vunpack.c.l.b16 %v169
    %v203 = vunpack.c.l.b16 %v170
    %v204 = vunpack.c.l.b16 %v171
    %v205 = vunpack.c.l.b16 %v172
    %v206 = vunpack.c.l.b16 %v173
    %v207 = vunpack.c.l.b16 %v174
    %v208 = vunpack.c.l.b16 %v175
    %v209 = vunpack.c.l.b16 %v176
    %v210 = vunpack.c.l.b16 %v177
    %v211 = vunpack.c.l.b16 %v178
    %v212 = vunpack.c.l.b16 %v179
    %v213 = vunpack.c.l.b16 %v180
    %v214 = vunpack.c.l.b16 %v181
    %v215 = vpack.c.b16 %v200, %v199
    %v216 = vpack.c.b16 %v202, %v201
    %v217 = vpack.c.b16 %v204, %v203
    %v218 = vpack.c.b16 %v206, %v205
    %v219 = vpack.c.b16 %v208, %v207
    %v220 = vpack.c.b16 %v210, %v209
    %v221 = vpack.c.b16 %v212, %v211
    %v222 = vpack.c.b16 %v214, %v213
    %v224 = vsel %vm88, %v215, 0
    %v227 = vsel %vm88, %v216, 0
    %v230 = vsel %vm88, %v217, 0
    %v233 = vsel %vm88, %v218, 0
    %v236 = vsel %vm88, %v219, 0
    %v239 = vsel %vm88, %v220, 0
    %v242 = vsel %vm88, %v221, 0
    %v245 = vsel %vm88, %v222, 0
    %v248 = vsel %vm113, %v182, 0
    %250 = vmatpush.bf16.msra.mxu0 0
    %251 = vmatpush.bf16.msra.mxu0 0
    %252 = vmatpush.bf16.msra.mxu0 0
    %253 = vmatpush.bf16.msra.mxu0 0
    %254 = vmatpush.bf16.msra.mxu0 0
    %255 = vmatpush.bf16.msra.mxu0 0
    %256 = vmatpush.bf16.msra.mxu0 0
    %257 = vmatpush.bf16.msra.mxu0 %v248
    %258 = vmatmul.bf16.gmra.mxu0 %v224
    %v259 = vpop.f32.mrf.mxu0
    %v260 = vadd.f32 0.0, %v259
    %v261 = vpop.f32.mrf.mxu0
    %v262 = vadd.f32 0.0, %v261
    %263 = vmatmul.bf16.gmra.mxu0 %v227
    %v264 = vpop.f32.mrf.mxu0
    %v265 = vadd.f32 0.0, %v264
    %v266 = vpop.f32.mrf.mxu0
    %v267 = vadd.f32 0.0, %v266
    %268 = vmatmul.bf16.gmra.mxu0 %v230
    %v269 = vpop.f32.mrf.mxu0
    %v270 = vadd.f32 0.0, %v269
    %v271 = vpop.f32.mrf.mxu0
    %v272 = vadd.f32 0.0, %v271
    %273 = vmatmul.bf16.gmra.mxu0 %v233
    %v274 = vpop.f32.mrf.mxu0
    %v275 = vadd.f32 0.0, %v274
    %v276 = vpop.f32.mrf.mxu0
    %v277 = vadd.f32 0.0, %v276
    %278 = vmatmul.bf16.gmra.mxu0 %v236
    %v279 = vpop.f32.mrf.mxu0
    %v280 = vadd.f32 0.0, %v279
    %v281 = vpop.f32.mrf.mxu0
    %v282 = vadd.f32 0.0, %v281
    %283 = vmatmul.bf16.gmra.mxu0 %v239
    %v284 = vpop.f32.mrf.mxu0
    %v285 = vadd.f32 0.0, %v284
    %v286 = vpop.f32.mrf.mxu0
    %v287 = vadd.f32 0.0, %v286
    %288 = vmatmul.bf16.gmra.mxu0 %v242
    %v289 = vpop.f32.mrf.mxu0
    %v290 = vadd.f32 0.0, %v289
    %v291 = vpop.f32.mrf.mxu0
    %v292 = vadd.f32 0.0, %v291
    %293 = vmatmul.bf16.gmra.mxu0 %v245
    %v294 = vpop.f32.mrf.mxu0
    %v295 = vadd.f32 0.0, %v294
    %v296 = vpop.f32.mrf.mxu0
    %v297 = vadd.f32 0.0, %v296
    %298 = vdwg.mxu0
    %v299 = vld [vmem:[%s4] sm:$0x1]
    %v301 = vperm.slane %v299, 0
    %v303 = vmul.f32 %v127, %v301
    %v304 = vmul.f32 %v129, %v301
    %v305 = vmul.f32 %v132, %v301
    %v306 = vmul.f32 %v134, %v301
    %v307 = vmul.f32 %v137, %v301
    %v308 = vmul.f32 %v139, %v301
    %v309 = vmul.f32 %v142, %v301
    %v310 = vmul.f32 %v144, %v301
    %v311 = vmul.f32 %v147, %v301
    %v312 = vmul.f32 %v149, %v301
    %v313 = vmul.f32 %v152, %v301
    %v314 = vmul.f32 %v154, %v301
    %v315 = vmul.f32 %v157, %v301
    %v316 = vmul.f32 %v159, %v301
    %v317 = vmul.f32 %v162, %v301
    %v318 = vmul.f32 %v164, %v301
    %v319 = vld [vmem:[%s5] sm:$0x1]
    %v321 = vperm.slane %v319, 0
    %v323 = vadd.f32 %v303, %v321
    %v324 = vadd.f32 %v304, %v321
    %v325 = vadd.f32 %v305, %v321
    %v326 = vadd.f32 %v306, %v321
    %v327 = vadd.f32 %v307, %v321
    %v328 = vadd.f32 %v308, %v321
    %v329 = vadd.f32 %v309, %v321
    %v330 = vadd.f32 %v310, %v321
    %v331 = vadd.f32 %v311, %v321
    %v332 = vadd.f32 %v312, %v321
    %v333 = vadd.f32 %v313, %v321
    %v334 = vadd.f32 %v314, %v321
    %v335 = vadd.f32 %v315, %v321
    %v336 = vadd.f32 %v316, %v321
    %v337 = vadd.f32 %v317, %v321
    %v338 = vadd.f32 %v318, %v321
    %v339 = vld [vmem:[%s6] sm:$0x1]
    %v341 = vperm.slane %v339, 0
    %v343 = vmul.f32 %v260, %v341
    %v344 = vmul.f32 %v262, %v341
    %v345 = vmul.f32 %v265, %v341
    %v346 = vmul.f32 %v267, %v341
    %v347 = vmul.f32 %v270, %v341
    %v348 = vmul.f32 %v272, %v341
    %v349 = vmul.f32 %v275, %v341
    %v350 = vmul.f32 %v277, %v341
    %v351 = vmul.f32 %v280, %v341
    %v352 = vmul.f32 %v282, %v341
    %v353 = vmul.f32 %v285, %v341
    %v354 = vmul.f32 %v287, %v341
    %v355 = vmul.f32 %v290, %v341
    %v356 = vmul.f32 %v292, %v341
    %v357 = vmul.f32 %v295, %v341
    %v358 = vmul.f32 %v297, %v341
    %v359 = vld [vmem:[%s7] sm:$0x1]
    %v361 = vperm.slane %v359, 0
    %v363 = vadd.f32 %v343, %v361
    %v364 = vadd.f32 %v344, %v361
    %v365 = vadd.f32 %v345, %v361
    %v366 = vadd.f32 %v346, %v361
    %v367 = vadd.f32 %v347, %v361
    %v368 = vadd.f32 %v348, %v361
    %v369 = vadd.f32 %v349, %v361
    %v370 = vadd.f32 %v350, %v361
    %v371 = vadd.f32 %v351, %v361
    %v372 = vadd.f32 %v352, %v361
    %v373 = vadd.f32 %v353, %v361
    %v374 = vadd.f32 %v354, %v361
    %v375 = vadd.f32 %v355, %v361
    %v376 = vadd.f32 %v356, %v361
    %v377 = vadd.f32 %v357, %v361
    %v378 = vadd.f32 %v358, %v361
    %v379 = vadd.f32 %v323, %v363
    %v380 = vadd.f32 %v324, %v364
    %v381 = vadd.f32 %v325, %v365
    %v382 = vadd.f32 %v326, %v366
    %v383 = vadd.f32 %v327, %v367
    %v384 = vadd.f32 %v328, %v368
    %v385 = vadd.f32 %v329, %v369
    %v386 = vadd.f32 %v330, %v370
    %v387 = vadd.f32 %v331, %v371
    %v388 = vadd.f32 %v332, %v372
    %v389 = vadd.f32 %v333, %v373
    %v390 = vadd.f32 %v334, %v374
    %v391 = vadd.f32 %v335, %v375
    %v392 = vadd.f32 %v336, %v376
    %v393 = vadd.f32 %v337, %v377
    %v394 = vadd.f32 %v338, %v378
    %v395 = vmax.f32 %v379, 0.0
    %v396 = vmax.f32 %v380, 0.0
    %v397 = vmax.f32 %v381, 0.0
    %v398 = vmax.f32 %v382, 0.0
    %v399 = vmax.f32 %v383, 0.0
    %v400 = vmax.f32 %v384, 0.0
    %v401 = vmax.f32 %v385, 0.0
    %v402 = vmax.f32 %v386, 0.0
    %v403 = vmax.f32 %v387, 0.0
    %v404 = vmax.f32 %v388, 0.0
    %v405 = vmax.f32 %v389, 0.0
    %v406 = vmax.f32 %v390, 0.0
    %v407 = vmax.f32 %v391, 0.0
    %v408 = vmax.f32 %v392, 0.0
    %v409 = vmax.f32 %v393, 0.0
    %v410 = vmax.f32 %v394, 0.0
    %vm411 = vcmask 130048
    %412 = vst.msk [vmem:[#allocation2] sm:$0xff] %vm411, %v395
    %413 = vst.msk [vmem:[#allocation2 + $0x8] sm:$0xff] %vm411, %v396
    %414 = vst.msk [vmem:[#allocation2 + $0x10] sm:$0xff] %vm411, %v397
    %415 = vst.msk [vmem:[#allocation2 + $0x18] sm:$0xff] %vm411, %v398
    %416 = vst.msk [vmem:[#allocation2 + $0x20] sm:$0xff] %vm411, %v399
    %417 = vst.msk [vmem:[#allocation2 + $0x28] sm:$0xff] %vm411, %v400
    %418 = vst.msk [vmem:[#allocation2 + $0x30] sm:$0xff] %vm411, %v401
    %419 = vst.msk [vmem:[#allocation2 + $0x38] sm:$0xff] %vm411, %v402
    %420 = vst.msk [vmem:[#allocation2 + $0x40] sm:$0xff] %vm411, %v403
    %421 = vst.msk [vmem:[#allocation2 + $0x48] sm:$0xff] %vm411, %v404
    %422 = vst.msk [vmem:[#allocation2 + $0x50] sm:$0xff] %vm411, %v405
    %423 = vst.msk [vmem:[#allocation2 + $0x58] sm:$0xff] %vm411, %v406
    %424 = vst.msk [vmem:[#allocation2 + $0x60] sm:$0xff] %vm411, %v407
    %425 = vst.msk [vmem:[#allocation2 + $0x68] sm:$0xff] %vm411, %v408
    %426 = vst.msk [vmem:[#allocation2 + $0x70] sm:$0xff] %vm411, %v409
    %427 = vst.msk [vmem:[#allocation2 + $0x78] sm:$0xff] %vm411, %v410
    // Predicated region
    $region34: #{bottleneck_forward.3} parent=1 // pred_check
      _
    $region35: #{bottleneck_forward.3} parent=1 // pred_check_branch
      %429 = sbr.rel (0) target = $region37
    $region36: #{bottleneck_forward.3} parent=1 // pred_region
      %431 = vsyncadd [#allocation3], 0
      %s432 = sshll.u32 [#allocation2], 4
      %s433 = int_to_ptr.vmem [resolvable:$true] %s432
      %s434 = sshll.u32 %s8, 4
      %s435 = int_to_ptr.hbm [resolvable:$true] %s434
      %440 = dma.vmem_to_hbm [thread:$0]  %s433, 2048, %s435, [#allocation3], 128, 128, 8
    $region37: #{bottleneck_forward.3} parent=1 // pred_fallthru
      _
    // Predicated region
    $region38: #{bottleneck_forward.3} parent=1 // pred_check
      _
    $region39: #{bottleneck_forward.3} parent=1 // pred_check_branch
      %442 = sbr.rel (0) target = $region41
    $region40: #{bottleneck_forward.3} parent=1 // pred_region
      %444 = dma.done [#allocation3], 2048
    $region41: #{bottleneck_forward.3} parent=1 // pred_fallthru
      _
    %445 = vsyncpa [#allocation3], 1

// kernel: bottleneck_forward.2
$region0: #{bottleneck_forward.2}
  #allocation0 [shape = 'u32[]', space=smem, size = 0x4, offset = 0x4, fixed_abs, tag = 'smem constant byte address 0x4 - core index']
  #allocation1 [shape = 'u32[72,128]{1,0:T(1,128)}', space=vmem, size = 0x9000, scoped, tag = 'internal scratch']
  #allocation2 [shape = 'bf16[18,24,4]{2,1,0:T(8,128)(2,1)}', space=vmem, size = 0x1b000, scoped, tag = 'scratch operand']
  %s0 = inlined_call_operand.vmem [shape: bf16[2,16,16,4], index: 0, kind: input, shape index: {}]
  %s1 = inlined_call_operand.vmem [shape: bf16[4,4], index: 1, kind: input, shape index: {}]
  %s2 = inlined_call_operand.vmem [shape: f32[1,4], index: 2, kind: input, shape index: {}]
  %s3 = inlined_call_operand.vmem [shape: f32[1,4], index: 3, kind: input, shape index: {}]
  %s4 = inlined_call_operand.vmem [shape: bf16[36,4], index: 4, kind: input, shape index: {}]
  %s5 = inlined_call_operand.vmem [shape: f32[1,4], index: 5, kind: input, shape index: {}]
  %s6 = inlined_call_operand.vmem [shape: f32[1,4], index: 6, kind: input, shape index: {}]
  %s7 = inlined_call_operand.vmem [shape: bf16[128,4], index: 7, kind: output, shape index: {}]
  %s8 = sld [smem:[#allocation0]]
  $region68: #{bottleneck_forward.2} parent=0
    _
  %s10 = ssub.s32 1, %s8
  %s11 = scalar_select 0, %s10, %s8
  loop: start=0, step=1, limit=4
  $region2: #{bottleneck_forward.2} parent=0 // loop_pre_header
    _
  $region3: #{bottleneck_forward.2} parent=0 // loop_header
    %s13 = sphi 0, %s17
    %p14 = scmp.ge.s32.totalorder %s13, 4
    %s23 = sphi 0, %s25
    %s26 = sphi 0, %s23
    %s27 = sphi 0, %s26
    %s43 = sphi 0, %s27
    %s47 = sphi 0, %s47
    %s49 = sphi 0, %s47
    %s50 = sphi 0, %s49
    %s64 = sphi 0, %s50
    %s68 = sphi 0, %s68
    %s70 = sphi 0, %s68
    %s71 = sphi 0, %s70
    %s85 = sphi 0, %s71
    %s89 = sphi 0, %s89
    %s91 = sphi 0, %s89
    %s92 = sphi 0, %s91
    %s106 = sphi 0, %s92
    %s110 = sphi 0, %s110
    %s112 = sphi 0, %s110
    %s113 = sphi 0, %s112
    %s127 = sphi 0, %s113
    %s131 = sphi 0, %s131
    %s133 = sphi 0, %s131
    %s134 = sphi 0, %s133
    %s148 = sphi 0, %s134
    %s152 = sphi 0, %s152
    %s154 = sphi 0, %s152
    %s155 = sphi 0, %s154
    %s169 = sphi 0, %s155
    %s175 = sphi 0, %s177
    %s178 = sphi 0, %s175
    %s179 = sphi 0, %s178
    %s195 = sphi 0, %s179
  $region4: #{bottleneck_forward.2} parent=0 // loop_header_branch
    %16 = sbr.rel (%p14) target = $region8
  $region5: #{bottleneck_forward.2} parent=0 // loop_body
    %s18 = ssub.s32 %s13, 1
    %s19 = ssub.s32 %s13, 2
    %s20 = sadd.s32 %s13, 1
    %s21 = ssub.s32 %s13, %s20
    %p22 = scmp.eq.s32.totalorder %s21, 0
    %s24 = sadd.s32 %s23, 1
    %s25 = scalar_select %p22, %s23, %s24
    %p28 = pneg %p22
    %p29 = scmp.eq.s32.totalorder %s13, 1
    %p30 = por %p28, %p29
    %p31 = scmp.ne.s32.totalorder %s23, %s26
    %p32 = scmp.eq.s32.totalorder %s13, 0
    %p33 = por %p31, %p32
    %p34 = scmp.ne.s32.totalorder %s23, %s26
    %p35 = scmp.eq.s32.totalorder %s18, 1
    %p36 = por %p34, %p35
    %p37 = scmp.ne.s32.totalorder %s26, %s27
    %p38 = scmp.eq.s32.totalorder %s18, 0
    %p39 = por %p37, %p38
    %p40 = scmp.ne.s32.totalorder %s26, %s27
    %p41 = scmp.eq.s32.totalorder %s19, 1
    %p42 = por %p40, %p41
    %p44 = scmp.ne.s32.totalorder %s27, %s43
    %p45 = scmp.eq.s32.totalorder %s19, 0
    %p46 = por %p44, %p45
    %s48 = sadd.s32 %s47, 1
    %p51 = scmp.eq.s32.totalorder %s13, 1
    %p52 = scmp.ne.s32.totalorder %s47, %s49
    %p53 = scmp.eq.s32.totalorder %s13, 0
    %p54 = por %p52, %p53
    %p55 = scmp.ne.s32.totalorder %s47, %s49
    %p56 = scmp.eq.s32.totalorder %s18, 1
    %p57 = por %p55, %p56
    %p58 = scmp.ne.s32.totalorder %s49, %s50
    %p59 = scmp.eq.s32.totalorder %s18, 0
    %p60 = por %p58, %p59
    %p61 = scmp.ne.s32.totalorder %s49, %s50
    %p62 = scmp.eq.s32.totalorder %s19, 1
    %p63 = por %p61, %p62
    %p65 = scmp.ne.s32.totalorder %s50, %s64
    %p66 = scmp.eq.s32.totalorder %s19, 0
    %p67 = por %p65, %p66
    %s69 = sadd.s32 %s68, 1
    %p72 = scmp.eq.s32.totalorder %s13, 1
    %p73 = scmp.ne.s32.totalorder %s68, %s70
    %p74 = scmp.eq.s32.totalorder %s13, 0
    %p75 = por %p73, %p74
    %p76 = scmp.ne.s32.totalorder %s68, %s70
    %p77 = scmp.eq.s32.totalorder %s18, 1
    %p78 = por %p76, %p77
    %p79 = scmp.ne.s32.totalorder %s70, %s71
    %p80 = scmp.eq.s32.totalorder %s18, 0
    %p81 = por %p79, %p80
    %p82 = scmp.ne.s32.totalorder %s70, %s71
    %p83 = scmp.eq.s32.totalorder %s19, 1
    %p84 = por %p82, %p83
    %p86 = scmp.ne.s32.totalorder %s71, %s85
    %p87 = scmp.eq.s32.totalorder %s19, 0
    %p88 = por %p86, %p87
    %s90 = sadd.s32 %s89, 1
    %p93 = scmp.eq.s32.totalorder %s13, 1
    %p94 = scmp.ne.s32.totalorder %s89, %s91
    %p95 = scmp.eq.s32.totalorder %s13, 0
    %p96 = por %p94, %p95
    %p97 = scmp.ne.s32.totalorder %s89, %s91
    %p98 = scmp.eq.s32.totalorder %s18, 1
    %p99 = por %p97, %p98
    %p100 = scmp.ne.s32.totalorder %s91, %s92
    %p101 = scmp.eq.s32.totalorder %s18, 0
    %p102 = por %p100, %p101
    %p103 = scmp.ne.s32.totalorder %s91, %s92
    %p104 = scmp.eq.s32.totalorder %s19, 1
    %p105 = por %p103, %p104
    %p107 = scmp.ne.s32.totalorder %s92, %s106
    %p108 = scmp.eq.s32.totalorder %s19, 0
    %p109 = por %p107, %p108
    %s111 = sadd.s32 %s110, 1
    %p114 = scmp.eq.s32.totalorder %s13, 1
    %p115 = scmp.ne.s32.totalorder %s110, %s112
    %p116 = scmp.eq.s32.totalorder %s13, 0
    %p117 = por %p115, %p116
    %p118 = scmp.ne.s32.totalorder %s110, %s112
    %p119 = scmp.eq.s32.totalorder %s18, 1
    %p120 = por %p118, %p119
    %p121 = scmp.ne.s32.totalorder %s112, %s113
    %p122 = scmp.eq.s32.totalorder %s18, 0
    %p123 = por %p121, %p122
    %p124 = scmp.ne.s32.totalorder %s112, %s113
    %p125 = scmp.eq.s32.totalorder %s19, 1
    %p126 = por %p124, %p125
    %p128 = scmp.ne.s32.totalorder %s113, %s127
    %p129 = scmp.eq.s32.totalorder %s19, 0
    %p130 = por %p128, %p129
    %s132 = sadd.s32 %s131, 1
    %p135 = scmp.eq.s32.totalorder %s13, 1
    %p136 = scmp.ne.s32.totalorder %s131, %s133
    %p137 = scmp.eq.s32.totalorder %s13, 0
    %p138 = por %p136, %p137
    %p139 = scmp.ne.s32.totalorder %s131, %s133
    %p140 = scmp.eq.s32.totalorder %s18, 1
    %p141 = por %p139, %p140
    %p142 = scmp.ne.s32.totalorder %s133, %s134
    %p143 = scmp.eq.s32.totalorder %s18, 0
    %p144 = por %p142, %p143
    %p145 = scmp.ne.s32.totalorder %s133, %s134
    %p146 = scmp.eq.s32.totalorder %s19, 1
    %p147 = por %p145, %p146
    %p149 = scmp.ne.s32.totalorder %s134, %s148
    %p150 = scmp.eq.s32.totalorder %s19, 0
    %p151 = por %p149, %p150
    %s153 = sadd.s32 %s152, 1
    %p156 = scmp.eq.s32.totalorder %s13, 1
    %p157 = scmp.ne.s32.totalorder %s152, %s154
    %p158 = scmp.eq.s32.totalorder %s13, 0
    %p159 = por %p157, %p158
    %p160 = scmp.ne.s32.totalorder %s152, %s154
    %p161 = scmp.eq.s32.totalorder %s18, 1
    %p162 = por %p160, %p161
    %p163 = scmp.ne.s32.totalorder %s154, %s155
    %p164 = scmp.eq.s32.totalorder %s18, 0
    %p165 = por %p163, %p164
    %p166 = scmp.ne.s32.totalorder %s154, %s155
    %p167 = scmp.eq.s32.totalorder %s19, 1
    %p168 = por %p166, %p167
    %p170 = scmp.ne.s32.totalorder %s155, %s169
    %p171 = scmp.eq.s32.totalorder %s19, 0
    %p172 = por %p170, %p171
    %s173 = ssub.s32 %s13, %s20
    %p174 = scmp.eq.s32.totalorder %s173, 0
    %s176 = sadd.s32 %s175, 1
    %s177 = scalar_select %p174, %s175, %s176
    %p180 = pneg %p174
    %p181 = scmp.eq.s32.totalorder %s13, 1
    %p182 = por %p180, %p181
    %p183 = scmp.ne.s32.totalorder %s175, %s178
    %p184 = scmp.eq.s32.totalorder %s13, 0
    %p185 = por %p183, %p184
    %p186 = scmp.ne.s32.totalorder %s175, %s178
    %p187 = scmp.eq.s32.totalorder %s18, 1
    %p188 = por %p186, %p187
    %p189 = scmp.ne.s32.totalorder %s178, %s179
    %p190 = scmp.eq.s32.totalorder %s18, 0
    %p191 = por %p189, %p190
    %p192 = scmp.ne.s32.totalorder %s178, %s179
    %p193 = scmp.eq.s32.totalorder %s19, 1
    %p194 = por %p192, %p193
    %p196 = scmp.ne.s32.totalorder %s179, %s195
    %p197 = scmp.eq.s32.totalorder %s19, 0
    %p198 = por %p196, %p197
    %p199 = scmp.le.s32.totalorder 1, %s13
    %p200 = scmp.lt.s32.totalorder %s13, 3
    %p201 = pnand %p199, %p200
    %p202 = pneg %p201
    // Predicated region
    $region9: #{bottleneck_forward.2} parent=5 // pred_check
      _
    $region10: #{bottleneck_forward.2} parent=5 // pred_check_branch
      %204 = sbr.rel (%p201) target = $region12
    $region11: #{bottleneck_forward.2} parent=5 // pred_region
      %s205 = ssub.s32 %s13, 1
      // Predicated region
      $region13: #{bottleneck_forward.2} parent=11 // pred_check
        %p206 = pneg %p60
      $region14: #{bottleneck_forward.2} parent=11 // pred_check_branch
        %208 = sbr.rel (%p206) target = $region16
      $region15: #{bottleneck_forward.2} parent=11 // pred_region
        _
      $region16: #{bottleneck_forward.2} parent=11 // pred_fallthru
        _
      // Predicated region
      $region17: #{bottleneck_forward.2} parent=11 // pred_check
        %p209 = pneg %p81
      $region18: #{bottleneck_forward.2} parent=11 // pred_check_branch
        %211 = sbr.rel (%p209) target = $region20
      $region19: #{bottleneck_forward.2} parent=11 // pred_region
        _
      $region20: #{bottleneck_forward.2} parent=11 // pred_fallthru
        _
      // Predicated region
      $region21: #{bottleneck_forward.2} parent=11 // pred_check
        %p212 = pneg %p102
      $region22: #{bottleneck_forward.2} parent=11 // pred_check_branch
        %214 = sbr.rel (%p212) target = $region24
      $region23: #{bottleneck_forward.2} parent=11 // pred_region
        _
      $region24: #{bottleneck_forward.2} parent=11 // pred_fallthru
        _
      // Predicated region
      $region25: #{bottleneck_forward.2} parent=11 // pred_check
        %p215 = pneg %p123
      $region26: #{bottleneck_forward.2} parent=11 // pred_check_branch
        %217 = sbr.rel (%p215) target = $region28
      $region27: #{bottleneck_forward.2} parent=11 // pred_region
        _
      $region28: #{bottleneck_forward.2} parent=11 // pred_fallthru
        _
      // Predicated region
      $region29: #{bottleneck_forward.2} parent=11 // pred_check
        %p218 = pneg %p144
      $region30: #{bottleneck_forward.2} parent=11 // pred_check_branch
        %220 = sbr.rel (%p218) target = $region32
      $region31: #{bottleneck_forward.2} parent=11 // pred_region
        _
      $region32: #{bottleneck_forward.2} parent=11 // pred_fallthru
        _
      // Predicated region
      $region33: #{bottleneck_forward.2} parent=11 // pred_check
        %p221 = pneg %p165
      $region34: #{bottleneck_forward.2} parent=11 // pred_check_branch
        %223 = sbr.rel (%p221) target = $region36
      $region35: #{bottleneck_forward.2} parent=11 // pred_region
        _
      $region36: #{bottleneck_forward.2} parent=11 // pred_fallthru
        _
    $region12: #{bottleneck_forward.2} parent=5 // pred_fallthru
      _
    %p224 = scmp.lt.s32.totalorder %s13, 2
    // Predicated region
    $region37: #{bottleneck_forward.2} parent=5 // pred_check
      %p225 = pneg %p224
    $region38: #{bottleneck_forward.2} parent=5 // pred_check_branch
      %227 = sbr.rel (%p225) target = $region40
    $region39: #{bottleneck_forward.2} parent=5 // pred_region
      // Predicated region
      $region41: #{bottleneck_forward.2} parent=39 // pred_check
        %p228 = pneg %p33
      $region42: #{bottleneck_forward.2} parent=39 // pred_check_branch
        %230 = sbr.rel (%p228) target = $region44
      $region43: #{bottleneck_forward.2} parent=39 // pred_region
        %p231 = scmp.lt.s32.totalorder %s13, 1
        %s232 = scalar_select %p231, %s13, 1
        %s233 = smul.addr %s232, 32
        %s234 = smul.addr %s233, 4
        %s235 = scalar_lea.vmem %s0, %s234
      $region44: #{bottleneck_forward.2} parent=39 // pred_fallthru
        _
    $region40: #{bottleneck_forward.2} parent=5 // pred_fallthru
      _
    %p236 = scmp.le.s32.totalorder 1, %s13
    %p237 = scmp.lt.s32.totalorder %s13, 3
    %p238 = pnand %p236, %p237
    %p239 = pneg %p238
    // Predicated region
    $region45: #{bottleneck_forward.2} parent=5 // pred_check
      _
    $region46: #{bottleneck_forward.2} parent=5 // pred_check_branch
      %241 = sbr.rel (%p238) target = $region48
    $region47: #{bottleneck_forward.2} parent=5 // pred_region
      %s242 = ssub.s32 %s13, 1
      %p243 = scmp.lt.s32.totalorder %s18, 1
      %s244 = scalar_select %p243, %s18, 1
      %s245 = smul.addr %s244, 32
      %s246 = smul.addr %s245, 4
      %s247 = scalar_lea.vmem %s0, %s246
      %p248 = pneg %p39
      %p249 = pneg %p36
      %p250 = pneg %p60
      %p251 = pneg %p57
      %p252 = pneg %p81
      %p253 = pneg %p78
      %p254 = pneg %p102
      %p255 = pneg %p99
      %p256 = pneg %p123
      %p257 = pneg %p120
      %p258 = pneg %p144
      %p259 = pneg %p141
      %p260 = pneg %p165
      %p261 = pneg %p162
      %p262 = pneg %p191
      %p263 = pneg %p188
      %s264 = smul.u32 8, %s18
      %p265 = scmp.lt.s32.totalorder %s264, 15
      %s266 = scalar_select %p265, %s264, 15
      %s267 = smul.addr %s266, 4
      %s268 = scalar_lea.vmem %s7, %s267
      %p269 = scmp.lt.s32.totalorder %s18, 1
      %s270 = scalar_select %p269, %s18, 1
      %s271 = smul.addr %s270, 32
      %s272 = smul.addr %s271, 4
      %s273 = scalar_lea.vmem %s0, %s272
      %s274 = smul.u32 8, %s18
      %p275 = scmp.lt.s32.totalorder %s274, 15
      %s276 = scalar_select %p275, %s274, 15
      %s277 = smul.addr %s276, 4
      %s278 = scalar_lea.vmem %s7, %s277
      %s279 = smul.u32 8, %s18
      %vm281 = vcmask 27648
      %282 = vst.msk [vmem:[#allocation2] sm:$0xf] %vm281, 0
      %283 = vst.msk [vmem:[#allocation2 + $0x4] sm:$0xf] %vm281, 0
      %284 = vst.msk [vmem:[#allocation2 + $0x8] sm:$0xf] %vm281, 0
      %285 = vst.msk [vmem:[#allocation2 + $0xc] sm:$0xf] %vm281, 0
      %286 = vst.msk [vmem:[#allocation2 + $0x10] sm:$0xf] %vm281, 0
      %287 = vst.msk [vmem:[#allocation2 + $0x14] sm:$0xf] %vm281, 0
      %288 = vst.msk [vmem:[#allocation2 + $0x18] sm:$0xf] %vm281, 0
      %289 = vst.msk [vmem:[#allocation2 + $0x1c] sm:$0xf] %vm281, 0
      %290 = vst.msk [vmem:[#allocation2 + $0x20] sm:$0xf] %vm281, 0
      %291 = vst.msk [vmem:[#allocation2 + $0x24] sm:$0xf] %vm281, 0
      %292 = vst.msk [vmem:[#allocation2 + $0x28] sm:$0xf] %vm281, 0
      %293 = vst.msk [vmem:[#allocation2 + $0x2c] sm:$0xf] %vm281, 0
      %294 = vst.msk [vmem:[#allocation2 + $0x30] sm:$0xf] %vm281, 0
      %295 = vst.msk [vmem:[#allocation2 + $0x34] sm:$0xf] %vm281, 0
      %296 = vst.msk [vmem:[#allocation2 + $0x38] sm:$0xf] %vm281, 0
      %297 = vst.msk [vmem:[#allocation2 + $0x3c] sm:$0xf] %vm281, 0
      %298 = vst.msk [vmem:[#allocation2 + $0x40] sm:$0xf] %vm281, 0
      %299 = vst.msk [vmem:[#allocation2 + $0x44] sm:$0xf] %vm281, 0
      %300 = vst.msk [vmem:[#allocation2 + $0x48] sm:$0xf] %vm281, 0
      %301 = vst.msk [vmem:[#allocation2 + $0x4c] sm:$0xf] %vm281, 0
      %302 = vst.msk [vmem:[#allocation2 + $0x50] sm:$0xf] %vm281, 0
      %303 = vst.msk [vmem:[#allocation2 + $0x54] sm:$0xf] %vm281, 0
      %304 = vst.msk [vmem:[#allocation2 + $0x58] sm:$0xf] %vm281, 0
      %305 = vst.msk [vmem:[#allocation2 + $0x5c] sm:$0xf] %vm281, 0
      %306 = vst.msk [vmem:[#allocation2 + $0x60] sm:$0xf] %vm281, 0
      %307 = vst.msk [vmem:[#allocation2 + $0x64] sm:$0xf] %vm281, 0
      %308 = vst.msk [vmem:[#allocation2 + $0x68] sm:$0xf] %vm281, 0
      %309 = vst.msk [vmem:[#allocation2 + $0x6c] sm:$0xf] %vm281, 0
      %310 = vst.msk [vmem:[#allocation2 + $0x70] sm:$0xf] %vm281, 0
      %311 = vst.msk [vmem:[#allocation2 + $0x74] sm:$0xf] %vm281, 0
      %312 = vst.msk [vmem:[#allocation2 + $0x78] sm:$0xf] %vm281, 0
      %313 = vst.msk [vmem:[#allocation2 + $0x7c] sm:$0xf] %vm281, 0
      %314 = vst.msk [vmem:[#allocation2 + $0x80] sm:$0xf] %vm281, 0
      %315 = vst.msk [vmem:[#allocation2 + $0x84] sm:$0xf] %vm281, 0
      %316 = vst.msk [vmem:[#allocation2 + $0x88] sm:$0xf] %vm281, 0
      %317 = vst.msk [vmem:[#allocation2 + $0x8c] sm:$0xf] %vm281, 0
      %318 = vst.msk [vmem:[#allocation2 + $0x90] sm:$0xf] %vm281, 0
      %319 = vst.msk [vmem:[#allocation2 + $0x94] sm:$0xf] %vm281, 0
      %320 = vst.msk [vmem:[#allocation2 + $0x98] sm:$0xf] %vm281, 0
      %321 = vst.msk [vmem:[#allocation2 + $0x9c] sm:$0xf] %vm281, 0
      %322 = vst.msk [vmem:[#allocation2 + $0xa0] sm:$0xf] %vm281, 0
      %323 = vst.msk [vmem:[#allocation2 + $0xa4] sm:$0xf] %vm281, 0
      %324 = vst.msk [vmem:[#allocation2 + $0xa8] sm:$0xf] %vm281, 0
      %325 = vst.msk [vmem:[#allocation2 + $0xac] sm:$0xf] %vm281, 0
      %326 = vst.msk [vmem:[#allocation2 + $0xb0] sm:$0xf] %vm281, 0
      %327 = vst.msk [vmem:[#allocation2 + $0xb4] sm:$0xf] %vm281, 0
      %328 = vst.msk [vmem:[#allocation2 + $0xb8] sm:$0xf] %vm281, 0
      %329 = vst.msk [vmem:[#allocation2 + $0xbc] sm:$0xf] %vm281, 0
      %330 = vst.msk [vmem:[#allocation2 + $0xc0] sm:$0xf] %vm281, 0
      %331 = vst.msk [vmem:[#allocation2 + $0xc4] sm:$0xf] %vm281, 0
      %332 = vst.msk [vmem:[#allocation2 + $0xc8] sm:$0xf] %vm281, 0
      %333 = vst.msk [vmem:[#allocation2 + $0xcc] sm:$0xf] %vm281, 0
      %334 = vst.msk [vmem:[#allocation2 + $0xd0] sm:$0xf] %vm281, 0
      %335 = vst.msk [vmem:[#allocation2 + $0xd4] sm:$0xf] %vm281, 0
      loop: start=0, step=1, limit=2
      $region49: #{bottleneck_forward.2} parent=47 // loop_pre_header
        _
      $region50: #{bottleneck_forward.2} parent=47 // loop_header
        %s337 = sphi 0, %s341
        %p338 = scmp.ge.s32.totalorder %s337, 2
      $region51: #{bottleneck_forward.2} parent=47 // loop_header_branch
        %340 = sbr.rel (%p338) target = $region55
      $region52: #{bottleneck_forward.2} parent=47 // loop_body
        %s342 = smul.u32 %s337, 8
        %s343 = smul.u32 %s342, 2
        %s344 = smul.addr %s343, 4
        %s345 = scalar_lea.vmem %s273, %s344
        %v346 = vld [vmem:[%s345] sm:$0xf]
        %v347 = vld [vmem:[%s345 + $0x4] sm:$0xf]
        %v348 = vld [vmem:[%s345 + $0x8] sm:$0xf]
        %v349 = vld [vmem:[%s345 + $0xc] sm:$0xf]
        %v350 = vld [vmem:[%s345 + $0x10] sm:$0xf]
        %v351 = vld [vmem:[%s345 + $0x14] sm:$0xf]
        %v352 = vld [vmem:[%s345 + $0x18] sm:$0xf]
        %v353 = vld [vmem:[%s345 + $0x1c] sm:$0xf]
        %v354 = vld [vmem:[%s345 + $0x20] sm:$0xf]
        %v355 = vld [vmem:[%s345 + $0x24] sm:$0xf]
        %v356 = vld [vmem:[%s345 + $0x28] sm:$0xf]
        %v357 = vld [vmem:[%s345 + $0x2c] sm:$0xf]
        %v358 = vld [vmem:[%s345 + $0x30] sm:$0xf]
        %v359 = vld [vmem:[%s345 + $0x34] sm:$0xf]
        %v360 = vld [vmem:[%s345 + $0x38] sm:$0xf]
        %v361 = vld [vmem:[%s345 + $0x3c] sm:$0xf]
        %v362 = vld [vmem:[%s1] sm:$0x3]
        %v379 = vunpack.c.l.b16 %v346
        %v380 = vunpack.c.l.b16 %v347
        %v381 = vunpack.c.l.b16 %v348
        %v382 = vunpack.c.l.b16 %v349
        %v383 = vunpack.c.l.b16 %v350
        %v384 = vunpack.c.l.b16 %v351
        %v385 = vunpack.c.l.b16 %v352
        %v386 = vunpack.c.l.b16 %v353
        %v387 = vunpack.c.l.b16 %v354
        %v388 = vunpack.c.l.b16 %v355
        %v389 = vunpack.c.l.b16 %v356
        %v390 = vunpack.c.l.b16 %v357
        %v391 = vunpack.c.l.b16 %v358
        %v392 = vunpack.c.l.b16 %v359
        %v393 = vunpack.c.l.b16 %v360
        %v394 = vunpack.c.l.b16 %v361
        %v395 = vpack.c.b16 %v380, %v379
        %v396 = vpack.c.b16 %v382, %v381
        %v397 = vpack.c.b16 %v384, %v383
        %v398 = vpack.c.b16 %v386, %v385
        %v399 = vpack.c.b16 %v388, %v387
        %v400 = vpack.c.b16 %v390, %v389
        %v401 = vpack.c.b16 %v392, %v391
        %v402 = vpack.c.b16 %v394, %v393
        %vm403 = vcmask 31744
        %v405 = vsel %vm403, %v395, 0
        %v408 = vsel %vm403, %v396, 0
        %v411 = vsel %vm403, %v397, 0
        %v414 = vsel %vm403, %v398, 0
        %v417 = vsel %vm403, %v399, 0
        %v420 = vsel %vm403, %v400, 0
        %v423 = vsel %vm403, %v401, 0
        %v426 = vsel %vm403, %v402, 0
        %vm428 = vcmask 1041408
        %v430 = vsel %vm428, %v362, 0
        %432 = vmatpush.bf16.msra.mxu0 0
        %433 = vmatpush.bf16.msra.mxu0 0
        %434 = vmatpush.bf16.msra.mxu0 0
        %435 = vmatpush.bf16.msra.mxu0 0
        %436 = vmatpush.bf16.msra.mxu0 0
        %437 = vmatpush.bf16.msra.mxu0 0
        %438 = vmatpush.bf16.msra.mxu0 0
        %439 = vmatpush.bf16.msra.mxu0 %v430
        %440 = vmatmul.bf16.gmra.mxu0 %v405
        %v441 = vpop.f32.mrf.mxu0
        %v442 = vadd.f32 0.0, %v441
        %v443 = vpop.f32.mrf.mxu0
        %v444 = vadd.f32 0.0, %v443
        %445 = vmatmul.bf16.gmra.mxu0 %v408
        %v446 = vpop.f32.mrf.mxu0
        %v447 = vadd.f32 0.0, %v446
        %v448 = vpop.f32.mrf.mxu0
        %v449 = vadd.f32 0.0, %v448
        %450 = vmatmul.bf16.gmra.mxu0 %v411
        %v451 = vpop.f32.mrf.mxu0
        %v452 = vadd.f32 0.0, %v451
        %v453 = vpop.f32.mrf.mxu0
        %v454 = vadd.f32 0.0, %v453
        %455 = vmatmul.bf16.gmra.mxu0 %v414
        %v456 = vpop.f32.mrf.mxu0
        %v457 = vadd.f32 0.0, %v456
        %v458 = vpop.f32.mrf.mxu0
        %v459 = vadd.f32 0.0, %v458
        %460 = vmatmul.bf16.gmra.mxu0 %v417
        %v461 = vpop.f32.mrf.mxu0
        %v462 = vadd.f32 0.0, %v461
        %v463 = vpop.f32.mrf.mxu0
        %v464 = vadd.f32 0.0, %v463
        %465 = vmatmul.bf16.gmra.mxu0 %v420
        %v466 = vpop.f32.mrf.mxu0
        %v467 = vadd.f32 0.0, %v466
        %v468 = vpop.f32.mrf.mxu0
        %v469 = vadd.f32 0.0, %v468
        %470 = vmatmul.bf16.gmra.mxu0 %v423
        %v471 = vpop.f32.mrf.mxu0
        %v472 = vadd.f32 0.0, %v471
        %v473 = vpop.f32.mrf.mxu0
        %v474 = vadd.f32 0.0, %v473
        %475 = vmatmul.bf16.gmra.mxu0 %v426
        %v476 = vpop.f32.mrf.mxu0
        %v477 = vadd.f32 0.0, %v476
        %v478 = vpop.f32.mrf.mxu0
        %v479 = vadd.f32 0.0, %v478
        %480 = vdwg.mxu0
        %v481 = vld [vmem:[%s2] sm:$0x1]
        %v483 = vperm.slane %v481, 0
        %v485 = vmul.f32 %v442, %v483
        %v486 = vmul.f32 %v444, %v483
        %v487 = vmul.f32 %v447, %v483
        %v488 = vmul.f32 %v449, %v483
        %v489 = vmul.f32 %v452, %v483
        %v490 = vmul.f32 %v454, %v483
        %v491 = vmul.f32 %v457, %v483
        %v492 = vmul.f32 %v459, %v483
        %v493 = vmul.f32 %v462, %v483
        %v494 = vmul.f32 %v464, %v483
        %v495 = vmul.f32 %v467, %v483
        %v496 = vmul.f32 %v469, %v483
        %v497 = vmul.f32 %v472, %v483
        %v498 = vmul.f32 %v474, %v483
        %v499 = vmul.f32 %v477, %v483
        %v500 = vmul.f32 %v479, %v483
        %v501 = vld [vmem:[%s3] sm:$0x1]
        %v503 = vperm.slane %v501, 0
        %v505 = vadd.f32 %v485, %v503
        %v506 = vadd.f32 %v486, %v503
        %v507 = vadd.f32 %v487, %v503
        %v508 = vadd.f32 %v488, %v503
        %v509 = vadd.f32 %v489, %v503
        %v510 = vadd.f32 %v490, %v503
        %v511 = vadd.f32 %v491, %v503
        %v512 = vadd.f32 %v492, %v503
        %v513 = vadd.f32 %v493, %v503
        %v514 = vadd.f32 %v494, %v503
        %v515 = vadd.f32 %v495, %v503
        %v516 = vadd.f32 %v496, %v503
        %v517 = vadd.f32 %v497, %v503
        %v518 = vadd.f32 %v498, %v503
        %v519 = vadd.f32 %v499, %v503
        %v520 = vadd.f32 %v500, %v503
        %v521 = vmax.f32 %v505, 0.0
        %v522 = vmax.f32 %v506, 0.0
        %v523 = vmax.f32 %v507, 0.0
        %v524 = vmax.f32 %v508, 0.0
        %v525 = vmax.f32 %v509, 0.0
        %v526 = vmax.f32 %v510, 0.0
        %v527 = vmax.f32 %v511, 0.0
        %v528 = vmax.f32 %v512, 0.0
        %v529 = vmax.f32 %v513, 0.0
        %v530 = vmax.f32 %v514, 0.0
        %v531 = vmax.f32 %v515, 0.0
        %v532 = vmax.f32 %v516, 0.0
        %v533 = vmax.f32 %v517, 0.0
        %v534 = vmax.f32 %v518, 0.0
        %v535 = vmax.f32 %v519, 0.0
        %v536 = vmax.f32 %v520, 0.0
        %v537 = vpack.c.bf16 %v521, %v521
        %v538 = vpack.c.bf16 %v522, %v522
        %v539 = vpack.c.bf16 %v523, %v523
        %v540 = vpack.c.bf16 %v524, %v524
        %v541 = vpack.c.bf16 %v525, %v525
        %v542 = vpack.c.bf16 %v526, %v526
        %v543 = vpack.c.bf16 %v527, %v527
        %v544 = vpack.c.bf16 %v528, %v528
        %v545 = vpack.c.bf16 %v529, %v529
        %v546 = vpack.c.bf16 %v530, %v530
        %v547 = vpack.c.bf16 %v531, %v531
        %v548 = vpack.c.bf16 %v532, %v532
        %v549 = vpack.c.bf16 %v533, %v533
        %v550 = vpack.c.bf16 %v534, %v534
        %v551 = vpack.c.bf16 %v535, %v535
        %v552 = vpack.c.bf16 %v536, %v536
        %s553 = sadd.s32 %s342, 1
        %vm554 = vsmask.f32 256
        %vm555 = vsmask.f32 4368
        %vm556 = vmor %vm554, %vm555
        %v558 = vshrl.u32 %v537, 16
        %v560 = vrot.slane %v558, 7
        %v561 = vshll.u32 %v537, 16
        %v563 = vor.u32 %v560, %v561
        %v564 = vrot.slane %v560, 4
        %v566 = vshrl.u32 %v538, 16
        %v568 = vrot.slane %v566, 7
        %v569 = vshll.u32 %v538, 16
        %v571 = vor.u32 %v568, %v569
        %v572 = vsel %vm556, %v564, %v571
        %v573 = vrot.slane %v568, 4
        %v575 = vshrl.u32 %v539, 16
        %v577 = vrot.slane %v575, 7
        %v578 = vshll.u32 %v539, 16
        %v580 = vor.u32 %v577, %v578
        %v581 = vrot.slane %v577, 4
        %v583 = vshrl.u32 %v540, 16
        %v585 = vrot.slane %v583, 7
        %v586 = vshll.u32 %v540, 16
        %v588 = vor.u32 %v585, %v586
        %v589 = vsel %vm556, %v581, %v588
        %v590 = vrot.slane %v585, 4
        %v592 = vshrl.u32 %v541, 16
        %v594 = vrot.slane %v592, 7
        %v595 = vshll.u32 %v541, 16
        %v597 = vor.u32 %v594, %v595
        %v598 = vrot.slane %v594, 4
        %v600 = vshrl.u32 %v542, 16
        %v602 = vrot.slane %v600, 7
        %v603 = vshll.u32 %v542, 16
        %v605 = vor.u32 %v602, %v603
        %v606 = vsel %vm556, %v598, %v605
        %v607 = vrot.slane %v602, 4
        %v609 = vshrl.u32 %v543, 16
        %v611 = vrot.slane %v609, 7
        %v612 = vshll.u32 %v543, 16
        %v614 = vor.u32 %v611, %v612
        %v615 = vrot.slane %v611, 4
        %v617 = vshrl.u32 %v544, 16
        %v619 = vrot.slane %v617, 7
        %v620 = vshll.u32 %v544, 16
        %v622 = vor.u32 %v619, %v620
        %v623 = vsel %vm556, %v615, %v622
        %v624 = vrot.slane %v619, 4
        %v626 = vshrl.u32 %v545, 16
        %v628 = vrot.slane %v626, 7
        %v629 = vshll.u32 %v545, 16
        %v631 = vor.u32 %v628, %v629
        %v632 = vrot.slane %v628, 4
        %v634 = vshrl.u32 %v546, 16
        %v636 = vrot.slane %v634, 7
        %v637 = vshll.u32 %v546, 16
        %v639 = vor.u32 %v636, %v637
        %v640 = vsel %vm556, %v632, %v639
        %v641 = vrot.slane %v636, 4
        %v643 = vshrl.u32 %v547, 16
        %v645 = vrot.slane %v643, 7
        %v646 = vshll.u32 %v547, 16
        %v648 = vor.u32 %v645, %v646
        %v649 = vrot.slane %v645, 4
        %v651 = vshrl.u32 %v548, 16
        %v653 = vrot.slane %v651, 7
        %v654 = vshll.u32 %v548, 16
        %v656 = vor.u32 %v653, %v654
        %v657 = vsel %vm556, %v649, %v656
        %v658 = vrot.slane %v653, 4
        %v660 = vshrl.u32 %v549, 16
        %v662 = vrot.slane %v660, 7
        %v663 = vshll.u32 %v549, 16
        %v665 = vor.u32 %v662, %v663
        %v666 = vrot.slane %v662, 4
        %v668 = vshrl.u32 %v550, 16
        %v670 = vrot.slane %v668, 7
        %v671 = vshll.u32 %v550, 16
        %v673 = vor.u32 %v670, %v671
        %v674 = vsel %vm556, %v666, %v673
        %v675 = vrot.slane %v670, 4
        %v677 = vshrl.u32 %v551, 16
        %v679 = vrot.slane %v677, 7
        %v680 = vshll.u32 %v551, 16
        %v682 = vor.u32 %v679, %v680
        %v683 = vrot.slane %v679, 4
        %v685 = vshrl.u32 %v552, 16
        %v687 = vrot.slane %v685, 7
        %v688 = vshll.u32 %v552, 16
        %v690 = vor.u32 %v687, %v688
        %v691 = vsel %vm556, %v683, %v690
        %v692 = vrot.slane %v687, 4
        %s717 = smul.u32 %s553, 3
        %s718 = smul.addr %s717, 4
        %s719 = scalar_lea.vmem [#allocation2], %s718
        %vm720 = vcmask 27648
        %vm721 = vsmask.f32 7938
        %vm722 = vmand %vm720, %vm721
        %v723 = vld [vmem:[%s719] sm:$0xf]
        %v724 = vsel %vm722, %v563, %v723
        %725 = vst [vmem:[%s719] sm:$0xf] %v724
        %726 = vst.msk [vmem:[%s719 + $0x4] sm:$0xf] %vm281, %v572
        %vm727 = vcmask 24576
        %vm728 = vmand %vm727, %vm554
        %v729 = vld [vmem:[%s719 + $0x8] sm:$0x1]
        %v730 = vsel %vm728, %v573, %v729
        %731 = vst [vmem:[%s719 + $0x8] sm:$0x1] %v730
        %v732 = vld [vmem:[%s719 + $0xc] sm:$0xf]
        %v733 = vsel %vm722, %v580, %v732
        %734 = vst [vmem:[%s719 + $0xc] sm:$0xf] %v733
        %735 = vst.msk [vmem:[%s719 + $0x10] sm:$0xf] %vm281, %v589
        %v736 = vld [vmem:[%s719 + $0x14] sm:$0x1]
        %v737 = vsel %vm728, %v590, %v736
        %738 = vst [vmem:[%s719 + $0x14] sm:$0x1] %v737
        %v739 = vld [vmem:[%s719 + $0x18] sm:$0xf]
        %v740 = vsel %vm722, %v597, %v739
        %741 = vst [vmem:[%s719 + $0x18] sm:$0xf] %v740
        %742 = vst.msk [vmem:[%s719 + $0x1c] sm:$0xf] %vm281, %v606
        %v743 = vld [vmem:[%s719 + $0x20] sm:$0x1]
        %v744 = vsel %vm728, %v607, %v743
        %745 = vst [vmem:[%s719 + $0x20] sm:$0x1] %v744
        %v746 = vld [vmem:[%s719 + $0x24] sm:$0xf]
        %v747 = vsel %vm722, %v614, %v746
        %748 = vst [vmem:[%s719 + $0x24] sm:$0xf] %v747
        %749 = vst.msk [vmem:[%s719 + $0x28] sm:$0xf] %vm281, %v623
        %v750 = vld [vmem:[%s719 + $0x2c] sm:$0x1]
        %v751 = vsel %vm728, %v624, %v750
        %752 = vst [vmem:[%s719 + $0x2c] sm:$0x1] %v751
        %v753 = vld [vmem:[%s719 + $0x30] sm:$0xf]
        %v754 = vsel %vm722, %v631, %v753
        %755 = vst [vmem:[%s719 + $0x30] sm:$0xf] %v754
        %756 = vst.msk [vmem:[%s719 + $0x34] sm:$0xf] %vm281, %v640
        %v757 = vld [vmem:[%s719 + $0x38] sm:$0x1]
        %v758 = vsel %vm728, %v641, %v757
        %759 = vst [vmem:[%s719 + $0x38] sm:$0x1] %v758
        %v760 = vld [vmem:[%s719 + $0x3c] sm:$0xf]
        %v761 = vsel %vm722, %v648, %v760
        %762 = vst [vmem:[%s719 + $0x3c] sm:$0xf] %v761
        %763 = vst.msk [vmem:[%s719 + $0x40] sm:$0xf] %vm281, %v657
        %v764 = vld [vmem:[%s719 + $0x44] sm:$0x1]
        %v765 = vsel %vm728, %v658, %v764
        %766 = vst [vmem:[%s719 + $0x44] sm:$0x1] %v765
        %v767 = vld [vmem:[%s719 + $0x48] sm:$0xf]
        %v768 = vsel %vm722, %v665, %v767
        %769 = vst [vmem:[%s719 + $0x48] sm:$0xf] %v768
        %770 = vst.msk [vmem:[%s719 + $0x4c] sm:$0xf] %vm281, %v674
        %v771 = vld [vmem:[%s719 + $0x50] sm:$0x1]
        %v772 = vsel %vm728, %v675, %v771
        %773 = vst [vmem:[%s719 + $0x50] sm:$0x1] %v772
        %v774 = vld [vmem:[%s719 + $0x54] sm:$0xf]
        %v775 = vsel %vm722, %v682, %v774
        %776 = vst [vmem:[%s719 + $0x54] sm:$0xf] %v775
        %777 = vst.msk [vmem:[%s719 + $0x58] sm:$0xf] %vm281, %v691
        %v778 = vld [vmem:[%s719 + $0x5c] sm:$0x1]
        %v779 = vsel %vm728, %v692, %v778
        %780 = vst [vmem:[%s719 + $0x5c] sm:$0x1] %v779
      $region53: #{bottleneck_forward.2} parent=47 // loop_footer
        %s341 = sadd.s32 1, %s337
      $region54: #{bottleneck_forward.2} parent=47 // loop_footer_branch
        %336 = sbr.rel target = $region50
      $region55: #{bottleneck_forward.2} parent=47 // loop_exit
        _
      %v781 = vld [vmem:[#allocation2] sm:$0xf]
      %v782 = vld [vmem:[#allocation2 + $0x4] sm:$0xf]
      %v783 = vld [vmem:[#allocation2 + $0x8] sm:$0xf]
      %v784 = vld [vmem:[#allocation2 + $0xc] sm:$0xf]
      %v785 = vld [vmem:[#allocation2 + $0x10] sm:$0xf]
      %v786 = vld [vmem:[#allocation2 + $0x14] sm:$0xf]
      %v787 = vld [vmem:[#allocation2 + $0x18] sm:$0xf]
      %v788 = vld [vmem:[#allocation2 + $0x1c] sm:$0xf]
      %v789 = vld [vmem:[#allocation2 + $0x20] sm:$0xf]
      %v790 = vld [vmem:[#allocation2 + $0x24] sm:$0xf]
      %v791 = vld [vmem:[#allocation2 + $0x28] sm:$0xf]
      %v792 = vld [vmem:[#allocation2 + $0x2c] sm:$0xf]
      %v793 = vld [vmem:[#allocation2 + $0x30] sm:$0xf]
      %v794 = vld [vmem:[#allocation2 + $0x34] sm:$0xf]
      %v795 = vld [vmem:[#allocation2 + $0x38] sm:$0xf]
      %v796 = vld [vmem:[#allocation2 + $0x3c] sm:$0xf]
      %v797 = vld [vmem:[#allocation2 + $0x40] sm:$0xf]
      %v798 = vld [vmem:[#allocation2 + $0x44] sm:$0xf]
      %v799 = vld [vmem:[#allocation2 + $0x48] sm:$0xf]
      %v800 = vld [vmem:[#allocation2 + $0x4c] sm:$0xf]
      %v801 = vld [vmem:[#allocation2 + $0x50] sm:$0xf]
      %v802 = vld [vmem:[#allocation2 + $0x54] sm:$0xf]
      %v803 = vld [vmem:[#allocation2 + $0x58] sm:$0xf]
      %v804 = vld [vmem:[#allocation2 + $0x5c] sm:$0xf]
      %v805 = vld [vmem:[#allocation2 + $0x60] sm:$0xf]
      %v806 = vld [vmem:[#allocation2 + $0x64] sm:$0xf]
      %v807 = vld [vmem:[#allocation2 + $0x68] sm:$0xf]
      %v808 = vld [vmem:[#allocation2 + $0x6c] sm:$0xf]
      %v809 = vld [vmem:[#allocation2 + $0x70] sm:$0xf]
      %v810 = vld [vmem:[#allocation2 + $0x74] sm:$0xf]
      %v811 = vld [vmem:[#allocation2 + $0x78] sm:$0xf]
      %v812 = vld [vmem:[#allocation2 + $0x7c] sm:$0xf]
      %v813 = vld [vmem:[#allocation2 + $0x80] sm:$0xf]
      %v814 = vld [vmem:[#allocation2 + $0x84] sm:$0xf]
      %v815 = vld [vmem:[#allocation2 + $0x88] sm:$0xf]
      %v816 = vld [vmem:[#allocation2 + $0x8c] sm:$0xf]
      %v817 = vld [vmem:[#allocation2 + $0x90] sm:$0xf]
      %v818 = vld [vmem:[#allocation2 + $0x94] sm:$0xf]
      %v819 = vld [vmem:[#allocation2 + $0x98] sm:$0xf]
      %v820 = vld [vmem:[#allocation2 + $0x9c] sm:$0xf]
      %v821 = vld [vmem:[#allocation2 + $0xa0] sm:$0xf]
      %v822 = vld [vmem:[#allocation2 + $0xa4] sm:$0xf]
      %v823 = vld [vmem:[#allocation2 + $0xa8] sm:$0xf]
      %v824 = vld [vmem:[#allocation2 + $0xac] sm:$0xf]
      %v825 = vld [vmem:[#allocation2 + $0xb0] sm:$0xf]
      %v826 = vld [vmem:[#allocation2 + $0xb4] sm:$0xf]
      %v827 = vld [vmem:[#allocation2 + $0xb8] sm:$0xf]
      %v828 = vld [vmem:[#allocation2 + $0xbc] sm:$0xf]
      %v829 = vld [vmem:[#allocation2 + $0xc0] sm:$0xf]
      %v830 = vld [vmem:[#allocation2 + $0xc4] sm:$0xf]
      %v831 = vld [vmem:[#allocation2 + $0xc8] sm:$0xf]
      %v848 = vrot.slane %v781, 3
      %v849 = vrot.slane %v782, 3
      %v850 = vrot.slane %v787, 3
      %v851 = vrot.slane %v788, 3
      %v852 = vrot.slane %v793, 3
      %v853 = vrot.slane %v794, 3
      %v854 = vrot.slane %v799, 3
      %v855 = vrot.slane %v800, 3
      %v856 = vrot.slane %v805, 3
      %v857 = vrot.slane %v806, 3
      %v858 = vrot.slane %v811, 3
      %v859 = vrot.slane %v812, 3
      %v860 = vrot.slane %v817, 3
      %v861 = vrot.slane %v818, 3
      %v862 = vrot.slane %v823, 3
      %v863 = vrot.slane %v824, 3
      %vm864 = vcmask 1040384
      %v867 = vsel %vm864, %v781, %v848
      %vm868 = vcmask 1041409
      %v869 = vsel %vm868, %v781, %v848
      %v871 = vrot.slane %v869, 1
      %vm872 = vcmask 1042434
      %v873 = vsel %vm872, %v781, %v848
      %v875 = vrot.slane %v873, 2
      %vm876 = vcmask 1043459
      %v877 = vsel %vm876, %v781, %v848
      %v879 = vrot.slane %v877, 3
      %v882 = vsel %vm864, %v782, %v849
      %v883 = vsel %vm868, %v782, %v849
      %v885 = vrot.slane %v883, 1
      %v886 = vsel %vm872, %v782, %v849
      %v888 = vrot.slane %v886, 2
      %v889 = vsel %vm876, %v782, %v849
      %v891 = vrot.slane %v889, 3
      %v894 = vsel %vm864, %v787, %v850
      %v895 = vsel %vm868, %v787, %v850
      %v897 = vrot.slane %v895, 1
      %v898 = vsel %vm872, %v787, %v850
      %v900 = vrot.slane %v898, 2
      %v901 = vsel %vm876, %v787, %v850
      %v903 = vrot.slane %v901, 3
      %v906 = vsel %vm864, %v788, %v851
      %v907 = vsel %vm868, %v788, %v851
      %v909 = vrot.slane %v907, 1
      %v910 = vsel %vm872, %v788, %v851
      %v912 = vrot.slane %v910, 2
      %v913 = vsel %vm876, %v788, %v851
      %v915 = vrot.slane %v913, 3
      %v918 = vsel %vm864, %v793, %v852
      %v919 = vsel %vm868, %v793, %v852
      %v921 = vrot.slane %v919, 1
      %v922 = vsel %vm872, %v793, %v852
      %v924 = vrot.slane %v922, 2
      %v925 = vsel %vm876, %v793, %v852
      %v927 = vrot.slane %v925, 3
      %v930 = vsel %vm864, %v794, %v853
      %v931 = vsel %vm868, %v794, %v853
      %v933 = vrot.slane %v931, 1
      %v934 = vsel %vm872, %v794, %v853
      %v936 = vrot.slane %v934, 2
      %v937 = vsel %vm876, %v794, %v853
      %v939 = vrot.slane %v937, 3
      %v942 = vsel %vm864, %v799, %v854
      %v943 = vsel %vm868, %v799, %v854
      %v945 = vrot.slane %v943, 1
      %v946 = vsel %vm872, %v799, %v854
      %v948 = vrot.slane %v946, 2
      %v949 = vsel %vm876, %v799, %v854
      %v951 = vrot.slane %v949, 3
      %v954 = vsel %vm864, %v800, %v855
      %v955 = vsel %vm868, %v800, %v855
      %v957 = vrot.slane %v955, 1
      %v958 = vsel %vm872, %v800, %v855
      %v960 = vrot.slane %v958, 2
      %v961 = vsel %vm876, %v800, %v855
      %v963 = vrot.slane %v961, 3
      %v966 = vsel %vm864, %v805, %v856
      %v967 = vsel %vm868, %v805, %v856
      %v969 = vrot.slane %v967, 1
      %v970 = vsel %vm872, %v805, %v856
      %v972 = vrot.slane %v970, 2
      %v973 = vsel %vm876, %v805, %v856
      %v975 = vrot.slane %v973, 3
      %v978 = vsel %vm864, %v806, %v857
      %v979 = vsel %vm868, %v806, %v857
      %v981 = vrot.slane %v979, 1
      %v982 = vsel %vm872, %v806, %v857
      %v984 = vrot.slane %v982, 2
      %v985 = vsel %vm876, %v806, %v857
      %v987 = vrot.slane %v985, 3
      %v990 = vsel %vm864, %v811, %v858
      %v991 = vsel %vm868, %v811, %v858
      %v993 = vrot.slane %v991, 1
      %v994 = vsel %vm872, %v811, %v858
      %v996 = vrot.slane %v994, 2
      %v997 = vsel %vm876, %v811, %v858
      %v999 = vrot.slane %v997, 3
      %v1002 = vsel %vm864, %v812, %v859
      %v1003 = vsel %vm868, %v812, %v859
      %v1005 = vrot.slane %v1003, 1
      %v1006 = vsel %vm872, %v812, %v859
      %v1008 = vrot.slane %v1006, 2
      %v1009 = vsel %vm876, %v812, %v859
      %v1011 = vrot.slane %v1009, 3
      %v1014 = vsel %vm864, %v817, %v860
      %v1015 = vsel %vm868, %v817, %v860
      %v1017 = vrot.slane %v1015, 1
      %v1018 = vsel %vm872, %v817, %v860
      %v1020 = vrot.slane %v1018, 2
      %v1021 = vsel %vm876, %v817, %v860
      %v1023 = vrot.slane %v1021, 3
      %v1026 = vsel %vm864, %v818, %v861
      %v1027 = vsel %vm868, %v818, %v861
      %v1029 = vrot.slane %v1027, 1
      %v1030 = vsel %vm872, %v818, %v861
      %v1032 = vrot.slane %v1030, 2
      %v1033 = vsel %vm876, %v818, %v861
      %v1035 = vrot.slane %v1033, 3
      %v1038 = vsel %vm864, %v823, %v862
      %v1039 = vsel %vm868, %v823, %v862
      %v1041 = vrot.slane %v1039, 1
      %v1042 = vsel %vm872, %v823, %v862
      %v1044 = vrot.slane %v1042, 2
      %v1045 = vsel %vm876, %v823, %v862
      %v1047 = vrot.slane %v1045, 3
      %v1050 = vsel %vm864, %v824, %v863
      %v1051 = vsel %vm868, %v824, %v863
      %v1053 = vrot.slane %v1051, 1
      %v1054 = vsel %vm872, %v824, %v863
      %v1056 = vrot.slane %v1054, 2
      %v1057 = vsel %vm876, %v824, %v863
      %v1059 = vrot.slane %v1057, 3
      %v1068 = vrot.slane %v783, 3
      %v1069 = vrot.slane %v789, 3
      %v1070 = vrot.slane %v795, 3
      %v1071 = vrot.slane %v801, 3
      %v1072 = vrot.slane %v807, 3
      %v1073 = vrot.slane %v813, 3
      %v1074 = vrot.slane %v819, 3
      %v1075 = vrot.slane %v825, 3
      %v1078 = vsel %vm864, %v783, %v1068
      %v1081 = vsel %vm864, %v789, %v1069
      %v1084 = vsel %vm864, %v795, %v1070
      %v1087 = vsel %vm864, %v801, %v1071
      %v1090 = vsel %vm864, %v807, %v1072
      %v1093 = vsel %vm864, %v813, %v1073
      %v1096 = vsel %vm864, %v819, %v1074
      %v1099 = vsel %vm864, %v825, %v1075
      %vm1100 = vsmask.f32 256
      %vm1101 = vsmask.f32 1284
      %vm1102 = vmor %vm1100, %vm1101
      %vm1103 = vsmask.f32 2312
      %vm1104 = vmor %vm1102, %vm1103
      %vm1105 = vsmask.f32 3340
      %vm1106 = vmor %vm1104, %vm1105
      %vm1107 = vsmask.f32 4368
      %vm1108 = vmor %vm1106, %vm1107
      %vm1109 = vsmask.f32 5396
      %vm1110 = vmor %vm1108, %vm1109
      %vm1111 = vsmask.f32 6424
      %vm1112 = vmor %vm1110, %vm1111
      %vm1113 = vsmask.f32 7452
      %vm1114 = vmor %vm1112, %vm1113
      %v1115 = vshrl.u32 %v867, 16
      %v1117 = vrot.slane %v1115, 7
      %v1118 = vrot.slane %v1117, 1
      %v1120 = vshll.u32 %v871, 16
      %v1122 = vsel %vm1114, %v1118, %v1120
      %v1123 = vshrl.u32 %v871, 16
      %v1125 = vrot.slane %v1123, 7
      %v1126 = vrot.slane %v1125, 1
      %v1128 = vshll.u32 %v875, 16
      %v1130 = vsel %vm1114, %v1126, %v1128
      %v1131 = vshrl.u32 %v875, 16
      %v1133 = vrot.slane %v1131, 7
      %v1134 = vrot.slane %v1133, 1
      %v1136 = vshll.u32 %v879, 16
      %v1138 = vsel %vm1114, %v1134, %v1136
      %v1139 = vshrl.u32 %v879, 16
      %v1141 = vrot.slane %v1139, 7
      %v1142 = vrot.slane %v1141, 1
      %v1143 = vshll.u32 %v882, 16
      %v1145 = vsel %vm1114, %v1142, %v1143
      %v1146 = vshrl.u32 %v882, 16
      %v1148 = vrot.slane %v1146, 7
      %v1149 = vrot.slane %v1148, 1
      %v1151 = vshll.u32 %v885, 16
      %v1153 = vsel %vm1114, %v1149, %v1151
      %v1154 = vshrl.u32 %v885, 16
      %v1156 = vrot.slane %v1154, 7
      %v1157 = vrot.slane %v1156, 1
      %v1159 = vshll.u32 %v888, 16
      %v1161 = vsel %vm1114, %v1157, %v1159
      %v1162 = vshrl.u32 %v888, 16
      %v1164 = vrot.slane %v1162, 7
      %v1165 = vrot.slane %v1164, 1
      %v1167 = vshll.u32 %v891, 16
      %v1169 = vsel %vm1114, %v1165, %v1167
      %v1170 = vshrl.u32 %v891, 16
      %v1172 = vrot.slane %v1170, 7
      %v1173 = vrot.slane %v1172, 1
      %v1174 = vshll.u32 %v1078, 16
      %v1176 = vsel %vm1114, %v1173, %v1174
      %v1177 = vshrl.u32 %v894, 16
      %v1179 = vrot.slane %v1177, 7
      %v1180 = vrot.slane %v1179, 1
      %v1182 = vshll.u32 %v897, 16
      %v1184 = vsel %vm1114, %v1180, %v1182
      %v1185 = vshrl.u32 %v897, 16
      %v1187 = vrot.slane %v1185, 7
      %v1188 = vrot.slane %v1187, 1
      %v1190 = vshll.u32 %v900, 16
      %v1192 = vsel %vm1114, %v1188, %v1190
      %v1193 = vshrl.u32 %v900, 16
      %v1195 = vrot.slane %v1193, 7
      %v1196 = vrot.slane %v1195, 1
      %v1198 = vshll.u32 %v903, 16
      %v1200 = vsel %vm1114, %v1196, %v1198
      %v1201 = vshrl.u32 %v903, 16
      %v1203 = vrot.slane %v1201, 7
      %v1204 = vrot.slane %v1203, 1
      %v1205 = vshll.u32 %v906, 16
      %v1207 = vsel %vm1114, %v1204, %v1205
      %v1208 = vshrl.u32 %v906, 16
      %v1210 = vrot.slane %v1208, 7
      %v1211 = vrot.slane %v1210, 1
      %v1213 = vshll.u32 %v909, 16
      %v1215 = vsel %vm1114, %v1211, %v1213
      %v1216 = vshrl.u32 %v909, 16
      %v1218 = vrot.slane %v1216, 7
      %v1219 = vrot.slane %v1218, 1
      %v1221 = vshll.u32 %v912, 16
      %v1223 = vsel %vm1114, %v1219, %v1221
      %v1224 = vshrl.u32 %v912, 16
      %v1226 = vrot.slane %v1224, 7
      %v1227 = vrot.slane %v1226, 1
      %v1229 = vshll.u32 %v915, 16
      %v1231 = vsel %vm1114, %v1227, %v1229
      %v1232 = vshrl.u32 %v915, 16
      %v1234 = vrot.slane %v1232, 7
      %v1235 = vrot.slane %v1234, 1
      %v1236 = vshll.u32 %v1081, 16
      %v1238 = vsel %vm1114, %v1235, %v1236
      %v1239 = vshrl.u32 %v918, 16
      %v1241 = vrot.slane %v1239, 7
      %v1242 = vrot.slane %v1241, 1
      %v1244 = vshll.u32 %v921, 16
      %v1246 = vsel %vm1114, %v1242, %v1244
      %v1247 = vshrl.u32 %v921, 16
      %v1249 = vrot.slane %v1247, 7
      %v1250 = vrot.slane %v1249, 1
      %v1252 = vshll.u32 %v924, 16
      %v1254 = vsel %vm1114, %v1250, %v1252
      %v1255 = vshrl.u32 %v924, 16
      %v1257 = vrot.slane %v1255, 7
      %v1258 = vrot.slane %v1257, 1
      %v1260 = vshll.u32 %v927, 16
      %v1262 = vsel %vm1114, %v1258, %v1260
      %v1263 = vshrl.u32 %v927, 16
      %v1265 = vrot.slane %v1263, 7
      %v1266 = vrot.slane %v1265, 1
      %v1267 = vshll.u32 %v930, 16
      %v1269 = vsel %vm1114, %v1266, %v1267
      %v1270 = vshrl.u32 %v930, 16
      %v1272 = vrot.slane %v1270, 7
      %v1273 = vrot.slane %v1272, 1
      %v1275 = vshll.u32 %v933, 16
      %v1277 = vsel %vm1114, %v1273, %v1275
      %v1278 = vshrl.u32 %v933, 16
      %v1280 = vrot.slane %v1278, 7
      %v1281 = vrot.slane %v1280, 1
      %v1283 = vshll.u32 %v936, 16
      %v1285 = vsel %vm1114, %v1281, %v1283
      %v1286 = vshrl.u32 %v936, 16
      %v1288 = vrot.slane %v1286, 7
      %v1289 = vrot.slane %v1288, 1
      %v1291 = vshll.u32 %v939, 16
      %v1293 = vsel %vm1114, %v1289, %v1291
      %v1294 = vshrl.u32 %v939, 16
      %v1296 = vrot.slane %v1294, 7
      %v1297 = vrot.slane %v1296, 1
      %v1298 = vshll.u32 %v1084, 16
      %v1300 = vsel %vm1114, %v1297, %v1298
      %v1301 = vshrl.u32 %v942, 16
      %v1303 = vrot.slane %v1301, 7
      %v1304 = vrot.slane %v1303, 1
      %v1306 = vshll.u32 %v945, 16
      %v1308 = vsel %vm1114, %v1304, %v1306
      %v1309 = vshrl.u32 %v945, 16
      %v1311 = vrot.slane %v1309, 7
      %v1312 = vrot.slane %v1311, 1
      %v1314 = vshll.u32 %v948, 16
      %v1316 = vsel %vm1114, %v1312, %v1314
      %v1317 = vshrl.u32 %v948, 16
      %v1319 = vrot.slane %v1317, 7
      %v1320 = vrot.slane %v1319, 1
      %v1322 = vshll.u32 %v951, 16
      %v1324 = vsel %vm1114, %v1320, %v1322
      %v1325 = vshrl.u32 %v951, 16
      %v1327 = vrot.slane %v1325, 7
      %v1328 = vrot.slane %v1327, 1
      %v1329 = vshll.u32 %v954, 16
      %v1331 = vsel %vm1114, %v1328, %v1329
      %v1332 = vshrl.u32 %v954, 16
      %v1334 = vrot.slane %v1332, 7
      %v1335 = vrot.slane %v1334, 1
      %v1337 = vshll.u32 %v957, 16
      %v1339 = vsel %vm1114, %v1335, %v1337
      %v1340 = vshrl.u32 %v957, 16
      %v1342 = vrot.slane %v1340, 7
      %v1343 = vrot.slane %v1342, 1
      %v1345 = vshll.u32 %v960, 16
      %v1347 = vsel %vm1114, %v1343, %v1345
      %v1348 = vshrl.u32 %v960, 16
      %v1350 = vrot.slane %v1348, 7
      %v1351 = vrot.slane %v1350, 1
      %v1353 = vshll.u32 %v963, 16
      %v1355 = vsel %vm1114, %v1351, %v1353
      %v1356 = vshrl.u32 %v963, 16
      %v1358 = vrot.slane %v1356, 7
      %v1359 = vrot.slane %v1358, 1
      %v1360 = vshll.u32 %v1087, 16
      %v1362 = vsel %vm1114, %v1359, %v1360
      %v1363 = vshrl.u32 %v966, 16
      %v1365 = vrot.slane %v1363, 7
      %v1366 = vrot.slane %v1365, 1
      %v1368 = vshll.u32 %v969, 16
      %v1370 = vsel %vm1114, %v1366, %v1368
      %v1371 = vshrl.u32 %v969, 16
      %v1373 = vrot.slane %v1371, 7
      %v1374 = vrot.slane %v1373, 1
      %v1376 = vshll.u32 %v972, 16
      %v1378 = vsel %vm1114, %v1374, %v1376
      %v1379 = vshrl.u32 %v972, 16
      %v1381 = vrot.slane %v1379, 7
      %v1382 = vrot.slane %v1381, 1
      %v1384 = vshll.u32 %v975, 16
      %v1386 = vsel %vm1114, %v1382, %v1384
      %v1387 = vshrl.u32 %v975, 16
      %v1389 = vrot.slane %v1387, 7
      %v1390 = vrot.slane %v1389, 1
      %v1391 = vshll.u32 %v978, 16
      %v1393 = vsel %vm1114, %v1390, %v1391
      %v1394 = vshrl.u32 %v978, 16
      %v1396 = vrot.slane %v1394, 7
      %v1397 = vrot.slane %v1396, 1
      %v1399 = vshll.u32 %v981, 16
      %v1401 = vsel %vm1114, %v1397, %v1399
      %v1402 = vshrl.u32 %v981, 16
      %v1404 = vrot.slane %v1402, 7
      %v1405 = vrot.slane %v1404, 1
      %v1407 = vshll.u32 %v984, 16
      %v1409 = vsel %vm1114, %v1405, %v1407
      %v1410 = vshrl.u32 %v984, 16
      %v1412 = vrot.slane %v1410, 7
      %v1413 = vrot.slane %v1412, 1
      %v1415 = vshll.u32 %v987, 16
      %v1417 = vsel %vm1114, %v1413, %v1415
      %v1418 = vshrl.u32 %v987, 16
      %v1420 = vrot.slane %v1418, 7
      %v1421 = vrot.slane %v1420, 1
      %v1422 = vshll.u32 %v1090, 16
      %v1424 = vsel %vm1114, %v1421, %v1422
      %v1425 = vshrl.u32 %v990, 16
      %v1427 = vrot.slane %v1425, 7
      %v1428 = vrot.slane %v1427, 1
      %v1430 = vshll.u32 %v993, 16
      %v1432 = vsel %vm1114, %v1428, %v1430
      %v1433 = vshrl.u32 %v993, 16
      %v1435 = vrot.slane %v1433, 7
      %v1436 = vrot.slane %v1435, 1
      %v1438 = vshll.u32 %v996, 16
      %v1440 = vsel %vm1114, %v1436, %v1438
      %v1441 = vshrl.u32 %v996, 16
      %v1443 = vrot.slane %v1441, 7
      %v1444 = vrot.slane %v1443, 1
      %v1446 = vshll.u32 %v999, 16
      %v1448 = vsel %vm1114, %v1444, %v1446
      %v1449 = vshrl.u32 %v999, 16
      %v1451 = vrot.slane %v1449, 7
      %v1452 = vrot.slane %v1451, 1
      %v1453 = vshll.u32 %v1002, 16
      %v1455 = vsel %vm1114, %v1452, %v1453
      %v1456 = vshrl.u32 %v1002, 16
      %v1458 = vrot.slane %v1456, 7
      %v1459 = vrot.slane %v1458, 1
      %v1461 = vshll.u32 %v1005, 16
      %v1463 = vsel %vm1114, %v1459, %v1461
      %v1464 = vshrl.u32 %v1005, 16
      %v1466 = vrot.slane %v1464, 7
      %v1467 = vrot.slane %v1466, 1
      %v1469 = vshll.u32 %v1008, 16
      %v1471 = vsel %vm1114, %v1467, %v1469
      %v1472 = vshrl.u32 %v1008, 16
      %v1474 = vrot.slane %v1472, 7
      %v1475 = vrot.slane %v1474, 1
      %v1477 = vshll.u32 %v1011, 16
      %v1479 = vsel %vm1114, %v1475, %v1477
      %v1480 = vshrl.u32 %v1011, 16
      %v1482 = vrot.slane %v1480, 7
      %v1483 = vrot.slane %v1482, 1
      %v1484 = vshll.u32 %v1093, 16
      %v1486 = vsel %vm1114, %v1483, %v1484
      %v1487 = vshrl.u32 %v1014, 16
      %v1489 = vrot.slane %v1487, 7
      %v1490 = vrot.slane %v1489, 1
      %v1492 = vshll.u32 %v1017, 16
      %v1494 = vsel %vm1114, %v1490, %v1492
      %v1495 = vshrl.u32 %v1017, 16
      %v1497 = vrot.slane %v1495, 7
      %v1498 = vrot.slane %v1497, 1
      %v1500 = vshll.u32 %v1020, 16
      %v1502 = vsel %vm1114, %v1498, %v1500
      %v1503 = vshrl.u32 %v1020, 16
      %v1505 = vrot.slane %v1503, 7
      %v1506 = vrot.slane %v1505, 1
      %v1508 = vshll.u32 %v1023, 16
      %v1510 = vsel %vm1114, %v1506, %v1508
      %v1511 = vshrl.u32 %v1023, 16
      %v1513 = vrot.slane %v1511, 7
      %v1514 = vrot.slane %v1513, 1
      %v1515 = vshll.u32 %v1026, 16
      %v1517 = vsel %vm1114, %v1514, %v1515
      %v1518 = vshrl.u32 %v1026, 16
      %v1520 = vrot.slane %v1518, 7
      %v1521 = vrot.slane %v1520, 1
      %v1523 = vshll.u32 %v1029, 16
      %v1525 = vsel %vm1114, %v1521, %v1523
      %v1526 = vshrl.u32 %v1029, 16
      %v1528 = vrot.slane %v1526, 7
      %v1529 = vrot.slane %v1528, 1
      %v1531 = vshll.u32 %v1032, 16
      %v1533 = vsel %vm1114, %v1529, %v1531
      %v1534 = vshrl.u32 %v1032, 16
      %v1536 = vrot.slane %v1534, 7
      %v1537 = vrot.slane %v1536, 1
      %v1539 = vshll.u32 %v1035, 16
      %v1541 = vsel %vm1114, %v1537, %v1539
      %v1542 = vshrl.u32 %v1035, 16
      %v1544 = vrot.slane %v1542, 7
      %v1545 = vrot.slane %v1544, 1
      %v1546 = vshll.u32 %v1096, 16
      %v1548 = vsel %vm1114, %v1545, %v1546
      %v1549 = vshrl.u32 %v1038, 16
      %v1551 = vrot.slane %v1549, 7
      %v1552 = vrot.slane %v1551, 1
      %v1554 = vshll.u32 %v1041, 16
      %v1556 = vsel %vm1114, %v1552, %v1554
      %v1557 = vshrl.u32 %v1041, 16
      %v1559 = vrot.slane %v1557, 7
      %v1560 = vrot.slane %v1559, 1
      %v1562 = vshll.u32 %v1044, 16
      %v1564 = vsel %vm1114, %v1560, %v1562
      %v1565 = vshrl.u32 %v1044, 16
      %v1567 = vrot.slane %v1565, 7
      %v1568 = vrot.slane %v1567, 1
      %v1570 = vshll.u32 %v1047, 16
      %v1572 = vsel %vm1114, %v1568, %v1570
      %v1573 = vshrl.u32 %v1047, 16
      %v1575 = vrot.slane %v1573, 7
      %v1576 = vrot.slane %v1575, 1
      %v1577 = vshll.u32 %v1050, 16
      %v1579 = vsel %vm1114, %v1576, %v1577
      %v1580 = vshrl.u32 %v1050, 16
      %v1582 = vrot.slane %v1580, 7
      %v1583 = vrot.slane %v1582, 1
      %v1585 = vshll.u32 %v1053, 16
      %v1587 = vsel %vm1114, %v1583, %v1585
      %v1588 = vshrl.u32 %v1053, 16
      %v1590 = vrot.slane %v1588, 7
      %v1591 = vrot.slane %v1590, 1
      %v1593 = vshll.u32 %v1056, 16
      %v1595 = vsel %vm1114, %v1591, %v1593
      %v1596 = vshrl.u32 %v1056, 16
      %v1598 = vrot.slane %v1596, 7
      %v1599 = vrot.slane %v1598, 1
      %v1601 = vshll.u32 %v1059, 16
      %v1603 = vsel %vm1114, %v1599, %v1601
      %v1604 = vshrl.u32 %v1059, 16
      %v1606 = vrot.slane %v1604, 7
      %v1607 = vrot.slane %v1606, 1
      %v1608 = vshll.u32 %v1099, 16
      %v1610 = vsel %vm1114, %v1607, %v1608
      %1611 = vst [vmem:[#allocation1] sm:$0xff] %v781
      %1612 = vst [vmem:[#allocation1 + $0x20] sm:$0xff] %v782
      %s1613 = scalar_lea.vmem [#allocation1], 1
      %v1614 = vld [vmem:[%s1613] ss:$4 sm:$0xff]
      %s1615 = scalar_lea.vmem [#allocation1], 2
      %v1616 = vld [vmem:[%s1615] ss:$4 sm:$0xff]
      %s1617 = scalar_lea.vmem [#allocation1], 3
      %v1618 = vld [vmem:[%s1617] ss:$4 sm:$0xff]
      %s1619 = scalar_lea.vmem [#allocation1], 32
      %v1620 = vld [vmem:[%s1619] ss:$4 sm:$0xff]
      %s1621 = scalar_lea.vmem [#allocation1], 33
      %v1622 = vld [vmem:[%s1621] ss:$4 sm:$0xff]
      %s1623 = scalar_lea.vmem [#allocation1], 34
      %v1624 = vld [vmem:[%s1623] ss:$4 sm:$0xff]
      %s1625 = scalar_lea.vmem [#allocation1], 35
      %v1626 = vld [vmem:[%s1625] ss:$4 sm:$0xff]
      %1627 = vst [vmem:[#allocation1] sm:$0xff] %v783
      %v1628 = vld [vmem:[#allocation1] ss:$4 sm:$0xff]
      %1629 = vst [vmem:[#allocation1 + $0x20] sm:$0xff] %v787
      %v1630 = vld [vmem:[%s1621] ss:$4 sm:$0xff]
      %v1631 = vld [vmem:[%s1623] ss:$4 sm:$0xff]
      %v1632 = vld [vmem:[%s1625] ss:$4 sm:$0xff]
      %1633 = vst [vmem:[#allocation1] sm:$0xff] %v788
      %1634 = vst [vmem:[#allocation1 + $0x20] sm:$0xff] %v789
      %v1635 = vld [vmem:[#allocation1] ss:$4 sm:$0xff]
      %v1636 = vld [vmem:[%s1613] ss:$4 sm:$0xff]
      %v1637 = vld [vmem:[%s1615] ss:$4 sm:$0xff]
      %v1638 = vld [vmem:[%s1617] ss:$4 sm:$0xff]
      %v1639 = vld [vmem:[%s1619] ss:$4 sm:$0xff]
      %1640 = vst [vmem:[#allocation1] sm:$0xff] %v793
      %1641 = vst [vmem:[#allocation1 + $0x20] sm:$0xff] %v794
      %v1642 = vld [vmem:[%s1613] ss:$4 sm:$0xff]
      %v1643 = vld [vmem:[%s1615] ss:$4 sm:$0xff]
      %v1644 = vld [vmem:[%s1617] ss:$4 sm:$0xff]
      %v1645 = vld [vmem:[%s1619] ss:$4 sm:$0xff]
      %v1646 = vld [vmem:[%s1621] ss:$4 sm:$0xff]
      %v1647 = vld [vmem:[%s1623] ss:$4 sm:$0xff]
      %v1648 = vld [vmem:[%s1625] ss:$4 sm:$0xff]
      %1649 = vst [vmem:[#allocation1] sm:$0xff] %v795
      %v1650 = vld [vmem:[#allocation1] ss:$4 sm:$0xff]
      %1651 = vst [vmem:[#allocation1 + $0x20] sm:$0xff] %v799
      %v1652 = vld [vmem:[%s1621] ss:$4 sm:$0xff]
      %v1653 = vld [vmem:[%s1623] ss:$4 sm:$0xff]
      %v1654 = vld [vmem:[%s1625] ss:$4 sm:$0xff]
      %1655 = vst [vmem:[#allocation1] sm:$0xff] %v800
      %1656 = vst [vmem:[#allocation1 + $0x20] sm:$0xff] %v801
      %v1657 = vld [vmem:[#allocation1] ss:$4 sm:$0xff]
      %v1658 = vld [vmem:[%s1613] ss:$4 sm:$0xff]
      %v1659 = vld [vmem:[%s1615] ss:$4 sm:$0xff]
      %v1660 = vld [vmem:[%s1617] ss:$4 sm:$0xff]
      %v1661 = vld [vmem:[%s1619] ss:$4 sm:$0xff]
      %1662 = vst [vmem:[#allocation1] sm:$0xff] %v805
      %1663 = vst [vmem:[#allocation1 + $0x20] sm:$0xff] %v806
      %v1664 = vld [vmem:[%s1613] ss:$4 sm:$0xff]
      %v1665 = vld [vmem:[%s1615] ss:$4 sm:$0xff]
      %v1666 = vld [vmem:[%s1617] ss:$4 sm:$0xff]
      %v1667 = vld [vmem:[%s1619] ss:$4 sm:$0xff]
      %v1668 = vld [vmem:[%s1621] ss:$4 sm:$0xff]
      %v1669 = vld [vmem:[%s1623] ss:$4 sm:$0xff]
      %v1670 = vld [vmem:[%s1625] ss:$4 sm:$0xff]
      %1671 = vst [vmem:[#allocation1] sm:$0xff] %v807
      %v1672 = vld [vmem:[#allocation1] ss:$4 sm:$0xff]
      %1673 = vst [vmem:[#allocation1 + $0x20] sm:$0xff] %v811
      %v1674 = vld [vmem:[%s1621] ss:$4 sm:$0xff]
      %v1675 = vld [vmem:[%s1623] ss:$4 sm:$0xff]
      %v1676 = vld [vmem:[%s1625] ss:$4 sm:$0xff]
      %1677 = vst [vmem:[#allocation1] sm:$0xff] %v812
      %1678 = vst [vmem:[#allocation1 + $0x20] sm:$0xff] %v813
      %v1679 = vld [vmem:[#allocation1] ss:$4 sm:$0xff]
      %v1680 = vld [vmem:[%s1613] ss:$4 sm:$0xff]
      %v1681 = vld [vmem:[%s1615] ss:$4 sm:$0xff]
      %v1682 = vld [vmem:[%s1617] ss:$4 sm:$0xff]
      %v1683 = vld [vmem:[%s1619] ss:$4 sm:$0xff]
      %1684 = vst [vmem:[#allocation1] sm:$0xff] %v817
      %1685 = vst [vmem:[#allocation1 + $0x20] sm:$0xff] %v818
      %v1686 = vld [vmem:[%s1613] ss:$4 sm:$0xff]
      %v1687 = vld [vmem:[%s1615] ss:$4 sm:$0xff]
      %v1688 = vld [vmem:[%s1617] ss:$4 sm:$0xff]
      %v1689 = vld [vmem:[%s1619] ss:$4 sm:$0xff]
      %v1690 = vld [vmem:[%s1621] ss:$4 sm:$0xff]
      %v1691 = vld [vmem:[%s1623] ss:$4 sm:$0xff]
      %v1692 = vld [vmem:[%s1625] ss:$4 sm:$0xff]
      %1693 = vst [vmem:[#allocation1] sm:$0xff] %v819
      %v1694 = vld [vmem:[#allocation1] ss:$4 sm:$0xff]
      %1695 = vst [vmem:[#allocation1 + $0x20] sm:$0xff] %v823
      %v1696 = vld [vmem:[%s1621] ss:$4 sm:$0xff]
      %v1697 = vld [vmem:[%s1623] ss:$4 sm:$0xff]
      %v1698 = vld [vmem:[%s1625] ss:$4 sm:$0xff]
      %1699 = vst [vmem:[#allocation1] sm:$0xff] %v824
      %1700 = vst [vmem:[#allocation1 + $0x20] sm:$0xff] %v825
      %v1701 = vld [vmem:[#allocation1] ss:$4 sm:$0xff]
      %v1702 = vld [vmem:[%s1613] ss:$4 sm:$0xff]
      %v1703 = vld [vmem:[%s1615] ss:$4 sm:$0xff]
      %v1704 = vld [vmem:[%s1617] ss:$4 sm:$0xff]
      %v1705 = vld [vmem:[%s1619] ss:$4 sm:$0xff]
      %v1722 = vrot.slane %v784, 3
      %v1723 = vrot.slane %v785, 3
      %v1724 = vrot.slane %v790, 3
      %v1725 = vrot.slane %v791, 3
      %v1726 = vrot.slane %v796, 3
      %v1727 = vrot.slane %v797, 3
      %v1728 = vrot.slane %v802, 3
      %v1729 = vrot.slane %v803, 3
      %v1730 = vrot.slane %v808, 3
      %v1731 = vrot.slane %v809, 3
      %v1732 = vrot.slane %v814, 3
      %v1733 = vrot.slane %v815, 3
      %v1734 = vrot.slane %v820, 3
      %v1735 = vrot.slane %v821, 3
      %v1736 = vrot.slane %v826, 3
      %v1737 = vrot.slane %v827, 3
      %v1740 = vsel %vm864, %v784, %v1722
      %v1741 = vsel %vm868, %v784, %v1722
      %v1743 = vrot.slane %v1741, 1
      %v1744 = vsel %vm872, %v784, %v1722
      %v1746 = vrot.slane %v1744, 2
      %v1747 = vsel %vm876, %v784, %v1722
      %v1749 = vrot.slane %v1747, 3
      %v1752 = vsel %vm864, %v785, %v1723
      %v1753 = vsel %vm868, %v785, %v1723
      %v1755 = vrot.slane %v1753, 1
      %v1756 = vsel %vm872, %v785, %v1723
      %v1758 = vrot.slane %v1756, 2
      %v1759 = vsel %vm876, %v785, %v1723
      %v1761 = vrot.slane %v1759, 3
      %v1764 = vsel %vm864, %v790, %v1724
      %v1765 = vsel %vm868, %v790, %v1724
      %v1767 = vrot.slane %v1765, 1
      %v1768 = vsel %vm872, %v790, %v1724
      %v1770 = vrot.slane %v1768, 2
      %v1771 = vsel %vm876, %v790, %v1724
      %v1773 = vrot.slane %v1771, 3
      %v1776 = vsel %vm864, %v791, %v1725
      %v1777 = vsel %vm868, %v791, %v1725
      %v1779 = vrot.slane %v1777, 1
      %v1780 = vsel %vm872, %v791, %v1725
      %v1782 = vrot.slane %v1780, 2
      %v1783 = vsel %vm876, %v791, %v1725
      %v1785 = vrot.slane %v1783, 3
      %v1788 = vsel %vm864, %v796, %v1726
      %v1789 = vsel %vm868, %v796, %v1726
      %v1791 = vrot.slane %v1789, 1
      %v1792 = vsel %vm872, %v796, %v1726
      %v1794 = vrot.slane %v1792, 2
      %v1795 = vsel %vm876, %v796, %v1726
      %v1797 = vrot.slane %v1795, 3
      %v1800 = vsel %vm864, %v797, %v1727
      %v1801 = vsel %vm868, %v797, %v1727
      %v1803 = vrot.slane %v1801, 1
      %v1804 = vsel %vm872, %v797, %v1727
      %v1806 = vrot.slane %v1804, 2
      %v1807 = vsel %vm876, %v797, %v1727
      %v1809 = vrot.slane %v1807, 3
      %v1812 = vsel %vm864, %v802, %v1728
      %v1813 = vsel %vm868, %v802, %v1728
      %v1815 = vrot.slane %v1813, 1
      %v1816 = vsel %vm872, %v802, %v1728
      %v1818 = vrot.slane %v1816, 2
      %v1819 = vsel %vm876, %v802, %v1728
      %v1821 = vrot.slane %v1819, 3
      %v1824 = vsel %vm864, %v803, %v1729
      %v1825 = vsel %vm868, %v803, %v1729
      %v1827 = vrot.slane %v1825, 1
      %v1828 = vsel %vm872, %v803, %v1729
      %v1830 = vrot.slane %v1828, 2
      %v1831 = vsel %vm876, %v803, %v1729
      %v1833 = vrot.slane %v1831, 3
      %v1836 = vsel %vm864, %v808, %v1730
      %v1837 = vsel %vm868, %v808, %v1730
      %v1839 = vrot.slane %v1837, 1
      %v1840 = vsel %vm872, %v808, %v1730
      %v1842 = vrot.slane %v1840, 2
      %v1843 = vsel %vm876, %v808, %v1730
      %v1845 = vrot.slane %v1843, 3
      %v1848 = vsel %vm864, %v809, %v1731
      %v1849 = vsel %vm868, %v809, %v1731
      %v1851 = vrot.slane %v1849, 1
      %v1852 = vsel %vm872, %v809, %v1731
      %v1854 = vrot.slane %v1852, 2
      %v1855 = vsel %vm876, %v809, %v1731
      %v1857 = vrot.slane %v1855, 3
      %v1860 = vsel %vm864, %v814, %v1732
      %v1861 = vsel %vm868, %v814, %v1732
      %v1863 = vrot.slane %v1861, 1
      %v1864 = vsel %vm872, %v814, %v1732
      %v1866 = vrot.slane %v1864, 2
      %v1867 = vsel %vm876, %v814, %v1732
      %v1869 = vrot.slane %v1867, 3
      %v1872 = vsel %vm864, %v815, %v1733
      %v1873 = vsel %vm868, %v815, %v1733
      %v1875 = vrot.slane %v1873, 1
      %v1876 = vsel %vm872, %v815, %v1733
      %v1878 = vrot.slane %v1876, 2
      %v1879 = vsel %vm876, %v815, %v1733
      %v1881 = vrot.slane %v1879, 3
      %v1884 = vsel %vm864, %v820, %v1734
      %v1885 = vsel %vm868, %v820, %v1734
      %v1887 = vrot.slane %v1885, 1
      %v1888 = vsel %vm872, %v820, %v1734
      %v1890 = vrot.slane %v1888, 2
      %v1891 = vsel %vm876, %v820, %v1734
      %v1893 = vrot.slane %v1891, 3
      %v1896 = vsel %vm864, %v821, %v1735
      %v1897 = vsel %vm868, %v821, %v1735
      %v1899 = vrot.slane %v1897, 1
      %v1900 = vsel %vm872, %v821, %v1735
      %v1902 = vrot.slane %v1900, 2
      %v1903 = vsel %vm876, %v821, %v1735
      %v1905 = vrot.slane %v1903, 3
      %v1908 = vsel %vm864, %v826, %v1736
      %v1909 = vsel %vm868, %v826, %v1736
      %v1911 = vrot.slane %v1909, 1
      %v1912 = vsel %vm872, %v826, %v1736
      %v1914 = vrot.slane %v1912, 2
      %v1915 = vsel %vm876, %v826, %v1736
      %v1917 = vrot.slane %v1915, 3
      %v1920 = vsel %vm864, %v827, %v1737
      %v1921 = vsel %vm868, %v827, %v1737
      %v1923 = vrot.slane %v1921, 1
      %v1924 = vsel %vm872, %v827, %v1737
      %v1926 = vrot.slane %v1924, 2
      %v1927 = vsel %vm876, %v827, %v1737
      %v1929 = vrot.slane %v1927, 3
      %v1938 = vrot.slane %v786, 3
      %v1939 = vrot.slane %v792, 3
      %v1940 = vrot.slane %v798, 3
      %v1941 = vrot.slane %v804, 3
      %v1942 = vrot.slane %v810, 3
      %v1943 = vrot.slane %v816, 3
      %v1944 = vrot.slane %v822, 3
      %v1945 = vrot.slane %v828, 3
      %v1948 = vsel %vm864, %v786, %v1938
      %v1951 = vsel %vm864, %v792, %v1939
      %v1954 = vsel %vm864, %v798, %v1940
      %v1957 = vsel %vm864, %v804, %v1941
      %v1960 = vsel %vm864, %v810, %v1942
      %v1963 = vsel %vm864, %v816, %v1943
      %v1966 = vsel %vm864, %v822, %v1944
      %v1969 = vsel %vm864, %v828, %v1945
      %v1970 = vshrl.u32 %v1740, 16
      %v1972 = vrot.slane %v1970, 7
      %v1973 = vrot.slane %v1972, 1
      %v1975 = vshll.u32 %v1743, 16
      %v1977 = vsel %vm1114, %v1973, %v1975
      %v1978 = vshrl.u32 %v1743, 16
      %v1980 = vrot.slane %v1978, 7
      %v1981 = vrot.slane %v1980, 1
      %v1983 = vshll.u32 %v1746, 16
      %v1985 = vsel %vm1114, %v1981, %v1983
      %v1986 = vshrl.u32 %v1746, 16
      %v1988 = vrot.slane %v1986, 7
      %v1989 = vrot.slane %v1988, 1
      %v1991 = vshll.u32 %v1749, 16
      %v1993 = vsel %vm1114, %v1989, %v1991
      %v1994 = vshrl.u32 %v1749, 16
      %v1996 = vrot.slane %v1994, 7
      %v1997 = vrot.slane %v1996, 1
      %v1998 = vshll.u32 %v1752, 16
      %v2000 = vsel %vm1114, %v1997, %v1998
      %v2001 = vshrl.u32 %v1752, 16
      %v2003 = vrot.slane %v2001, 7
      %v2004 = vrot.slane %v2003, 1
      %v2006 = vshll.u32 %v1755, 16
      %v2008 = vsel %vm1114, %v2004, %v2006
      %v2009 = vshrl.u32 %v1755, 16
      %v2011 = vrot.slane %v2009, 7
      %v2012 = vrot.slane %v2011, 1
      %v2014 = vshll.u32 %v1758, 16
      %v2016 = vsel %vm1114, %v2012, %v2014
      %v2017 = vshrl.u32 %v1758, 16
      %v2019 = vrot.slane %v2017, 7
      %v2020 = vrot.slane %v2019, 1
      %v2022 = vshll.u32 %v1761, 16
      %v2024 = vsel %vm1114, %v2020, %v2022
      %v2025 = vshrl.u32 %v1761, 16
      %v2027 = vrot.slane %v2025, 7
      %v2028 = vrot.slane %v2027, 1
      %v2029 = vshll.u32 %v1948, 16
      %v2031 = vsel %vm1114, %v2028, %v2029
      %v2032 = vshrl.u32 %v1764, 16
      %v2034 = vrot.slane %v2032, 7
      %v2035 = vrot.slane %v2034, 1
      %v2037 = vshll.u32 %v1767, 16
      %v2039 = vsel %vm1114, %v2035, %v2037
      %v2040 = vshrl.u32 %v1767, 16
      %v2042 = vrot.slane %v2040, 7
      %v2043 = vrot.slane %v2042, 1
      %v2045 = vshll.u32 %v1770, 16
      %v2047 = vsel %vm1114, %v2043, %v2045
      %v2048 = vshrl.u32 %v1770, 16
      %v2050 = vrot.slane %v2048, 7
      %v2051 = vrot.slane %v2050, 1
      %v2053 = vshll.u32 %v1773, 16
      %v2055 = vsel %vm1114, %v2051, %v2053
      %v2056 = vshrl.u32 %v1773, 16
      %v2058 = vrot.slane %v2056, 7
      %v2059 = vrot.slane %v2058, 1
      %v2060 = vshll.u32 %v1776, 16
      %v2062 = vsel %vm1114, %v2059, %v2060
      %v2063 = vshrl.u32 %v1776, 16
      %v2065 = vrot.slane %v2063, 7
      %v2066 = vrot.slane %v2065, 1
      %v2068 = vshll.u32 %v1779, 16
      %v2070 = vsel %vm1114, %v2066, %v2068
      %v2071 = vshrl.u32 %v1779, 16
      %v2073 = vrot.slane %v2071, 7
      %v2074 = vrot.slane %v2073, 1
      %v2076 = vshll.u32 %v1782, 16
      %v2078 = vsel %vm1114, %v2074, %v2076
      %v2079 = vshrl.u32 %v1782, 16
      %v2081 = vrot.slane %v2079, 7
      %v2082 = vrot.slane %v2081, 1
      %v2084 = vshll.u32 %v1785, 16
      %v2086 = vsel %vm1114, %v2082, %v2084
      %v2087 = vshrl.u32 %v1785, 16
      %v2089 = vrot.slane %v2087, 7
      %v2090 = vrot.slane %v2089, 1
      %v2091 = vshll.u32 %v1951, 16
      %v2093 = vsel %vm1114, %v2090, %v2091
      %v2094 = vshrl.u32 %v1788, 16
      %v2096 = vrot.slane %v2094, 7
      %v2097 = vrot.slane %v2096, 1
      %v2099 = vshll.u32 %v1791, 16
      %v2101 = vsel %vm1114, %v2097, %v2099
      %v2102 = vshrl.u32 %v1791, 16
      %v2104 = vrot.slane %v2102, 7
      %v2105 = vrot.slane %v2104, 1
      %v2107 = vshll.u32 %v1794, 16
      %v2109 = vsel %vm1114, %v2105, %v2107
      %v2110 = vshrl.u32 %v1794, 16
      %v2112 = vrot.slane %v2110, 7
      %v2113 = vrot.slane %v2112, 1
      %v2115 = vshll.u32 %v1797, 16
      %v2117 = vsel %vm1114, %v2113, %v2115
      %v2118 = vshrl.u32 %v1797, 16
      %v2120 = vrot.slane %v2118, 7
      %v2121 = vrot.slane %v2120, 1
      %v2122 = vshll.u32 %v1800, 16
      %v2124 = vsel %vm1114, %v2121, %v2122
      %v2125 = vshrl.u32 %v1800, 16
      %v2127 = vrot.slane %v2125, 7
      %v2128 = vrot.slane %v2127, 1
      %v2130 = vshll.u32 %v1803, 16
      %v2132 = vsel %vm1114, %v2128, %v2130
      %v2133 = vshrl.u32 %v1803, 16
      %v2135 = vrot.slane %v2133, 7
      %v2136 = vrot.slane %v2135, 1
      %v2138 = vshll.u32 %v1806, 16
      %v2140 = vsel %vm1114, %v2136, %v2138
      %v2141 = vshrl.u32 %v1806, 16
      %v2143 = vrot.slane %v2141, 7
      %v2144 = vrot.slane %v2143, 1
      %v2146 = vshll.u32 %v1809, 16
      %v2148 = vsel %vm1114, %v2144, %v2146
      %v2149 = vshrl.u32 %v1809, 16
      %v2151 = vrot.slane %v2149, 7
      %v2152 = vrot.slane %v2151, 1
      %v2153 = vshll.u32 %v1954, 16
      %v2155 = vsel %vm1114, %v2152, %v2153
      %v2156 = vshrl.u32 %v1812, 16
      %v2158 = vrot.slane %v2156, 7
      %v2159 = vrot.slane %v2158, 1
      %v2161 = vshll.u32 %v1815, 16
      %v2163 = vsel %vm1114, %v2159, %v2161
      %v2164 = vshrl.u32 %v1815, 16
      %v2166 = vrot.slane %v2164, 7
      %v2167 = vrot.slane %v2166, 1
      %v2169 = vshll.u32 %v1818, 16
      %v2171 = vsel %vm1114, %v2167, %v2169
      %v2172 = vshrl.u32 %v1818, 16
      %v2174 = vrot.slane %v2172, 7
      %v2175 = vrot.slane %v2174, 1
      %v2177 = vshll.u32 %v1821, 16
      %v2179 = vsel %vm1114, %v2175, %v2177
      %v2180 = vshrl.u32 %v1821, 16
      %v2182 = vrot.slane %v2180, 7
      %v2183 = vrot.slane %v2182, 1
      %v2184 = vshll.u32 %v1824, 16
      %v2186 = vsel %vm1114, %v2183, %v2184
      %v2187 = vshrl.u32 %v1824, 16
      %v2189 = vrot.slane %v2187, 7
      %v2190 = vrot.slane %v2189, 1
      %v2192 = vshll.u32 %v1827, 16
      %v2194 = vsel %vm1114, %v2190, %v2192
      %v2195 = vshrl.u32 %v1827, 16
      %v2197 = vrot.slane %v2195, 7
      %v2198 = vrot.slane %v2197, 1
      %v2200 = vshll.u32 %v1830, 16
      %v2202 = vsel %vm1114, %v2198, %v2200
      %v2203 = vshrl.u32 %v1830, 16
      %v2205 = vrot.slane %v2203, 7
      %v2206 = vrot.slane %v2205, 1
      %v2208 = vshll.u32 %v1833, 16
      %v2210 = vsel %vm1114, %v2206, %v2208
      %v2211 = vshrl.u32 %v1833, 16
      %v2213 = vrot.slane %v2211, 7
      %v2214 = vrot.slane %v2213, 1
      %v2215 = vshll.u32 %v1957, 16
      %v2217 = vsel %vm1114, %v2214, %v2215
      %v2218 = vshrl.u32 %v1836, 16
      %v2220 = vrot.slane %v2218, 7
      %v2221 = vrot.slane %v2220, 1
      %v2223 = vshll.u32 %v1839, 16
      %v2225 = vsel %vm1114, %v2221, %v2223
      %v2226 = vshrl.u32 %v1839, 16
      %v2228 = vrot.slane %v2226, 7
      %v2229 = vrot.slane %v2228, 1
      %v2231 = vshll.u32 %v1842, 16
      %v2233 = vsel %vm1114, %v2229, %v2231
      %v2234 = vshrl.u32 %v1842, 16
      %v2236 = vrot.slane %v2234, 7
      %v2237 = vrot.slane %v2236, 1
      %v2239 = vshll.u32 %v1845, 16
      %v2241 = vsel %vm1114, %v2237, %v2239
      %v2242 = vshrl.u32 %v1845, 16
      %v2244 = vrot.slane %v2242, 7
      %v2245 = vrot.slane %v2244, 1
      %v2246 = vshll.u32 %v1848, 16
      %v2248 = vsel %vm1114, %v2245, %v2246
      %v2249 = vshrl.u32 %v1848, 16
      %v2251 = vrot.slane %v2249, 7
      %v2252 = vrot.slane %v2251, 1
      %v2254 = vshll.u32 %v1851, 16
      %v2256 = vsel %vm1114, %v2252, %v2254
      %v2257 = vshrl.u32 %v1851, 16
      %v2259 = vrot.slane %v2257, 7
      %v2260 = vrot.slane %v2259, 1
      %v2262 = vshll.u32 %v1854, 16
      %v2264 = vsel %vm1114, %v2260, %v2262
      %v2265 = vshrl.u32 %v1854, 16
      %v2267 = vrot.slane %v2265, 7
      %v2268 = vrot.slane %v2267, 1
      %v2270 = vshll.u32 %v1857, 16
      %v2272 = vsel %vm1114, %v2268, %v2270
      %v2273 = vshrl.u32 %v1857, 16
      %v2275 = vrot.slane %v2273, 7
      %v2276 = vrot.slane %v2275, 1
      %v2277 = vshll.u32 %v1960, 16
      %v2279 = vsel %vm1114, %v2276, %v2277
      %v2280 = vshrl.u32 %v1860, 16
      %v2282 = vrot.slane %v2280, 7
      %v2283 = vrot.slane %v2282, 1
      %v2285 = vshll.u32 %v1863, 16
      %v2287 = vsel %vm1114, %v2283, %v2285
      %v2288 = vshrl.u32 %v1863, 16
      %v2290 = vrot.slane %v2288, 7
      %v2291 = vrot.slane %v2290, 1
      %v2293 = vshll.u32 %v1866, 16
      %v2295 = vsel %vm1114, %v2291, %v2293
      %v2296 = vshrl.u32 %v1866, 16
      %v2298 = vrot.slane %v2296, 7
      %v2299 = vrot.slane %v2298, 1
      %v2301 = vshll.u32 %v1869, 16
      %v2303 = vsel %vm1114, %v2299, %v2301
      %v2304 = vshrl.u32 %v1869, 16
      %v2306 = vrot.slane %v2304, 7
      %v2307 = vrot.slane %v2306, 1
      %v2308 = vshll.u32 %v1872, 16
      %v2310 = vsel %vm1114, %v2307, %v2308
      %v2311 = vshrl.u32 %v1872, 16
      %v2313 = vrot.slane %v2311, 7
      %v2314 = vrot.slane %v2313, 1
      %v2316 = vshll.u32 %v1875, 16
      %v2318 = vsel %vm1114, %v2314, %v2316
      %v2319 = vshrl.u32 %v1875, 16
      %v2321 = vrot.slane %v2319, 7
      %v2322 = vrot.slane %v2321, 1
      %v2324 = vshll.u32 %v1878, 16
      %v2326 = vsel %vm1114, %v2322, %v2324
      %v2327 = vshrl.u32 %v1878, 16
      %v2329 = vrot.slane %v2327, 7
      %v2330 = vrot.slane %v2329, 1
      %v2332 = vshll.u32 %v1881, 16
      %v2334 = vsel %vm1114, %v2330, %v2332
      %v2335 = vshrl.u32 %v1881, 16
      %v2337 = vrot.slane %v2335, 7
      %v2338 = vrot.slane %v2337, 1
      %v2339 = vshll.u32 %v1963, 16
      %v2341 = vsel %vm1114, %v2338, %v2339
      %v2342 = vshrl.u32 %v1884, 16
      %v2344 = vrot.slane %v2342, 7
      %v2345 = vrot.slane %v2344, 1
      %v2347 = vshll.u32 %v1887, 16
      %v2349 = vsel %vm1114, %v2345, %v2347
      %v2350 = vshrl.u32 %v1887, 16
      %v2352 = vrot.slane %v2350, 7
      %v2353 = vrot.slane %v2352, 1
      %v2355 = vshll.u32 %v1890, 16
      %v2357 = vsel %vm1114, %v2353, %v2355
      %v2358 = vshrl.u32 %v1890, 16
      %v2360 = vrot.slane %v2358, 7
      %v2361 = vrot.slane %v2360, 1
      %v2363 = vshll.u32 %v1893, 16
      %v2365 = vsel %vm1114, %v2361, %v2363
      %v2366 = vshrl.u32 %v1893, 16
      %v2368 = vrot.slane %v2366, 7
      %v2369 = vrot.slane %v2368, 1
      %v2370 = vshll.u32 %v1896, 16
      %v2372 = vsel %vm1114, %v2369, %v2370
      %v2373 = vshrl.u32 %v1896, 16
      %v2375 = vrot.slane %v2373, 7
      %v2376 = vrot.slane %v2375, 1
      %v2378 = vshll.u32 %v1899, 16
      %v2380 = vsel %vm1114, %v2376, %v2378
      %v2381 = vshrl.u32 %v1899, 16
      %v2383 = vrot.slane %v2381, 7
      %v2384 = vrot.slane %v2383, 1
      %v2386 = vshll.u32 %v1902, 16
      %v2388 = vsel %vm1114, %v2384, %v2386
      %v2389 = vshrl.u32 %v1902, 16
      %v2391 = vrot.slane %v2389, 7
      %v2392 = vrot.slane %v2391, 1
      %v2394 = vshll.u32 %v1905, 16
      %v2396 = vsel %vm1114, %v2392, %v2394
      %v2397 = vshrl.u32 %v1905, 16
      %v2399 = vrot.slane %v2397, 7
      %v2400 = vrot.slane %v2399, 1
      %v2401 = vshll.u32 %v1966, 16
      %v2403 = vsel %vm1114, %v2400, %v2401
      %v2404 = vshrl.u32 %v1908, 16
      %v2406 = vrot.slane %v2404, 7
      %v2407 = vrot.slane %v2406, 1
      %v2409 = vshll.u32 %v1911, 16
      %v2411 = vsel %vm1114, %v2407, %v2409
      %v2412 = vshrl.u32 %v1911, 16
      %v2414 = vrot.slane %v2412, 7
      %v2415 = vrot.slane %v2414, 1
      %v2417 = vshll.u32 %v1914, 16
      %v2419 = vsel %vm1114, %v2415, %v2417
      %v2420 = vshrl.u32 %v1914, 16
      %v2422 = vrot.slane %v2420, 7
      %v2423 = vrot.slane %v2422, 1
      %v2425 = vshll.u32 %v1917, 16
      %v2427 = vsel %vm1114, %v2423, %v2425
      %v2428 = vshrl.u32 %v1917, 16
      %v2430 = vrot.slane %v2428, 7
      %v2431 = vrot.slane %v2430, 1
      %v2432 = vshll.u32 %v1920, 16
      %v2434 = vsel %vm1114, %v2431, %v2432
      %v2435 = vshrl.u32 %v1920, 16
      %v2437 = vrot.slane %v2435, 7
      %v2438 = vrot.slane %v2437, 1
      %v2440 = vshll.u32 %v1923, 16
      %v2442 = vsel %vm1114, %v2438, %v2440
      %v2443 = vshrl.u32 %v1923, 16
      %v2445 = vrot.slane %v2443, 7
      %v2446 = vrot.slane %v2445, 1
      %v2448 = vshll.u32 %v1926, 16
      %v2450 = vsel %vm1114, %v2446, %v2448
      %v2451 = vshrl.u32 %v1926, 16
      %v2453 = vrot.slane %v2451, 7
      %v2454 = vrot.slane %v2453, 1
      %v2456 = vshll.u32 %v1929, 16
      %v2458 = vsel %vm1114, %v2454, %v2456
      %v2459 = vshrl.u32 %v1929, 16
      %v2461 = vrot.slane %v2459, 7
      %v2462 = vrot.slane %v2461, 1
      %v2463 = vshll.u32 %v1969, 16
      %v2465 = vsel %vm1114, %v2462, %v2463
      %2466 = vst [vmem:[#allocation1] sm:$0xff] %v784
      %2467 = vst [vmem:[#allocation1 + $0x20] sm:$0xff] %v785
      %s2468 = scalar_lea.vmem [#allocation1], 1
      %v2469 = vld [vmem:[%s2468] ss:$4 sm:$0xff]
      %s2470 = scalar_lea.vmem [#allocation1], 2
      %v2471 = vld [vmem:[%s2470] ss:$4 sm:$0xff]
      %s2472 = scalar_lea.vmem [#allocation1], 3
      %v2473 = vld [vmem:[%s2472] ss:$4 sm:$0xff]
      %s2474 = scalar_lea.vmem [#allocation1], 32
      %v2475 = vld [vmem:[%s2474] ss:$4 sm:$0xff]
      %s2476 = scalar_lea.vmem [#allocation1], 33
      %v2477 = vld [vmem:[%s2476] ss:$4 sm:$0xff]
      %s2478 = scalar_lea.vmem [#allocation1], 34
      %v2479 = vld [vmem:[%s2478] ss:$4 sm:$0xff]
      %s2480 = scalar_lea.vmem [#allocation1], 35
      %v2481 = vld [vmem:[%s2480] ss:$4 sm:$0xff]
      %2482 = vst [vmem:[#allocation1] sm:$0xff] %v786
      %v2483 = vld [vmem:[#allocation1] ss:$4 sm:$0xff]
      %2484 = vst [vmem:[#allocation1 + $0x20] sm:$0xff] %v790
      %v2485 = vld [vmem:[%s2476] ss:$4 sm:$0xff]
      %v2486 = vld [vmem:[%s2478] ss:$4 sm:$0xff]
      %v2487 = vld [vmem:[%s2480] ss:$4 sm:$0xff]
      %2488 = vst [vmem:[#allocation1] sm:$0xff] %v791
      %2489 = vst [vmem:[#allocation1 + $0x20] sm:$0xff] %v792
      %v2490 = vld [vmem:[#allocation1] ss:$4 sm:$0xff]
      %v2491 = vld [vmem:[%s2468] ss:$4 sm:$0xff]
      %v2492 = vld [vmem:[%s2470] ss:$4 sm:$0xff]
      %v2493 = vld [vmem:[%s2472] ss:$4 sm:$0xff]
      %v2494 = vld [vmem:[%s2474] ss:$4 sm:$0xff]
      %2495 = vst [vmem:[#allocation1] sm:$0xff] %v796
      %2496 = vst [vmem:[#allocation1 + $0x20] sm:$0xff] %v797
      %v2497 = vld [vmem:[%s2468] ss:$4 sm:$0xff]
      %v2498 = vld [vmem:[%s2470] ss:$4 sm:$0xff]
      %v2499 = vld [vmem:[%s2472] ss:$4 sm:$0xff]
      %v2500 = vld [vmem:[%s2474] ss:$4 sm:$0xff]
      %v2501 = vld [vmem:[%s2476] ss:$4 sm:$0xff]
      %v2502 = vld [vmem:[%s2478] ss:$4 sm:$0xff]
      %v2503 = vld [vmem:[%s2480] ss:$4 sm:$0xff]
      %2504 = vst [vmem:[#allocation1] sm:$0xff] %v798
      %v2505 = vld [vmem:[#allocation1] ss:$4 sm:$0xff]
      %2506 = vst [vmem:[#allocation1 + $0x20] sm:$0xff] %v802
      %v2507 = vld [vmem:[%s2476] ss:$4 sm:$0xff]
      %v2508 = vld [vmem:[%s2478] ss:$4 sm:$0xff]
      %v2509 = vld [vmem:[%s2480] ss:$4 sm:$0xff]
      %2510 = vst [vmem:[#allocation1] sm:$0xff] %v803
      %2511 = vst [vmem:[#allocation1 + $0x20] sm:$0xff] %v804
      %v2512 = vld [vmem:[#allocation1] ss:$4 sm:$0xff]
      %v2513 = vld [vmem:[%s2468] ss:$4 sm:$0xff]
      %v2514 = vld [vmem:[%s2470] ss:$4 sm:$0xff]
      %v2515 = vld [vmem:[%s2472] ss:$4 sm:$0xff]
      %v2516 = vld [vmem:[%s2474] ss:$4 sm:$0xff]
      %2517 = vst [vmem:[#allocation1] sm:$0xff] %v808
      %2518 = vst [vmem:[#allocation1 + $0x20] sm:$0xff] %v809
      %v2519 = vld [vmem:[%s2468] ss:$4 sm:$0xff]
      %v2520 = vld [vmem:[%s2470] ss:$4 sm:$0xff]
      %v2521 = vld [vmem:[%s2472] ss:$4 sm:$0xff]
      %v2522 = vld [vmem:[%s2474] ss:$4 sm:$0xff]
      %v2523 = vld [vmem:[%s2476] ss:$4 sm:$0xff]
      %v2524 = vld [vmem:[%s2478] ss:$4 sm:$0xff]
      %v2525 = vld [vmem:[%s2480] ss:$4 sm:$0xff]
      %2526 = vst [vmem:[#allocation1] sm:$0xff] %v810
      %v2527 = vld [vmem:[#allocation1] ss:$4 sm:$0xff]
      %2528 = vst [vmem:[#allocation1 + $0x20] sm:$0xff] %v814
      %v2529 = vld [vmem:[%s2476] ss:$4 sm:$0xff]
      %v2530 = vld [vmem:[%s2478] ss:$4 sm:$0xff]
      %v2531 = vld [vmem:[%s2480] ss:$4 sm:$0xff]
      %2532 = vst [vmem:[#allocation1] sm:$0xff] %v815
      %2533 = vst [vmem:[#allocation1 + $0x20] sm:$0xff] %v816
      %v2534 = vld [vmem:[#allocation1] ss:$4 sm:$0xff]
      %v2535 = vld [vmem:[%s2468] ss:$4 sm:$0xff]
      %v2536 = vld [vmem:[%s2470] ss:$4 sm:$0xff]
      %v2537 = vld [vmem:[%s2472] ss:$4 sm:$0xff]
      %v2538 = vld [vmem:[%s2474] ss:$4 sm:$0xff]
      %2539 = vst [vmem:[#allocation1] sm:$0xff] %v820
      %2540 = vst [vmem:[#allocation1 + $0x20] sm:$0xff] %v821
      %v2541 = vld [vmem:[%s2468] ss:$4 sm:$0xff]
      %v2542 = vld [vmem:[%s2470] ss:$4 sm:$0xff]
      %v2543 = vld [vmem:[%s2472] ss:$4 sm:$0xff]
      %v2544 = vld [vmem:[%s2474] ss:$4 sm:$0xff]
      %v2545 = vld [vmem:[%s2476] ss:$4 sm:$0xff]
      %v2546 = vld [vmem:[%s2478] ss:$4 sm:$0xff]
      %v2547 = vld [vmem:[%s2480] ss:$4 sm:$0xff]
      %2548 = vst [vmem:[#allocation1] sm:$0xff] %v822
      %v2549 = vld [vmem:[#allocation1] ss:$4 sm:$0xff]
      %2550 = vst [vmem:[#allocation1 + $0x20] sm:$0xff] %v826
      %v2551 = vld [vmem:[%s2476] ss:$4 sm:$0xff]
      %v2552 = vld [vmem:[%s2478] ss:$4 sm:$0xff]
      %v2553 = vld [vmem:[%s2480] ss:$4 sm:$0xff]
      %2554 = vst [vmem:[#allocation1] sm:$0xff] %v827
      %2555 = vst [vmem:[#allocation1 + $0x20] sm:$0xff] %v828
      %v2556 = vld [vmem:[#allocation1] ss:$4 sm:$0xff]
      %v2557 = vld [vmem:[%s2468] ss:$4 sm:$0xff]
      %v2558 = vld [vmem:[%s2470] ss:$4 sm:$0xff]
      %v2559 = vld [vmem:[%s2472] ss:$4 sm:$0xff]
      %v2560 = vld [vmem:[%s2474] ss:$4 sm:$0xff]
      %v2563 = vrot.slane %v829, 3
      %v2564 = vrot.slane %v830, 3
      %v2567 = vsel %vm864, %v829, %v2563
      %v2568 = vsel %vm868, %v829, %v2563
      %v2570 = vrot.slane %v2568, 1
      %v2571 = vsel %vm872, %v829, %v2563
      %v2573 = vrot.slane %v2571, 2
      %v2574 = vsel %vm876, %v829, %v2563
      %v2576 = vrot.slane %v2574, 3
      %v2579 = vsel %vm864, %v830, %v2564
      %v2580 = vsel %vm868, %v830, %v2564
      %v2582 = vrot.slane %v2580, 1
      %v2583 = vsel %vm872, %v830, %v2564
      %v2585 = vrot.slane %v2583, 2
      %v2586 = vsel %vm876, %v830, %v2564
      %v2588 = vrot.slane %v2586, 3
      %v2590 = vrot.slane %v831, 3
      %v2593 = vsel %vm864, %v831, %v2590
      %v2594 = vshrl.u32 %v2567, 16
      %v2596 = vrot.slane %v2594, 7
      %v2597 = vrot.slane %v2596, 1
      %v2599 = vshll.u32 %v2570, 16
      %v2601 = vsel %vm1114, %v2597, %v2599
      %v2602 = vshrl.u32 %v2570, 16
      %v2604 = vrot.slane %v2602, 7
      %v2605 = vrot.slane %v2604, 1
      %v2607 = vshll.u32 %v2573, 16
      %v2609 = vsel %vm1114, %v2605, %v2607
      %v2610 = vshrl.u32 %v2573, 16
      %v2612 = vrot.slane %v2610, 7
      %v2613 = vrot.slane %v2612, 1
      %v2615 = vshll.u32 %v2576, 16
      %v2617 = vsel %vm1114, %v2613, %v2615
      %v2618 = vshrl.u32 %v2576, 16
      %v2620 = vrot.slane %v2618, 7
      %v2621 = vrot.slane %v2620, 1
      %v2622 = vshll.u32 %v2579, 16
      %v2624 = vsel %vm1114, %v2621, %v2622
      %v2625 = vshrl.u32 %v2579, 16
      %v2627 = vrot.slane %v2625, 7
      %v2628 = vrot.slane %v2627, 1
      %v2630 = vshll.u32 %v2582, 16
      %v2632 = vsel %vm1114, %v2628, %v2630
      %v2633 = vshrl.u32 %v2582, 16
      %v2635 = vrot.slane %v2633, 7
      %v2636 = vrot.slane %v2635, 1
      %v2638 = vshll.u32 %v2585, 16
      %v2640 = vsel %vm1114, %v2636, %v2638
      %v2641 = vshrl.u32 %v2585, 16
      %v2643 = vrot.slane %v2641, 7
      %v2644 = vrot.slane %v2643, 1
      %v2646 = vshll.u32 %v2588, 16
      %v2648 = vsel %vm1114, %v2644, %v2646
      %v2649 = vshrl.u32 %v2588, 16
      %v2651 = vrot.slane %v2649, 7
      %v2652 = vrot.slane %v2651, 1
      %v2653 = vshll.u32 %v2593, 16
      %v2655 = vsel %vm1114, %v2652, %v2653
      %2656 = vst [vmem:[#allocation1] sm:$0xff] %v787
      %2657 = vst [vmem:[#allocation1 + $0x20] sm:$0xff] %v788
      %s2658 = scalar_lea.vmem [#allocation1], 1
      %v2659 = vld [vmem:[%s2658] ss:$4 sm:$0xff]
      %s2660 = scalar_lea.vmem [#allocation1], 2
      %v2661 = vld [vmem:[%s2660] ss:$4 sm:$0xff]
      %s2662 = scalar_lea.vmem [#allocation1], 3
      %v2663 = vld [vmem:[%s2662] ss:$4 sm:$0xff]
      %s2664 = scalar_lea.vmem [#allocation1], 32
      %v2665 = vld [vmem:[%s2664] ss:$4 sm:$0xff]
      %s2666 = scalar_lea.vmem [#allocation1], 33
      %v2667 = vld [vmem:[%s2666] ss:$4 sm:$0xff]
      %s2668 = scalar_lea.vmem [#allocation1], 34
      %v2669 = vld [vmem:[%s2668] ss:$4 sm:$0xff]
      %s2670 = scalar_lea.vmem [#allocation1], 35
      %v2671 = vld [vmem:[%s2670] ss:$4 sm:$0xff]
      %2672 = vst [vmem:[#allocation1] sm:$0xff] %v789
      %v2673 = vld [vmem:[#allocation1] ss:$4 sm:$0xff]
      %2674 = vst [vmem:[#allocation1 + $0x20] sm:$0xff] %v793
      %v2675 = vld [vmem:[%s2666] ss:$4 sm:$0xff]
      %v2676 = vld [vmem:[%s2668] ss:$4 sm:$0xff]
      %v2677 = vld [vmem:[%s2670] ss:$4 sm:$0xff]
      %2678 = vst [vmem:[#allocation1] sm:$0xff] %v794
      %2679 = vst [vmem:[#allocation1 + $0x20] sm:$0xff] %v795
      %v2680 = vld [vmem:[#allocation1] ss:$4 sm:$0xff]
      %v2681 = vld [vmem:[%s2658] ss:$4 sm:$0xff]
      %v2682 = vld [vmem:[%s2660] ss:$4 sm:$0xff]
      %v2683 = vld [vmem:[%s2662] ss:$4 sm:$0xff]
      %v2684 = vld [vmem:[%s2664] ss:$4 sm:$0xff]
      %2685 = vst [vmem:[#allocation1] sm:$0xff] %v799
      %2686 = vst [vmem:[#allocation1 + $0x20] sm:$0xff] %v800
      %v2687 = vld [vmem:[%s2658] ss:$4 sm:$0xff]
      %v2688 = vld [vmem:[%s2660] ss:$4 sm:$0xff]
      %v2689 = vld [vmem:[%s2662] ss:$4 sm:$0xff]
      %v2690 = vld [vmem:[%s2664] ss:$4 sm:$0xff]
      %v2691 = vld [vmem:[%s2666] ss:$4 sm:$0xff]
      %v2692 = vld [vmem:[%s2668] ss:$4 sm:$0xff]
      %v2693 = vld [vmem:[%s2670] ss:$4 sm:$0xff]
      %2694 = vst [vmem:[#allocation1] sm:$0xff] %v801
      %v2695 = vld [vmem:[#allocation1] ss:$4 sm:$0xff]
      %2696 = vst [vmem:[#allocation1 + $0x20] sm:$0xff] %v805
      %v2697 = vld [vmem:[%s2666] ss:$4 sm:$0xff]
      %v2698 = vld [vmem:[%s2668] ss:$4 sm:$0xff]
      %v2699 = vld [vmem:[%s2670] ss:$4 sm:$0xff]
      %2700 = vst [vmem:[#allocation1] sm:$0xff] %v806
      %2701 = vst [vmem:[#allocation1 + $0x20] sm:$0xff] %v807
      %v2702 = vld [vmem:[#allocation1] ss:$4 sm:$0xff]
      %v2703 = vld [vmem:[%s2658] ss:$4 sm:$0xff]
      %v2704 = vld [vmem:[%s2660] ss:$4 sm:$0xff]
      %v2705 = vld [vmem:[%s2662] ss:$4 sm:$0xff]
      %v2706 = vld [vmem:[%s2664] ss:$4 sm:$0xff]
      %2707 = vst [vmem:[#allocation1] sm:$0xff] %v811
      %2708 = vst [vmem:[#allocation1 + $0x20] sm:$0xff] %v812
      %v2709 = vld [vmem:[%s2658] ss:$4 sm:$0xff]
      %v2710 = vld [vmem:[%s2660] ss:$4 sm:$0xff]
      %v2711 = vld [vmem:[%s2662] ss:$4 sm:$0xff]
      %v2712 = vld [vmem:[%s2664] ss:$4 sm:$0xff]
      %v2713 = vld [vmem:[%s2666] ss:$4 sm:$0xff]
      %v2714 = vld [vmem:[%s2668] ss:$4 sm:$0xff]
      %v2715 = vld [vmem:[%s2670] ss:$4 sm:$0xff]
      %2716 = vst [vmem:[#allocation1] sm:$0xff] %v813
      %v2717 = vld [vmem:[#allocation1] ss:$4 sm:$0xff]
      %2718 = vst [vmem:[#allocation1 + $0x20] sm:$0xff] %v817
      %v2719 = vld [vmem:[%s2666] ss:$4 sm:$0xff]
      %v2720 = vld [vmem:[%s2668] ss:$4 sm:$0xff]
      %v2721 = vld [vmem:[%s2670] ss:$4 sm:$0xff]
      %2722 = vst [vmem:[#allocation1] sm:$0xff] %v818
      %2723 = vst [vmem:[#allocation1 + $0x20] sm:$0xff] %v819
      %v2724 = vld [vmem:[#allocation1] ss:$4 sm:$0xff]
      %v2725 = vld [vmem:[%s2658] ss:$4 sm:$0xff]
      %v2726 = vld [vmem:[%s2660] ss:$4 sm:$0xff]
      %v2727 = vld [vmem:[%s2662] ss:$4 sm:$0xff]
      %v2728 = vld [vmem:[%s2664] ss:$4 sm:$0xff]
      %2729 = vst [vmem:[#allocation1] sm:$0xff] %v823
      %2730 = vst [vmem:[#allocation1 + $0x20] sm:$0xff] %v824
      %v2731 = vld [vmem:[%s2658] ss:$4 sm:$0xff]
      %v2732 = vld [vmem:[%s2660] ss:$4 sm:$0xff]
      %v2733 = vld [vmem:[%s2662] ss:$4 sm:$0xff]
      %v2734 = vld [vmem:[%s2664] ss:$4 sm:$0xff]
      %v2735 = vld [vmem:[%s2666] ss:$4 sm:$0xff]
      %v2736 = vld [vmem:[%s2668] ss:$4 sm:$0xff]
      %v2737 = vld [vmem:[%s2670] ss:$4 sm:$0xff]
      %2738 = vst [vmem:[#allocation1] sm:$0xff] %v825
      %v2739 = vld [vmem:[#allocation1] ss:$4 sm:$0xff]
      %2740 = vst [vmem:[#allocation1 + $0x20] sm:$0xff] %v829
      %v2741 = vld [vmem:[%s2666] ss:$4 sm:$0xff]
      %v2742 = vld [vmem:[%s2668] ss:$4 sm:$0xff]
      %v2743 = vld [vmem:[%s2670] ss:$4 sm:$0xff]
      %2744 = vst [vmem:[#allocation1] sm:$0xff] %v830
      %2745 = vst [vmem:[#allocation1 + $0x20] sm:$0xff] %v831
      %v2746 = vld [vmem:[#allocation1] ss:$4 sm:$0xff]
      %v2747 = vld [vmem:[%s2658] ss:$4 sm:$0xff]
      %v2748 = vld [vmem:[%s2660] ss:$4 sm:$0xff]
      %v2749 = vld [vmem:[%s2662] ss:$4 sm:$0xff]
      %v2750 = vld [vmem:[%s2664] ss:$4 sm:$0xff]
      %2751 = vst [vmem:[#allocation1] ss:$9 sm:$0xff] %v867
      %v2752 = vld [vmem:[#allocation1] sm:$0xff]
      %2754 = vst [vmem:[#allocation1] ss:$9 sm:$0xff] %v871
      %v2755 = vld [vmem:[#allocation1] sm:$0xff]
      %2757 = vst [vmem:[#allocation1] ss:$9 sm:$0xff] %v875
      %v2758 = vld [vmem:[#allocation1] sm:$0xff]
      %2760 = vst [vmem:[#allocation1] ss:$9 sm:$0xff] %v879
      %v2761 = vld [vmem:[#allocation1] sm:$0xff]
      %2763 = vst [vmem:[#allocation1] ss:$9 sm:$0xff] %v882
      %v2764 = vld [vmem:[#allocation1] sm:$0xff]
      %2766 = vst [vmem:[#allocation1] ss:$9 sm:$0xff] %v885
      %v2767 = vld [vmem:[#allocation1] sm:$0xff]
      %2769 = vst [vmem:[#allocation1] ss:$9 sm:$0xff] %v888
      %v2770 = vld [vmem:[#allocation1] sm:$0xff]
      %2772 = vst [vmem:[#allocation1] ss:$9 sm:$0xff] %v891
      %v2773 = vld [vmem:[#allocation1] sm:$0xff]
      %2775 = vst [vmem:[#allocation1] ss:$9 sm:$0xff] %v894
      %v2776 = vld [vmem:[#allocation1] sm:$0xff]
      %2778 = vst [vmem:[#allocation1] ss:$9 sm:$0xff] %v897
      %v2779 = vld [vmem:[#allocation1] sm:$0xff]
      %2781 = vst [vmem:[#allocation1] ss:$9 sm:$0xff] %v900
      %v2782 = vld [vmem:[#allocation1] sm:$0xff]
      %2784 = vst [vmem:[#allocation1] ss:$9 sm:$0xff] %v903
      %v2785 = vld [vmem:[#allocation1] sm:$0xff]
      %2787 = vst [vmem:[#allocation1] ss:$9 sm:$0xff] %v906
      %v2788 = vld [vmem:[#allocation1] sm:$0xff]
      %2790 = vst [vmem:[#allocation1] ss:$9 sm:$0xff] %v909
      %v2791 = vld [vmem:[#allocation1] sm:$0xff]
      %2793 = vst [vmem:[#allocation1] ss:$9 sm:$0xff] %v912
      %v2794 = vld [vmem:[#allocation1] sm:$0xff]
      %2796 = vst [vmem:[#allocation1] ss:$9 sm:$0xff] %v915
      %v2797 = vld [vmem:[#allocation1] sm:$0xff]
      %2799 = vst [vmem:[#allocation1] ss:$9 sm:$0xff] %v918
      %v2800 = vld [vmem:[#allocation1] sm:$0xff]
      %2802 = vst [vmem:[#allocation1] ss:$9 sm:$0xff] %v921
      %v2803 = vld [vmem:[#allocation1] sm:$0xff]
      %2805 = vst [vmem:[#allocation1] ss:$9 sm:$0xff] %v924
      %v2806 = vld [vmem:[#allocation1] sm:$0xff]
      %2808 = vst [vmem:[#allocation1] ss:$9 sm:$0xff] %v927
      %v2809 = vld [vmem:[#allocation1] sm:$0xff]
      %2811 = vst [vmem:[#allocation1] ss:$9 sm:$0xff] %v930
      %v2812 = vld [vmem:[#allocation1] sm:$0xff]
      %2814 = vst [vmem:[#allocation1] ss:$9 sm:$0xff] %v933
      %v2815 = vld [vmem:[#allocation1] sm:$0xff]
      %2817 = vst [vmem:[#allocation1] ss:$9 sm:$0xff] %v936
      %v2818 = vld [vmem:[#allocation1] sm:$0xff]
      %2820 = vst [vmem:[#allocation1] ss:$9 sm:$0xff] %v939
      %v2821 = vld [vmem:[#allocation1] sm:$0xff]
      %2823 = vst [vmem:[#allocation1] ss:$9 sm:$0xff] %v942
      %v2824 = vld [vmem:[#allocation1] sm:$0xff]
      %2826 = vst [vmem:[#allocation1] ss:$9 sm:$0xff] %v945
      %v2827 = vld [vmem:[#allocation1] sm:$0xff]
      %2829 = vst [vmem:[#allocation1] ss:$9 sm:$0xff] %v948
      %v2830 = vld [vmem:[#allocation1] sm:$0xff]
      %2832 = vst [vmem:[#allocation1] ss:$9 sm:$0xff] %v951
      %v2833 = vld [vmem:[#allocation1] sm:$0xff]
      %2835 = vst [vmem:[#allocation1] ss:$9 sm:$0xff] %v954
      %v2836 = vld [vmem:[#allocation1] sm:$0xff]
      %2838 = vst [vmem:[#allocation1] ss:$9 sm:$0xff] %v957
      %v2839 = vld [vmem:[#allocation1] sm:$0xff]
      %2841 = vst [vmem:[#allocation1] ss:$9 sm:$0xff] %v960
      %v2842 = vld [vmem:[#allocation1] sm:$0xff]
      %2844 = vst [vmem:[#allocation1] ss:$9 sm:$0xff] %v963
      %v2845 = vld [vmem:[#allocation1] sm:$0xff]
      %2847 = vst [vmem:[#allocation1] ss:$9 sm:$0xff] %v966
      %v2848 = vld [vmem:[#allocation1] sm:$0xff]
      %2850 = vst [vmem:[#allocation1] ss:$9 sm:$0xff] %v969
      %v2851 = vld [vmem:[#allocation1] sm:$0xff]
      %2853 = vst [vmem:[#allocation1] ss:$9 sm:$0xff] %v972
      %v2854 = vld [vmem:[#allocation1] sm:$0xff]
      %2856 = vst [vmem:[#allocation1] ss:$9 sm:$0xff] %v975
      %v2857 = vld [vmem:[#allocation1] sm:$0xff]
      %2859 = vst [vmem:[#allocation1] ss:$9 sm:$0xff] %v978
      %v2860 = vld [vmem:[#allocation1] sm:$0xff]
      %2862 = vst [vmem:[#allocation1] ss:$9 sm:$0xff] %v981
      %v2863 = vld [vmem:[#allocation1] sm:$0xff]
      %2865 = vst [vmem:[#allocation1] ss:$9 sm:$0xff] %v984
      %v2866 = vld [vmem:[#allocation1] sm:$0xff]
      %2868 = vst [vmem:[#allocation1] ss:$9 sm:$0xff] %v987
      %v2869 = vld [vmem:[#allocation1] sm:$0xff]
      %2871 = vst [vmem:[#allocation1] ss:$9 sm:$0xff] %v990
      %v2872 = vld [vmem:[#allocation1] sm:$0xff]
      %2874 = vst [vmem:[#allocation1] ss:$9 sm:$0xff] %v993
      %v2875 = vld [vmem:[#allocation1] sm:$0xff]
      %2877 = vst [vmem:[#allocation1] ss:$9 sm:$0xff] %v996
      %v2878 = vld [vmem:[#allocation1] sm:$0xff]
      %2880 = vst [vmem:[#allocation1] ss:$9 sm:$0xff] %v999
      %v2881 = vld [vmem:[#allocation1] sm:$0xff]
      %2883 = vst [vmem:[#allocation1] ss:$9 sm:$0xff] %v1002
      %v2884 = vld [vmem:[#allocation1] sm:$0xff]
      %2886 = vst [vmem:[#allocation1] ss:$9 sm:$0xff] %v1005
      %v2887 = vld [vmem:[#allocation1] sm:$0xff]
      %2889 = vst [vmem:[#allocation1] ss:$9 sm:$0xff] %v1008
      %v2890 = vld [vmem:[#allocation1] sm:$0xff]
      %2892 = vst [vmem:[#allocation1] ss:$9 sm:$0xff] %v1011
      %v2893 = vld [vmem:[#allocation1] sm:$0xff]
      %2895 = vst [vmem:[#allocation1] ss:$9 sm:$0xff] %v1014
      %v2896 = vld [vmem:[#allocation1] sm:$0xff]
      %2898 = vst [vmem:[#allocation1] ss:$9 sm:$0xff] %v1017
      %v2899 = vld [vmem:[#allocation1] sm:$0xff]
      %2901 = vst [vmem:[#allocation1] ss:$9 sm:$0xff] %v1020
      %v2902 = vld [vmem:[#allocation1] sm:$0xff]
      %2904 = vst [vmem:[#allocation1] ss:$9 sm:$0xff] %v1023
      %v2905 = vld [vmem:[#allocation1] sm:$0xff]
      %2907 = vst [vmem:[#allocation1] ss:$9 sm:$0xff] %v1026
      %v2908 = vld [vmem:[#allocation1] sm:$0xff]
      %2910 = vst [vmem:[#allocation1] ss:$9 sm:$0xff] %v1029
      %v2911 = vld [vmem:[#allocation1] sm:$0xff]
      %2913 = vst [vmem:[#allocation1] ss:$9 sm:$0xff] %v1032
      %v2914 = vld [vmem:[#allocation1] sm:$0xff]
      %2916 = vst [vmem:[#allocation1] ss:$9 sm:$0xff] %v1035
      %v2917 = vld [vmem:[#allocation1] sm:$0xff]
      %2919 = vst [vmem:[#allocation1] ss:$9 sm:$0xff] %v1038
      %v2920 = vld [vmem:[#allocation1] sm:$0xff]
      %2922 = vst [vmem:[#allocation1] ss:$9 sm:$0xff] %v1041
      %v2923 = vld [vmem:[#allocation1] sm:$0xff]
      %2925 = vst [vmem:[#allocation1] ss:$9 sm:$0xff] %v1044
      %v2926 = vld [vmem:[#allocation1] sm:$0xff]
      %2928 = vst [vmem:[#allocation1] ss:$9 sm:$0xff] %v1047
      %v2929 = vld [vmem:[#allocation1] sm:$0xff]
      %2931 = vst [vmem:[#allocation1] ss:$9 sm:$0xff] %v1050
      %v2932 = vld [vmem:[#allocation1] sm:$0xff]
      %2934 = vst [vmem:[#allocation1] ss:$9 sm:$0xff] %v1053
      %v2935 = vld [vmem:[#allocation1] sm:$0xff]
      %2937 = vst [vmem:[#allocation1] ss:$9 sm:$0xff] %v1056
      %v2938 = vld [vmem:[#allocation1] sm:$0xff]
      %2940 = vst [vmem:[#allocation1] ss:$9 sm:$0xff] %v1059
      %v2941 = vld [vmem:[#allocation1] sm:$0xff]
      %v2943 = vunpack.c.l.b16 %v2752
      %v2944 = vunpack.c.l.b16 %v2755
      %v2945 = vunpack.c.l.b16 %v2758
      %v2946 = vunpack.c.l.b16 %v2761
      %v2947 = vunpack.c.l.b16 %v2764
      %v2948 = vunpack.c.l.b16 %v2767
      %v2949 = vunpack.c.l.b16 %v2770
      %v2950 = vunpack.c.l.b16 %v2773
      %v2951 = vunpack.c.l.b16 %v2776
      %v2952 = vunpack.c.l.b16 %v2779
      %v2953 = vunpack.c.l.b16 %v2782
      %v2954 = vunpack.c.l.b16 %v2785
      %v2955 = vunpack.c.l.b16 %v2788
      %v2956 = vunpack.c.l.b16 %v2791
      %v2957 = vunpack.c.l.b16 %v2794
      %v2958 = vunpack.c.l.b16 %v2797
      %v2959 = vunpack.c.l.b16 %v2800
      %v2960 = vunpack.c.l.b16 %v2803
      %v2961 = vunpack.c.l.b16 %v2806
      %v2962 = vunpack.c.l.b16 %v2809
      %v2963 = vunpack.c.l.b16 %v2812
      %v2964 = vunpack.c.l.b16 %v2815
      %v2965 = vunpack.c.l.b16 %v2818
      %v2966 = vunpack.c.l.b16 %v2821
      %v2967 = vunpack.c.l.b16 %v2824
      %v2968 = vunpack.c.l.b16 %v2827
      %v2969 = vunpack.c.l.b16 %v2830
      %v2970 = vunpack.c.l.b16 %v2833
      %v2971 = vunpack.c.l.b16 %v2836
      %v2972 = vunpack.c.l.b16 %v2839
      %v2973 = vunpack.c.l.b16 %v2842
      %v2974 = vunpack.c.l.b16 %v2845
      %v2975 = vunpack.c.l.b16 %v2848
      %v2976 = vunpack.c.l.b16 %v2851
      %v2977 = vunpack.c.l.b16 %v2854
      %v2978 = vunpack.c.l.b16 %v2857
      %v2979 = vunpack.c.l.b16 %v2860
      %v2980 = vunpack.c.l.b16 %v2863
      %v2981 = vunpack.c.l.b16 %v2866
      %v2982 = vunpack.c.l.b16 %v2869
      %v2983 = vunpack.c.l.b16 %v2872
      %v2984 = vunpack.c.l.b16 %v2875
      %v2985 = vunpack.c.l.b16 %v2878
      %v2986 = vunpack.c.l.b16 %v2881
      %v2987 = vunpack.c.l.b16 %v2884
      %v2988 = vunpack.c.l.b16 %v2887
      %v2989 = vunpack.c.l.b16 %v2890
      %v2990 = vunpack.c.l.b16 %v2893
      %v2991 = vunpack.c.l.b16 %v2896
      %v2992 = vunpack.c.l.b16 %v2899
      %v2993 = vunpack.c.l.b16 %v2902
      %v2994 = vunpack.c.l.b16 %v2905
      %v2995 = vunpack.c.l.b16 %v2908
      %v2996 = vunpack.c.l.b16 %v2911
      %v2997 = vunpack.c.l.b16 %v2914
      %v2998 = vunpack.c.l.b16 %v2917
      %v2999 = vunpack.c.l.b16 %v2920
      %v3000 = vunpack.c.l.b16 %v2923
      %v3001 = vunpack.c.l.b16 %v2926
      %v3002 = vunpack.c.l.b16 %v2929
      %v3003 = vunpack.c.l.b16 %v2932
      %v3004 = vunpack.c.l.b16 %v2935
      %v3005 = vunpack.c.l.b16 %v2938
      %v3006 = vunpack.c.l.b16 %v2941
      %v3007 = vrot.slane %v2944, 7
      %v3008 = vsel %vm868, %v3007, %v2943
      %v3009 = vrot.slane %v2945, 6
      %v3010 = vsel %vm872, %v3009, %v3008
      %v3011 = vrot.slane %v2946, 5
      %v3012 = vsel %vm876, %v3011, %v3010
      %v3013 = vrot.slane %v2947, 4
      %vm3014 = vcmask 1044484
      %v3015 = vsel %vm3014, %v3013, %v3012
      %v3016 = vrot.slane %v2948, 3
      %vm3017 = vcmask 1045509
      %v3018 = vsel %vm3017, %v3016, %v3015
      %v3019 = vrot.slane %v2949, 2
      %vm3020 = vcmask 1046534
      %v3021 = vsel %vm3020, %v3019, %v3018
      %v3022 = vrot.slane %v2950, 1
      %vm3023 = vcmask 1047559
      %v3024 = vsel %vm3023, %v3022, %v3021
      %v3025 = vrot.slane %v2952, 7
      %v3026 = vsel %vm868, %v3025, %v2951
      %v3027 = vrot.slane %v2953, 6
      %v3028 = vsel %vm872, %v3027, %v3026
      %v3029 = vrot.slane %v2954, 5
      %v3030 = vsel %vm876, %v3029, %v3028
      %v3031 = vrot.slane %v2955, 4
      %v3032 = vsel %vm3014, %v3031, %v3030
      %v3033 = vrot.slane %v2956, 3
      %v3034 = vsel %vm3017, %v3033, %v3032
      %v3035 = vrot.slane %v2957, 2
      %v3036 = vsel %vm3020, %v3035, %v3034
      %v3037 = vrot.slane %v2958, 1
      %v3038 = vsel %vm3023, %v3037, %v3036
      %v3039 = vrot.slane %v2960, 7
      %v3040 = vsel %vm868, %v3039, %v2959
      %v3041 = vrot.slane %v2961, 6
      %v3042 = vsel %vm872, %v3041, %v3040
      %v3043 = vrot.slane %v2962, 5
      %v3044 = vsel %vm876, %v3043, %v3042
      %v3045 = vrot.slane %v2963, 4
      %v3046 = vsel %vm3014, %v3045, %v3044
      %v3047 = vrot.slane %v2964, 3
      %v3048 = vsel %vm3017, %v3047, %v3046
      %v3049 = vrot.slane %v2965, 2
      %v3050 = vsel %vm3020, %v3049, %v3048
      %v3051 = vrot.slane %v2966, 1
      %v3052 = vsel %vm3023, %v3051, %v3050
      %v3053 = vrot.slane %v2968, 7
      %v3054 = vsel %vm868, %v3053, %v2967
      %v3055 = vrot.slane %v2969, 6
      %v3056 = vsel %vm872, %v3055, %v3054
      %v3057 = vrot.slane %v2970, 5
      %v3058 = vsel %vm876, %v3057, %v3056
      %v3059 = vrot.slane %v2971, 4
      %v3060 = vsel %vm3014, %v3059, %v3058
      %v3061 = vrot.slane %v2972, 3
      %v3062 = vsel %vm3017, %v3061, %v3060
      %v3063 = vrot.slane %v2973, 2
      %v3064 = vsel %vm3020, %v3063, %v3062
      %v3065 = vrot.slane %v2974, 1
      %v3066 = vsel %vm3023, %v3065, %v3064
      %v3067 = vrot.slane %v2976, 7
      %v3068 = vsel %vm868, %v3067, %v2975
      %v3069 = vrot.slane %v2977, 6
      %v3070 = vsel %vm872, %v3069, %v3068
      %v3071 = vrot.slane %v2978, 5
      %v3072 = vsel %vm876, %v3071, %v3070
      %v3073 = vrot.slane %v2979, 4
      %v3074 = vsel %vm3014, %v3073, %v3072
      %v3075 = vrot.slane %v2980, 3
      %v3076 = vsel %vm3017, %v3075, %v3074
      %v3077 = vrot.slane %v2981, 2
      %v3078 = vsel %vm3020, %v3077, %v3076
      %v3079 = vrot.slane %v2982, 1
      %v3080 = vsel %vm3023, %v3079, %v3078
      %v3081 = vrot.slane %v2984, 7
      %v3082 = vsel %vm868, %v3081, %v2983
      %v3083 = vrot.slane %v2985, 6
      %v3084 = vsel %vm872, %v3083, %v3082
      %v3085 = vrot.slane %v2986, 5
      %v3086 = vsel %vm876, %v3085, %v3084
      %v3087 = vrot.slane %v2987, 4
      %v3088 = vsel %vm3014, %v3087, %v3086
      %v3089 = vrot.slane %v2988, 3
      %v3090 = vsel %vm3017, %v3089, %v3088
      %v3091 = vrot.slane %v2989, 2
      %v3092 = vsel %vm3020, %v3091, %v3090
      %v3093 = vrot.slane %v2990, 1
      %v3094 = vsel %vm3023, %v3093, %v3092
      %v3095 = vrot.slane %v2992, 7
      %v3096 = vsel %vm868, %v3095, %v2991
      %v3097 = vrot.slane %v2993, 6
      %v3098 = vsel %vm872, %v3097, %v3096
      %v3099 = vrot.slane %v2994, 5
      %v3100 = vsel %vm876, %v3099, %v3098
      %v3101 = vrot.slane %v2995, 4
      %v3102 = vsel %vm3014, %v3101, %v3100
      %v3103 = vrot.slane %v2996, 3
      %v3104 = vsel %vm3017, %v3103, %v3102
      %v3105 = vrot.slane %v2997, 2
      %v3106 = vsel %vm3020, %v3105, %v3104
      %v3107 = vrot.slane %v2998, 1
      %v3108 = vsel %vm3023, %v3107, %v3106
      %v3109 = vrot.slane %v3000, 7
      %v3110 = vsel %vm868, %v3109, %v2999
      %v3111 = vrot.slane %v3001, 6
      %v3112 = vsel %vm872, %v3111, %v3110
      %v3113 = vrot.slane %v3002, 5
      %v3114 = vsel %vm876, %v3113, %v3112
      %v3115 = vrot.slane %v3003, 4
      %v3116 = vsel %vm3014, %v3115, %v3114
      %v3117 = vrot.slane %v3004, 3
      %v3118 = vsel %vm3017, %v3117, %v3116
      %v3119 = vrot.slane %v3005, 2
      %v3120 = vsel %vm3020, %v3119, %v3118
      %v3121 = vrot.slane %v3006, 1
      %v3122 = vsel %vm3023, %v3121, %v3120
      %v3123 = vpack.c.b16 %v3024, %v3024
      %v3124 = vpack.c.b16 %v3038, %v3038
      %v3125 = vpack.c.b16 %v3052, %v3052
      %v3126 = vpack.c.b16 %v3066, %v3066
      %v3127 = vpack.c.b16 %v3080, %v3080
      %v3128 = vpack.c.b16 %v3094, %v3094
      %v3129 = vpack.c.b16 %v3108, %v3108
      %v3130 = vpack.c.b16 %v3122, %v3122
      %3132 = vst [vmem:[#allocation1] ss:$9 sm:$0xff] %v1122
      %v3133 = vld [vmem:[#allocation1] sm:$0xff]
      %3136 = vst [vmem:[#allocation1] ss:$9 sm:$0xff] %v1130
      %v3137 = vld [vmem:[#allocation1] sm:$0xff]
      %3140 = vst [vmem:[#allocation1] ss:$9 sm:$0xff] %v1138
      %v3141 = vld [vmem:[#allocation1] sm:$0xff]
      %3144 = vst [vmem:[#allocation1] ss:$9 sm:$0xff] %v1145
      %v3145 = vld [vmem:[#allocation1] sm:$0xff]
      %3148 = vst [vmem:[#allocation1] ss:$9 sm:$0xff] %v1153
      %v3149 = vld [vmem:[#allocation1] sm:$0xff]
      %3152 = vst [vmem:[#allocation1] ss:$9 sm:$0xff] %v1161
      %v3153 = vld [vmem:[#allocation1] sm:$0xff]
      %3156 = vst [vmem:[#allocation1] ss:$9 sm:$0xff] %v1169
      %v3157 = vld [vmem:[#allocation1] sm:$0xff]
      %3160 = vst [vmem:[#allocation1] ss:$9 sm:$0xff] %v1176
      %v3161 = vld [vmem:[#allocation1] sm:$0xff]
      %3164 = vst [vmem:[#allocation1] ss:$9 sm:$0xff] %v1184
      %v3165 = vld [vmem:[#allocation1] sm:$0xff]
      %3168 = vst [vmem:[#allocation1] ss:$9 sm:$0xff] %v1192
      %v3169 = vld [vmem:[#allocation1] sm:$0xff]
      %3172 = vst [vmem:[#allocation1] ss:$9 sm:$0xff] %v1200
      %v3173 = vld [vmem:[#allocation1] sm:$0xff]
      %3176 = vst [vmem:[#allocation1] ss:$9 sm:$0xff] %v1207
      %v3177 = vld [vmem:[#allocation1] sm:$0xff]
      %3180 = vst [vmem:[#allocation1] ss:$9 sm:$0xff] %v1215
      %v3181 = vld [vmem:[#allocation1] sm:$0xff]
      %3184 = vst [vmem:[#allocation1] ss:$9 sm:$0xff] %v1223
      %v3185 = vld [vmem:[#allocation1] sm:$0xff]
      %3188 = vst [vmem:[#allocation1] ss:$9 sm:$0xff] %v1231
      %v3189 = vld [vmem:[#allocation1] sm:$0xff]
      %3192 = vst [vmem:[#allocation1] ss:$9 sm:$0xff] %v1238
      %v3193 = vld [vmem:[#allocation1] sm:$0xff]
      %3196 = vst [vmem:[#allocation1] ss:$9 sm:$0xff] %v1246
      %v3197 = vld [vmem:[#allocation1] sm:$0xff]
      %3200 = vst [vmem:[#allocation1] ss:$9 sm:$0xff] %v1254
      %v3201 = vld [vmem:[#allocation1] sm:$0xff]
      %3204 = vst [vmem:[#allocation1] ss:$9 sm:$0xff] %v1262
      %v3205 = vld [vmem:[#allocation1] sm:$0xff]
      %3208 = vst [vmem:[#allocation1] ss:$9 sm:$0xff] %v1269
      %v3209 = vld [vmem:[#allocation1] sm:$0xff]
      %3212 = vst [vmem:[#allocation1] ss:$9 sm:$0xff] %v1277
      %v3213 = vld [vmem:[#allocation1] sm:$0xff]
      %3216 = vst [vmem:[#allocation1] ss:$9 sm:$0xff] %v1285
      %v3217 = vld [vmem:[#allocation1] sm:$0xff]
      %3220 = vst [vmem:[#allocation1] ss:$9 sm:$0xff] %v1293
      %v3221 = vld [vmem:[#allocation1] sm:$0xff]
      %3224 = vst [vmem:[#allocation1] ss:$9 sm:$0xff] %v1300
      %v3225 = vld [vmem:[#allocation1] sm:$0xff]
      %3228 = vst [vmem:[#allocation1] ss:$9 sm:$0xff] %v1308
      %v3229 = vld [vmem:[#allocation1] sm:$0xff]
      %3232 = vst [vmem:[#allocation1] ss:$9 sm:$0xff] %v1316
      %v3233 = vld [vmem:[#allocation1] sm:$0xff]
      %3236 = vst [vmem:[#allocation1] ss:$9 sm:$0xff] %v1324
      %v3237 = vld [vmem:[#allocation1] sm:$0xff]
      %3240 = vst [vmem:[#allocation1] ss:$9 sm:$0xff] %v1331
      %v3241 = vld [vmem:[#allocation1] sm:$0xff]
      %3244 = vst [vmem:[#allocation1] ss:$9 sm:$0xff] %v1339
      %v3245 = vld [vmem:[#allocation1] sm:$0xff]
      %3248 = vst [vmem:[#allocation1] ss:$9 sm:$0xff] %v1347
      %v3249 = vld [vmem:[#allocation1] sm:$0xff]
      %3252 = vst [vmem:[#allocation1] ss:$9 sm:$0xff] %v1355
      %v3253 = vld [vmem:[#allocation1] sm:$0xff]
      %3256 = vst [vmem:[#allocation1] ss:$9 sm:$0xff] %v1362
      %v3257 = vld [vmem:[#allocation1] sm:$0xff]
      %3260 = vst [vmem:[#allocation1] ss:$9 sm:$0xff] %v1370
      %v3261 = vld [vmem:[#allocation1] sm:$0xff]
      %3264 = vst [vmem:[#allocation1] ss:$9 sm:$0xff] %v1378
      %v3265 = vld [vmem:[#allocation1] sm:$0xff]
      %3268 = vst [vmem:[#allocation1] ss:$9 sm:$0xff] %v1386
      %v3269 = vld [vmem:[#allocation1] sm:$0xff]
      %3272 = vst [vmem:[#allocation1] ss:$9 sm:$0xff] %v1393
      %v3273 = vld [vmem:[#allocation1] sm:$0xff]
      %3276 = vst [vmem:[#allocation1] ss:$9 sm:$0xff] %v1401
      %v3277 = vld [vmem:[#allocation1] sm:$0xff]
      %3280 = vst [vmem:[#allocation1] ss:$9 sm:$0xff] %v1409
      %v3281 = vld [vmem:[#allocation1] sm:$0xff]
      %3284 = vst [vmem:[#allocation1] ss:$9 sm:$0xff] %v1417
      %v3285 = vld [vmem:[#allocation1] sm:$0xff]
      %3288 = vst [vmem:[#allocation1] ss:$9 sm:$0xff] %v1424
      %v3289 = vld [vmem:[#allocation1] sm:$0xff]
      %3292 = vst [vmem:[#allocation1] ss:$9 sm:$0xff] %v1432
      %v3293 = vld [vmem:[#allocation1] sm:$0xff]
      %3296 = vst [vmem:[#allocation1] ss:$9 sm:$0xff] %v1440
      %v3297 = vld [vmem:[#allocation1] sm:$0xff]
      %3300 = vst [vmem:[#allocation1] ss:$9 sm:$0xff] %v1448
      %v3301 = vld [vmem:[#allocation1] sm:$0xff]
      %3304 = vst [vmem:[#allocation1] ss:$9 sm:$0xff] %v1455
      %v3305 = vld [vmem:[#allocation1] sm:$0xff]
      %3308 = vst [vmem:[#allocation1] ss:$9 sm:$0xff] %v1463
      %v3309 = vld [vmem:[#allocation1] sm:$0xff]
      %3312 = vst [vmem:[#allocation1] ss:$9 sm:$0xff] %v1471
      %v3313 = vld [vmem:[#allocation1] sm:$0xff]
      %3316 = vst [vmem:[#allocation1] ss:$9 sm:$0xff] %v1479
      %v3317 = vld [vmem:[#allocation1] sm:$0xff]
      %3320 = vst [vmem:[#allocation1] ss:$9 sm:$0xff] %v1486
      %v3321 = vld [vmem:[#allocation1] sm:$0xff]
      %3324 = vst [vmem:[#allocation1] ss:$9 sm:$0xff] %v1494
      %v3325 = vld [vmem:[#allocation1] sm:$0xff]
      %3328 = vst [vmem:[#allocation1] ss:$9 sm:$0xff] %v1502
      %v3329 = vld [vmem:[#allocation1] sm:$0xff]
      %3332 = vst [vmem:[#allocation1] ss:$9 sm:$0xff] %v1510
      %v3333 = vld [vmem:[#allocation1] sm:$0xff]
      %3336 = vst [vmem:[#allocation1] ss:$9 sm:$0xff] %v1517
      %v3337 = vld [vmem:[#allocation1] sm:$0xff]
      %3340 = vst [vmem:[#allocation1] ss:$9 sm:$0xff] %v1525
      %v3341 = vld [vmem:[#allocation1] sm:$0xff]
      %3344 = vst [vmem:[#allocation1] ss:$9 sm:$0xff] %v1533
      %v3345 = vld [vmem:[#allocation1] sm:$0xff]
      %3348 = vst [vmem:[#allocation1] ss:$9 sm:$0xff] %v1541
      %v3349 = vld [vmem:[#allocation1] sm:$0xff]
      %3352 = vst [vmem:[#allocation1] ss:$9 sm:$0xff] %v1548
      %v3353 = vld [vmem:[#allocation1] sm:$0xff]
      %3356 = vst [vmem:[#allocation1] ss:$9 sm:$0xff] %v1556
      %v3357 = vld [vmem:[#allocation1] sm:$0xff]
      %3360 = vst [vmem:[#allocation1] ss:$9 sm:$0xff] %v1564
      %v3361 = vld [vmem:[#allocation1] sm:$0xff]
      %3364 = vst [vmem:[#allocation1] ss:$9 sm:$0xff] %v1572
      %v3365 = vld [vmem:[#allocation1] sm:$0xff]
      %3368 = vst [vmem:[#allocation1] ss:$9 sm:$0xff] %v1579
      %v3369 = vld [vmem:[#allocation1] sm:$0xff]
      %3372 = vst [vmem:[#allocation1] ss:$9 sm:$0xff] %v1587
      %v3373 = vld [vmem:[#allocation1] sm:$0xff]
      %3376 = vst [vmem:[#allocation1] ss:$9 sm:$0xff] %v1595
      %v3377 = vld [vmem:[#allocation1] sm:$0xff]
      %3380 = vst [vmem:[#allocation1] ss:$9 sm:$0xff] %v1603
      %v3381 = vld [vmem:[#allocation1] sm:$0xff]
      %3384 = vst [vmem:[#allocation1] ss:$9 sm:$0xff] %v1610
      %v3385 = vld [vmem:[#allocation1] sm:$0xff]
      %v3387 = vunpack.c.l.b16 %v3133
      %v3388 = vunpack.c.l.b16 %v3137
      %v3389 = vunpack.c.l.b16 %v3141
      %v3390 = vunpack.c.l.b16 %v3145
      %v3391 = vunpack.c.l.b16 %v3149
      %v3392 = vunpack.c.l.b16 %v3153
      %v3393 = vunpack.c.l.b16 %v3157
      %v3394 = vunpack.c.l.b16 %v3161
      %v3395 = vunpack.c.l.b16 %v3165
      %v3396 = vunpack.c.l.b16 %v3169
      %v3397 = vunpack.c.l.b16 %v3173
      %v3398 = vunpack.c.l.b16 %v3177
      %v3399 = vunpack.c.l.b16 %v3181
      %v3400 = vunpack.c.l.b16 %v3185
      %v3401 = vunpack.c.l.b16 %v3189
      %v3402 = vunpack.c.l.b16 %v3193
      %v3403 = vunpack.c.l.b16 %v3197
      %v3404 = vunpack.c.l.b16 %v3201
      %v3405 = vunpack.c.l.b16 %v3205
      %v3406 = vunpack.c.l.b16 %v3209
      %v3407 = vunpack.c.l.b16 %v3213
      %v3408 = vunpack.c.l.b16 %v3217
      %v3409 = vunpack.c.l.b16 %v3221
      %v3410 = vunpack.c.l.b16 %v3225
      %v3411 = vunpack.c.l.b16 %v3229
      %v3412 = vunpack.c.l.b16 %v3233
      %v3413 = vunpack.c.l.b16 %v3237
      %v3414 = vunpack.c.l.b16 %v3241
      %v3415 = vunpack.c.l.b16 %v3245
      %v3416 = vunpack.c.l.b16 %v3249
      %v3417 = vunpack.c.l.b16 %v3253
      %v3418 = vunpack.c.l.b16 %v3257
      %v3419 = vunpack.c.l.b16 %v3261
      %v3420 = vunpack.c.l.b16 %v3265
      %v3421 = vunpack.c.l.b16 %v3269
      %v3422 = vunpack.c.l.b16 %v3273
      %v3423 = vunpack.c.l.b16 %v3277
      %v3424 = vunpack.c.l.b16 %v3281
      %v3425 = vunpack.c.l.b16 %v3285
      %v3426 = vunpack.c.l.b16 %v3289
      %v3427 = vunpack.c.l.b16 %v3293
      %v3428 = vunpack.c.l.b16 %v3297
      %v3429 = vunpack.c.l.b16 %v3301
      %v3430 = vunpack.c.l.b16 %v3305
      %v3431 = vunpack.c.l.b16 %v3309
      %v3432 = vunpack.c.l.b16 %v3313
      %v3433 = vunpack.c.l.b16 %v3317
      %v3434 = vunpack.c.l.b16 %v3321
      %v3435 = vunpack.c.l.b16 %v3325
      %v3436 = vunpack.c.l.b16 %v3329
      %v3437 = vunpack.c.l.b16 %v3333
      %v3438 = vunpack.c.l.b16 %v3337
      %v3439 = vunpack.c.l.b16 %v3341
      %v3440 = vunpack.c.l.b16 %v3345
      %v3441 = vunpack.c.l.b16 %v3349
      %v3442 = vunpack.c.l.b16 %v3353
      %v3443 = vunpack.c.l.b16 %v3357
      %v3444 = vunpack.c.l.b16 %v3361
      %v3445 = vunpack.c.l.b16 %v3365
      %v3446 = vunpack.c.l.b16 %v3369
      %v3447 = vunpack.c.l.b16 %v3373
      %v3448 = vunpack.c.l.b16 %v3377
      %v3449 = vunpack.c.l.b16 %v3381
      %v3450 = vunpack.c.l.b16 %v3385
      %v3451 = vrot.slane %v3388, 7
      %v3452 = vsel %vm868, %v3451, %v3387
      %v3453 = vrot.slane %v3389, 6
      %v3454 = vsel %vm872, %v3453, %v3452
      %v3455 = vrot.slane %v3390, 5
      %v3456 = vsel %vm876, %v3455, %v3454
      %v3457 = vrot.slane %v3391, 4
      %v3458 = vsel %vm3014, %v3457, %v3456
      %v3459 = vrot.slane %v3392, 3
      %v3460 = vsel %vm3017, %v3459, %v3458
      %v3461 = vrot.slane %v3393, 2
      %v3462 = vsel %vm3020, %v3461, %v3460
      %v3463 = vrot.slane %v3394, 1
      %v3464 = vsel %vm3023, %v3463, %v3462
      %v3465 = vrot.slane %v3396, 7
      %v3466 = vsel %vm868, %v3465, %v3395
      %v3467 = vrot.slane %v3397, 6
      %v3468 = vsel %vm872, %v3467, %v3466
      %v3469 = vrot.slane %v3398, 5
      %v3470 = vsel %vm876, %v3469, %v3468
      %v3471 = vrot.slane %v3399, 4
      %v3472 = vsel %vm3014, %v3471, %v3470
      %v3473 = vrot.slane %v3400, 3
      %v3474 = vsel %vm3017, %v3473, %v3472
      %v3475 = vrot.slane %v3401, 2
      %v3476 = vsel %vm3020, %v3475, %v3474
      %v3477 = vrot.slane %v3402, 1
      %v3478 = vsel %vm3023, %v3477, %v3476
      %v3479 = vrot.slane %v3404, 7
      %v3480 = vsel %vm868, %v3479, %v3403
      %v3481 = vrot.slane %v3405, 6
      %v3482 = vsel %vm872, %v3481, %v3480
      %v3483 = vrot.slane %v3406, 5
      %v3484 = vsel %vm876, %v3483, %v3482
      %v3485 = vrot.slane %v3407, 4
      %v3486 = vsel %vm3014, %v3485, %v3484
      %v3487 = vrot.slane %v3408, 3
      %v3488 = vsel %vm3017, %v3487, %v3486
      %v3489 = vrot.slane %v3409, 2
      %v3490 = vsel %vm3020, %v3489, %v3488
      %v3491 = vrot.slane %v3410, 1
      %v3492 = vsel %vm3023, %v3491, %v3490
      %v3493 = vrot.slane %v3412, 7
      %v3494 = vsel %vm868, %v3493, %v3411
      %v3495 = vrot.slane %v3413, 6
      %v3496 = vsel %vm872, %v3495, %v3494
      %v3497 = vrot.slane %v3414, 5
      %v3498 = vsel %vm876, %v3497, %v3496
      %v3499 = vrot.slane %v3415, 4
      %v3500 = vsel %vm3014, %v3499, %v3498
      %v3501 = vrot.slane %v3416, 3
      %v3502 = vsel %vm3017, %v3501, %v3500
      %v3503 = vrot.slane %v3417, 2
      %v3504 = vsel %vm3020, %v3503, %v3502
      %v3505 = vrot.slane %v3418, 1
      %v3506 = vsel %vm3023, %v3505, %v3504
      %v3507 = vrot.slane %v3420, 7
      %v3508 = vsel %vm868, %v3507, %v3419
      %v3509 = vrot.slane %v3421, 6
      %v3510 = vsel %vm872, %v3509, %v3508
      %v3511 = vrot.slane %v3422, 5
      %v3512 = vsel %vm876, %v3511, %v3510
      %v3513 = vrot.slane %v3423, 4
      %v3514 = vsel %vm3014, %v3513, %v3512
      %v3515 = vrot.slane %v3424, 3
      %v3516 = vsel %vm3017, %v3515, %v3514
      %v3517 = vrot.slane %v3425, 2
      %v3518 = vsel %vm3020, %v3517, %v3516
      %v3519 = vrot.slane %v3426, 1
      %v3520 = vsel %vm3023, %v3519, %v3518
      %v3521 = vrot.slane %v3428, 7
      %v3522 = vsel %vm868, %v3521, %v3427
      %v3523 = vrot.slane %v3429, 6
      %v3524 = vsel %vm872, %v3523, %v3522
      %v3525 = vrot.slane %v3430, 5
      %v3526 = vsel %vm876, %v3525, %v3524
      %v3527 = vrot.slane %v3431, 4
      %v3528 = vsel %vm3014, %v3527, %v3526
      %v3529 = vrot.slane %v3432, 3
      %v3530 = vsel %vm3017, %v3529, %v3528
      %v3531 = vrot.slane %v3433, 2
      %v3532 = vsel %vm3020, %v3531, %v3530
      %v3533 = vrot.slane %v3434, 1
      %v3534 = vsel %vm3023, %v3533, %v3532
      %v3535 = vrot.slane %v3436, 7
      %v3536 = vsel %vm868, %v3535, %v3435
      %v3537 = vrot.slane %v3437, 6
      %v3538 = vsel %vm872, %v3537, %v3536
      %v3539 = vrot.slane %v3438, 5
      %v3540 = vsel %vm876, %v3539, %v3538
      %v3541 = vrot.slane %v3439, 4
      %v3542 = vsel %vm3014, %v3541, %v3540
      %v3543 = vrot.slane %v3440, 3
      %v3544 = vsel %vm3017, %v3543, %v3542
      %v3545 = vrot.slane %v3441, 2
      %v3546 = vsel %vm3020, %v3545, %v3544
      %v3547 = vrot.slane %v3442, 1
      %v3548 = vsel %vm3023, %v3547, %v3546
      %v3549 = vrot.slane %v3444, 7
      %v3550 = vsel %vm868, %v3549, %v3443
      %v3551 = vrot.slane %v3445, 6
      %v3552 = vsel %vm872, %v3551, %v3550
      %v3553 = vrot.slane %v3446, 5
      %v3554 = vsel %vm876, %v3553, %v3552
      %v3555 = vrot.slane %v3447, 4
      %v3556 = vsel %vm3014, %v3555, %v3554
      %v3557 = vrot.slane %v3448, 3
      %v3558 = vsel %vm3017, %v3557, %v3556
      %v3559 = vrot.slane %v3449, 2
      %v3560 = vsel %vm3020, %v3559, %v3558
      %v3561 = vrot.slane %v3450, 1
      %v3562 = vsel %vm3023, %v3561, %v3560
      %v3563 = vpack.c.b16 %v3464, %v3464
      %v3564 = vpack.c.b16 %v3478, %v3478
      %v3565 = vpack.c.b16 %v3492, %v3492
      %v3566 = vpack.c.b16 %v3506, %v3506
      %v3567 = vpack.c.b16 %v3520, %v3520
      %v3568 = vpack.c.b16 %v3534, %v3534
      %v3569 = vpack.c.b16 %v3548, %v3548
      %v3570 = vpack.c.b16 %v3562, %v3562
      %3571 = vrot.lane.b32.xlu0 %v3563, 4
      %v3572 = vpop.permute.xlu0 %3571
      %3573 = vrot.lane.b32.xlu0 %v3564, 4
      %v3574 = vpop.permute.xlu0 %3573
      %3575 = vrot.lane.b32.xlu0 %v3565, 4
      %v3576 = vpop.permute.xlu0 %3575
      %3577 = vrot.lane.b32.xlu0 %v3566, 4
      %v3578 = vpop.permute.xlu0 %3577
      %3579 = vrot.lane.b32.xlu0 %v3567, 4
      %v3580 = vpop.permute.xlu0 %3579
      %3581 = vrot.lane.b32.xlu0 %v3568, 4
      %v3582 = vpop.permute.xlu0 %3581
      %3583 = vrot.lane.b32.xlu0 %v3569, 4
      %v3584 = vpop.permute.xlu0 %3583
      %3585 = vrot.lane.b32.xlu0 %v3570, 4
      %v3586 = vpop.permute.xlu0 %3585
      %3587 = vst [vmem:[#allocation1] ss:$9 sm:$0xff] %v1614
      %v3588 = vld [vmem:[#allocation1] sm:$0xff]
      %3590 = vst [vmem:[#allocation1] ss:$9 sm:$0xff] %v1616
      %v3591 = vld [vmem:[#allocation1] sm:$0xff]
      %3593 = vst [vmem:[#allocation1] ss:$9 sm:$0xff] %v1618
      %v3594 = vld [vmem:[#allocation1] sm:$0xff]
      %3596 = vst [vmem:[#allocation1] ss:$9 sm:$0xff] %v1620
      %v3597 = vld [vmem:[#allocation1] sm:$0xff]
      %3599 = vst [vmem:[#allocation1] ss:$9 sm:$0xff] %v1622
      %v3600 = vld [vmem:[#allocation1] sm:$0xff]
      %3602 = vst [vmem:[#allocation1] ss:$9 sm:$0xff] %v1624
      %v3603 = vld [vmem:[#allocation1] sm:$0xff]
      %3605 = vst [vmem:[#allocation1] ss:$9 sm:$0xff] %v1626
      %v3606 = vld [vmem:[#allocation1] sm:$0xff]
      %3608 = vst [vmem:[#allocation1] ss:$9 sm:$0xff] %v1628
      %v3609 = vld [vmem:[#allocation1] sm:$0xff]
      %3611 = vst [vmem:[#allocation1] ss:$9 sm:$0xff] %v1630
      %v3612 = vld [vmem:[#allocation1] sm:$0xff]
      %3614 = vst [vmem:[#allocation1] ss:$9 sm:$0xff] %v1631
      %v3615 = vld [vmem:[#allocation1] sm:$0xff]
      %3617 = vst [vmem:[#allocation1] ss:$9 sm:$0xff] %v1632
      %v3618 = vld [vmem:[#allocation1] sm:$0xff]
      %3620 = vst [vmem:[#allocation1] ss:$9 sm:$0xff] %v1635
      %v3621 = vld [vmem:[#allocation1] sm:$0xff]
      %3623 = vst [vmem:[#allocation1] ss:$9 sm:$0xff] %v1636
      %v3624 = vld [vmem:[#allocation1] sm:$0xff]
      %3626 = vst [vmem:[#allocation1] ss:$9 sm:$0xff] %v1637
      %v3627 = vld [vmem:[#allocation1] sm:$0xff]
      %3629 = vst [vmem:[#allocation1] ss:$9 sm:$0xff] %v1638
      %v3630 = vld [vmem:[#allocation1] sm:$0xff]
      %3632 = vst [vmem:[#allocation1] ss:$9 sm:$0xff] %v1639
      %v3633 = vld [vmem:[#allocation1] sm:$0xff]
      %3635 = vst [vmem:[#allocation1] ss:$9 sm:$0xff] %v1642
      %v3636 = vld [vmem:[#allocation1] sm:$0xff]
      %3638 = vst [vmem:[#allocation1] ss:$9 sm:$0xff] %v1643
      %v3639 = vld [vmem:[#allocation1] sm:$0xff]
      %3641 = vst [vmem:[#allocation1] ss:$9 sm:$0xff] %v1644
      %v3642 = vld [vmem:[#allocation1] sm:$0xff]
      %3644 = vst [vmem:[#allocation1] ss:$9 sm:$0xff] %v1645
      %v3645 = vld [vmem:[#allocation1] sm:$0xff]
      %3647 = vst [vmem:[#allocation1] ss:$9 sm:$0xff] %v1646
      %v3648 = vld [vmem:[#allocation1] sm:$0xff]
      %3650 = vst [vmem:[#allocation1] ss:$9 sm:$0xff] %v1647
      %v3651 = vld [vmem:[#allocation1] sm:$0xff]
      %3653 = vst [vmem:[#allocation1] ss:$9 sm:$0xff] %v1648
      %v3654 = vld [vmem:[#allocation1] sm:$0xff]
      %3656 = vst [vmem:[#allocation1] ss:$9 sm:$0xff] %v1650
      %v3657 = vld [vmem:[#allocation1] sm:$0xff]
      %3659 = vst [vmem:[#allocation1] ss:$9 sm:$0xff] %v1652
      %v3660 = vld [vmem:[#allocation1] sm:$0xff]
      %3662 = vst [vmem:[#allocation1] ss:$9 sm:$0xff] %v1653
      %v3663 = vld [vmem:[#allocation1] sm:$0xff]
      %3665 = vst [vmem:[#allocation1] ss:$9 sm:$0xff] %v1654
      %v3666 = vld [vmem:[#allocation1] sm:$0xff]
      %3668 = vst [vmem:[#allocation1] ss:$9 sm:$0xff] %v1657
      %v3669 = vld [vmem:[#allocation1] sm:$0xff]
      %3671 = vst [vmem:[#allocation1] ss:$9 sm:$0xff] %v1658
      %v3672 = vld [vmem:[#allocation1] sm:$0xff]
      %3674 = vst [vmem:[#allocation1] ss:$9 sm:$0xff] %v1659
      %v3675 = vld [vmem:[#allocation1] sm:$0xff]
      %3677 = vst [vmem:[#allocation1] ss:$9 sm:$0xff] %v1660
      %v3678 = vld [vmem:[#allocation1] sm:$0xff]
      %3680 = vst [vmem:[#allocation1] ss:$9 sm:$0xff] %v1661
      %v3681 = vld [vmem:[#allocation1] sm:$0xff]
      %3683 = vst [vmem:[#allocation1] ss:$9 sm:$0xff] %v1664
      %v3684 = vld [vmem:[#allocation1] sm:$0xff]
      %3686 = vst [vmem:[#allocation1] ss:$9 sm:$0xff] %v1665
      %v3687 = vld [vmem:[#allocation1] sm:$0xff]
      %3689 = vst [vmem:[#allocation1] ss:$9 sm:$0xff] %v1666
      %v3690 = vld [vmem:[#allocation1] sm:$0xff]
      %3692 = vst [vmem:[#allocation1] ss:$9 sm:$0xff] %v1667
      %v3693 = vld [vmem:[#allocation1] sm:$0xff]
      %3695 = vst [vmem:[#allocation1] ss:$9 sm:$0xff] %v1668
      %v3696 = vld [vmem:[#allocation1] sm:$0xff]
      %3698 = vst [vmem:[#allocation1] ss:$9 sm:$0xff] %v1669
      %v3699 = vld [vmem:[#allocation1] sm:$0xff]
      %3701 = vst [vmem:[#allocation1] ss:$9 sm:$0xff] %v1670
      %v3702 = vld [vmem:[#allocation1] sm:$0xff]
      %3704 = vst [vmem:[#allocation1] ss:$9 sm:$0xff] %v1672
      %v3705 = vld [vmem:[#allocation1] sm:$0xff]
      %3707 = vst [vmem:[#allocation1] ss:$9 sm:$0xff] %v1674
      %v3708 = vld [vmem:[#allocation1] sm:$0xff]
      %3710 = vst [vmem:[#allocation1] ss:$9 sm:$0xff] %v1675
      %v3711 = vld [vmem:[#allocation1] sm:$0xff]
      %3713 = vst [vmem:[#allocation1] ss:$9 sm:$0xff] %v1676
      %v3714 = vld [vmem:[#allocation1] sm:$0xff]
      %3716 = vst [vmem:[#allocation1] ss:$9 sm:$0xff] %v1679
      %v3717 = vld [vmem:[#allocation1] sm:$0xff]
      %3719 = vst [vmem:[#allocation1] ss:$9 sm:$0xff] %v1680
      %v3720 = vld [vmem:[#allocation1] sm:$0xff]
      %3722 = vst [vmem:[#allocation1] ss:$9 sm:$0xff] %v1681
      %v3723 = vld [vmem:[#allocation1] sm:$0xff]
      %3725 = vst [vmem:[#allocation1] ss:$9 sm:$0xff] %v1682
      %v3726 = vld [vmem:[#allocation1] sm:$0xff]
      %3728 = vst [vmem:[#allocation1] ss:$9 sm:$0xff] %v1683
      %v3729 = vld [vmem:[#allocation1] sm:$0xff]
      %3731 = vst [vmem:[#allocation1] ss:$9 sm:$0xff] %v1686
      %v3732 = vld [vmem:[#allocation1] sm:$0xff]
      %3734 = vst [vmem:[#allocation1] ss:$9 sm:$0xff] %v1687
      %v3735 = vld [vmem:[#allocation1] sm:$0xff]
      %3737 = vst [vmem:[#allocation1] ss:$9 sm:$0xff] %v1688
      %v3738 = vld [vmem:[#allocation1] sm:$0xff]
      %3740 = vst [vmem:[#allocation1] ss:$9 sm:$0xff] %v1689
      %v3741 = vld [vmem:[#allocation1] sm:$0xff]
      %3743 = vst [vmem:[#allocation1] ss:$9 sm:$0xff] %v1690
      %v3744 = vld [vmem:[#allocation1] sm:$0xff]
      %3746 = vst [vmem:[#allocation1] ss:$9 sm:$0xff] %v1691
      %v3747 = vld [vmem:[#allocation1] sm:$0xff]
      %3749 = vst [vmem:[#allocation1] ss:$9 sm:$0xff] %v1692
      %v3750 = vld [vmem:[#allocation1] sm:$0xff]
      %3752 = vst [vmem:[#allocation1] ss:$9 sm:$0xff] %v1694
      %v3753 = vld [vmem:[#allocation1] sm:$0xff]
      %3755 = vst [vmem:[#allocation1] ss:$9 sm:$0xff] %v1696
      %v3756 = vld [vmem:[#allocation1] sm:$0xff]
      %3758 = vst [vmem:[#allocation1] ss:$9 sm:$0xff] %v1697
      %v3759 = vld [vmem:[#allocation1] sm:$0xff]
      %3761 = vst [vmem:[#allocation1] ss:$9 sm:$0xff] %v1698
      %v3762 = vld [vmem:[#allocation1] sm:$0xff]
      %3764 = vst [vmem:[#allocation1] ss:$9 sm:$0xff] %v1701
      %v3765 = vld [vmem:[#allocation1] sm:$0xff]
      %3767 = vst [vmem:[#allocation1] ss:$9 sm:$0xff] %v1702
      %v3768 = vld [vmem:[#allocation1] sm:$0xff]
      %3770 = vst [vmem:[#allocation1] ss:$9 sm:$0xff] %v1703
      %v3771 = vld [vmem:[#allocation1] sm:$0xff]
      %3773 = vst [vmem:[#allocation1] ss:$9 sm:$0xff] %v1704
      %v3774 = vld [vmem:[#allocation1] sm:$0xff]
      %3776 = vst [vmem:[#allocation1] ss:$9 sm:$0xff] %v1705
      %v3777 = vld [vmem:[#allocation1] sm:$0xff]
      %v3779 = vunpack.c.l.b16 %v3588
      %v3780 = vunpack.c.l.b16 %v3591
      %v3781 = vunpack.c.l.b16 %v3594
      %v3782 = vunpack.c.l.b16 %v3597
      %v3783 = vunpack.c.l.b16 %v3600
      %v3784 = vunpack.c.l.b16 %v3603
      %v3785 = vunpack.c.l.b16 %v3606
      %v3786 = vunpack.c.l.b16 %v3609
      %v3787 = vunpack.c.l.b16 %v3612
      %v3788 = vunpack.c.l.b16 %v3615
      %v3789 = vunpack.c.l.b16 %v3618
      %v3790 = vunpack.c.l.b16 %v3621
      %v3791 = vunpack.c.l.b16 %v3624
      %v3792 = vunpack.c.l.b16 %v3627
      %v3793 = vunpack.c.l.b16 %v3630
      %v3794 = vunpack.c.l.b16 %v3633
      %v3795 = vunpack.c.l.b16 %v3636
      %v3796 = vunpack.c.l.b16 %v3639
      %v3797 = vunpack.c.l.b16 %v3642
      %v3798 = vunpack.c.l.b16 %v3645
      %v3799 = vunpack.c.l.b16 %v3648
      %v3800 = vunpack.c.l.b16 %v3651
      %v3801 = vunpack.c.l.b16 %v3654
      %v3802 = vunpack.c.l.b16 %v3657
      %v3803 = vunpack.c.l.b16 %v3660
      %v3804 = vunpack.c.l.b16 %v3663
      %v3805 = vunpack.c.l.b16 %v3666
      %v3806 = vunpack.c.l.b16 %v3669
      %v3807 = vunpack.c.l.b16 %v3672
      %v3808 = vunpack.c.l.b16 %v3675
      %v3809 = vunpack.c.l.b16 %v3678
      %v3810 = vunpack.c.l.b16 %v3681
      %v3811 = vunpack.c.l.b16 %v3684
      %v3812 = vunpack.c.l.b16 %v3687
      %v3813 = vunpack.c.l.b16 %v3690
      %v3814 = vunpack.c.l.b16 %v3693
      %v3815 = vunpack.c.l.b16 %v3696
      %v3816 = vunpack.c.l.b16 %v3699
      %v3817 = vunpack.c.l.b16 %v3702
      %v3818 = vunpack.c.l.b16 %v3705
      %v3819 = vunpack.c.l.b16 %v3708
      %v3820 = vunpack.c.l.b16 %v3711
      %v3821 = vunpack.c.l.b16 %v3714
      %v3822 = vunpack.c.l.b16 %v3717
      %v3823 = vunpack.c.l.b16 %v3720
      %v3824 = vunpack.c.l.b16 %v3723
      %v3825 = vunpack.c.l.b16 %v3726
      %v3826 = vunpack.c.l.b16 %v3729
      %v3827 = vunpack.c.l.b16 %v3732
      %v3828 = vunpack.c.l.b16 %v3735
      %v3829 = vunpack.c.l.b16 %v3738
      %v3830 = vunpack.c.l.b16 %v3741
      %v3831 = vunpack.c.l.b16 %v3744
      %v3832 = vunpack.c.l.b16 %v3747
      %v3833 = vunpack.c.l.b16 %v3750
      %v3834 = vunpack.c.l.b16 %v3753
      %v3835 = vunpack.c.l.b16 %v3756
      %v3836 = vunpack.c.l.b16 %v3759
      %v3837 = vunpack.c.l.b16 %v3762
      %v3838 = vunpack.c.l.b16 %v3765
      %v3839 = vunpack.c.l.b16 %v3768
      %v3840 = vunpack.c.l.b16 %v3771
      %v3841 = vunpack.c.l.b16 %v3774
      %v3842 = vunpack.c.l.b16 %v3777
      %v3843 = vrot.slane %v3780, 7
      %v3844 = vsel %vm868, %v3843, %v3779
      %v3845 = vrot.slane %v3781, 6
      %v3846 = vsel %vm872, %v3845, %v3844
      %v3847 = vrot.slane %v3782, 5
      %v3848 = vsel %vm876, %v3847, %v3846
      %v3849 = vrot.slane %v3783, 4
      %v3850 = vsel %vm3014, %v3849, %v3848
      %v3851 = vrot.slane %v3784, 3
      %v3852 = vsel %vm3017, %v3851, %v3850
      %v3853 = vrot.slane %v3785, 2
      %v3854 = vsel %vm3020, %v3853, %v3852
      %v3855 = vrot.slane %v3786, 1
      %v3856 = vsel %vm3023, %v3855, %v3854
      %v3857 = vrot.slane %v3788, 7
      %v3858 = vsel %vm868, %v3857, %v3787
      %v3859 = vrot.slane %v3789, 6
      %v3860 = vsel %vm872, %v3859, %v3858
      %v3861 = vrot.slane %v3790, 5
      %v3862 = vsel %vm876, %v3861, %v3860
      %v3863 = vrot.slane %v3791, 4
      %v3864 = vsel %vm3014, %v3863, %v3862
      %v3865 = vrot.slane %v3792, 3
      %v3866 = vsel %vm3017, %v3865, %v3864
      %v3867 = vrot.slane %v3793, 2
      %v3868 = vsel %vm3020, %v3867, %v3866
      %v3869 = vrot.slane %v3794, 1
      %v3870 = vsel %vm3023, %v3869, %v3868
      %v3871 = vrot.slane %v3796, 7
      %v3872 = vsel %vm868, %v3871, %v3795
      %v3873 = vrot.slane %v3797, 6
      %v3874 = vsel %vm872, %v3873, %v3872
      %v3875 = vrot.slane %v3798, 5
      %v3876 = vsel %vm876, %v3875, %v3874
      %v3877 = vrot.slane %v3799, 4
      %v3878 = vsel %vm3014, %v3877, %v3876
      %v3879 = vrot.slane %v3800, 3
      %v3880 = vsel %vm3017, %v3879, %v3878
      %v3881 = vrot.slane %v3801, 2
      %v3882 = vsel %vm3020, %v3881, %v3880
      %v3883 = vrot.slane %v3802, 1
      %v3884 = vsel %vm3023, %v3883, %v3882
      %v3885 = vrot.slane %v3804, 7
      %v3886 = vsel %vm868, %v3885, %v3803
      %v3887 = vrot.slane %v3805, 6
      %v3888 = vsel %vm872, %v3887, %v3886
      %v3889 = vrot.slane %v3806, 5
      %v3890 = vsel %vm876, %v3889, %v3888
      %v3891 = vrot.slane %v3807, 4
      %v3892 = vsel %vm3014, %v3891, %v3890
      %v3893 = vrot.slane %v3808, 3
      %v3894 = vsel %vm3017, %v3893, %v3892
      %v3895 = vrot.slane %v3809, 2
      %v3896 = vsel %vm3020, %v3895, %v3894
      %v3897 = vrot.slane %v3810, 1
      %v3898 = vsel %vm3023, %v3897, %v3896
      %v3899 = vrot.slane %v3812, 7
      %v3900 = vsel %vm868, %v3899, %v3811
      %v3901 = vrot.slane %v3813, 6
      %v3902 = vsel %vm872, %v3901, %v3900
      %v3903 = vrot.slane %v3814, 5
      %v3904 = vsel %vm876, %v3903, %v3902
      %v3905 = vrot.slane %v3815, 4
      %v3906 = vsel %vm3014, %v3905, %v3904
      %v3907 = vrot.slane %v3816, 3
      %v3908 = vsel %vm3017, %v3907, %v3906
      %v3909 = vrot.slane %v3817, 2
      %v3910 = vsel %vm3020, %v3909, %v3908
      %v3911 = vrot.slane %v3818, 1
      %v3912 = vsel %vm3023, %v3911, %v3910
      %v3913 = vrot.slane %v3820, 7
      %v3914 = vsel %vm868, %v3913, %v3819
      %v3915 = vrot.slane %v3821, 6
      %v3916 = vsel %vm872, %v3915, %v3914
      %v3917 = vrot.slane %v3822, 5
      %v3918 = vsel %vm876, %v3917, %v3916
      %v3919 = vrot.slane %v3823, 4
      %v3920 = vsel %vm3014, %v3919, %v3918
      %v3921 = vrot.slane %v3824, 3
      %v3922 = vsel %vm3017, %v3921, %v3920
      %v3923 = vrot.slane %v3825, 2
      %v3924 = vsel %vm3020, %v3923, %v3922
      %v3925 = vrot.slane %v3826, 1
      %v3926 = vsel %vm3023, %v3925, %v3924
      %v3927 = vrot.slane %v3828, 7
      %v3928 = vsel %vm868, %v3927, %v3827
      %v3929 = vrot.slane %v3829, 6
      %v3930 = vsel %vm872, %v3929, %v3928
      %v3931 = vrot.slane %v3830, 5
      %v3932 = vsel %vm876, %v3931, %v3930
      %v3933 = vrot.slane %v3831, 4
      %v3934 = vsel %vm3014, %v3933, %v3932
      %v3935 = vrot.slane %v3832, 3
      %v3936 = vsel %vm3017, %v3935, %v3934
      %v3937 = vrot.slane %v3833, 2
      %v3938 = vsel %vm3020, %v3937, %v3936
      %v3939 = vrot.slane %v3834, 1
      %v3940 = vsel %vm3023, %v3939, %v3938
      %v3941 = vrot.slane %v3836, 7
      %v3942 = vsel %vm868, %v3941, %v3835
      %v3943 = vrot.slane %v3837, 6
      %v3944 = vsel %vm872, %v3943, %v3942
      %v3945 = vrot.slane %v3838, 5
      %v3946 = vsel %vm876, %v3945, %v3944
      %v3947 = vrot.slane %v3839, 4
      %v3948 = vsel %vm3014, %v3947, %v3946
      %v3949 = vrot.slane %v3840, 3
      %v3950 = vsel %vm3017, %v3949, %v3948
      %v3951 = vrot.slane %v3841, 2
      %v3952 = vsel %vm3020, %v3951, %v3950
      %v3953 = vrot.slane %v3842, 1
      %v3954 = vsel %vm3023, %v3953, %v3952
      %v3955 = vpack.c.b16 %v3856, %v3856
      %v3956 = vpack.c.b16 %v3870, %v3870
      %v3957 = vpack.c.b16 %v3884, %v3884
      %v3958 = vpack.c.b16 %v3898, %v3898
      %v3959 = vpack.c.b16 %v3912, %v3912
      %v3960 = vpack.c.b16 %v3926, %v3926
      %v3961 = vpack.c.b16 %v3940, %v3940
      %v3962 = vpack.c.b16 %v3954, %v3954
      %3963 = vrot.lane.b32.xlu0 %v3955, 8
      %v3964 = vpop.permute.xlu0 %3963
      %3965 = vrot.lane.b32.xlu0 %v3956, 8
      %v3966 = vpop.permute.xlu0 %3965
      %3967 = vrot.lane.b32.xlu0 %v3957, 8
      %v3968 = vpop.permute.xlu0 %3967
      %3969 = vrot.lane.b32.xlu0 %v3958, 8
      %v3970 = vpop.permute.xlu0 %3969
      %3971 = vrot.lane.b32.xlu0 %v3959, 8
      %v3972 = vpop.permute.xlu0 %3971
      %3973 = vrot.lane.b32.xlu0 %v3960, 8
      %v3974 = vpop.permute.xlu0 %3973
      %3975 = vrot.lane.b32.xlu0 %v3961, 8
      %v3976 = vpop.permute.xlu0 %3975
      %3977 = vrot.lane.b32.xlu0 %v3962, 8
      %v3978 = vpop.permute.xlu0 %3977
      %3979 = vst [vmem:[#allocation1] ss:$9 sm:$0xff] %v1740
      %v3980 = vld [vmem:[#allocation1] sm:$0xff]
      %3982 = vst [vmem:[#allocation1] ss:$9 sm:$0xff] %v1743
      %v3983 = vld [vmem:[#allocation1] sm:$0xff]
      %3985 = vst [vmem:[#allocation1] ss:$9 sm:$0xff] %v1746
      %v3986 = vld [vmem:[#allocation1] sm:$0xff]
      %3988 = vst [vmem:[#allocation1] ss:$9 sm:$0xff] %v1749
      %v3989 = vld [vmem:[#allocation1] sm:$0xff]
      %3991 = vst [vmem:[#allocation1] ss:$9 sm:$0xff] %v1752
      %v3992 = vld [vmem:[#allocation1] sm:$0xff]
      %3994 = vst [vmem:[#allocation1] ss:$9 sm:$0xff] %v1755
      %v3995 = vld [vmem:[#allocation1] sm:$0xff]
      %3997 = vst [vmem:[#allocation1] ss:$9 sm:$0xff] %v1758
      %v3998 = vld [vmem:[#allocation1] sm:$0xff]
      %4000 = vst [vmem:[#allocation1] ss:$9 sm:$0xff] %v1761
      %v4001 = vld [vmem:[#allocation1] sm:$0xff]
      %4003 = vst [vmem:[#allocation1] ss:$9 sm:$0xff] %v1764
      %v4004 = vld [vmem:[#allocation1] sm:$0xff]
      %4006 = vst [vmem:[#allocation1] ss:$9 sm:$0xff] %v1767
      %v4007 = vld [vmem:[#allocation1] sm:$0xff]
      %4009 = vst [vmem:[#allocation1] ss:$9 sm:$0xff] %v1770
      %v4010 = vld [vmem:[#allocation1] sm:$0xff]
      %4012 = vst [vmem:[#allocation1] ss:$9 sm:$0xff] %v1773
      %v4013 = vld [vmem:[#allocation1] sm:$0xff]
      %4015 = vst [vmem:[#allocation1] ss:$9 sm:$0xff] %v1776
      %v4016 = vld [vmem:[#allocation1] sm:$0xff]
      %4018 = vst [vmem:[#allocation1] ss:$9 sm:$0xff] %v1779
      %v4019 = vld [vmem:[#allocation1] sm:$0xff]
      %4021 = vst [vmem:[#allocation1] ss:$9 sm:$0xff] %v1782
      %v4022 = vld [vmem:[#allocation1] sm:$0xff]
      %4024 = vst [vmem:[#allocation1] ss:$9 sm:$0xff] %v1785
      %v4025 = vld [vmem:[#allocation1] sm:$0xff]
      %4027 = vst [vmem:[#allocation1] ss:$9 sm:$0xff] %v1788
      %v4028 = vld [vmem:[#allocation1] sm:$0xff]
      %4030 = vst [vmem:[#allocation1] ss:$9 sm:$0xff] %v1791
      %v4031 = vld [vmem:[#allocation1] sm:$0xff]
      %4033 = vst [vmem:[#allocation1] ss:$9 sm:$0xff] %v1794
      %v4034 = vld [vmem:[#allocation1] sm:$0xff]
      %4036 = vst [vmem:[#allocation1] ss:$9 sm:$0xff] %v1797
      %v4037 = vld [vmem:[#allocation1] sm:$0xff]
      %4039 = vst [vmem:[#allocation1] ss:$9 sm:$0xff] %v1800
      %v4040 = vld [vmem:[#allocation1] sm:$0xff]
      %4042 = vst [vmem:[#allocation1] ss:$9 sm:$0xff] %v1803
      %v4043 = vld [vmem:[#allocation1] sm:$0xff]
      %4045 = vst [vmem:[#allocation1] ss:$9 sm:$0xff] %v1806
      %v4046 = vld [vmem:[#allocation1] sm:$0xff]
      %4048 = vst [vmem:[#allocation1] ss:$9 sm:$0xff] %v1809
      %v4049 = vld [vmem:[#allocation1] sm:$0xff]
      %4051 = vst [vmem:[#allocation1] ss:$9 sm:$0xff] %v1812
      %v4052 = vld [vmem:[#allocation1] sm:$0xff]
      %4054 = vst [vmem:[#allocation1] ss:$9 sm:$0xff] %v1815
      %v4055 = vld [vmem:[#allocation1] sm:$0xff]
      %4057 = vst [vmem:[#allocation1] ss:$9 sm:$0xff] %v1818
      %v4058 = vld [vmem:[#allocation1] sm:$0xff]
      %4060 = vst [vmem:[#allocation1] ss:$9 sm:$0xff] %v1821
      %v4061 = vld [vmem:[#allocation1] sm:$0xff]
      %4063 = vst [vmem:[#allocation1] ss:$9 sm:$0xff] %v1824
      %v4064 = vld [vmem:[#allocation1] sm:$0xff]
      %4066 = vst [vmem:[#allocation1] ss:$9 sm:$0xff] %v1827
      %v4067 = vld [vmem:[#allocation1] sm:$0xff]
      %4069 = vst [vmem:[#allocation1] ss:$9 sm:$0xff] %v1830
      %v4070 = vld [vmem:[#allocation1] sm:$0xff]
      %4072 = vst [vmem:[#allocation1] ss:$9 sm:$0xff] %v1833
      %v4073 = vld [vmem:[#allocation1] sm:$0xff]
      %4075 = vst [vmem:[#allocation1] ss:$9 sm:$0xff] %v1836
      %v4076 = vld [vmem:[#allocation1] sm:$0xff]
      %4078 = vst [vmem:[#allocation1] ss:$9 sm:$0xff] %v1839
      %v4079 = vld [vmem:[#allocation1] sm:$0xff]
      %4081 = vst [vmem:[#allocation1] ss:$9 sm:$0xff] %v1842
      %v4082 = vld [vmem:[#allocation1] sm:$0xff]
      %4084 = vst [vmem:[#allocation1] ss:$9 sm:$0xff] %v1845
      %v4085 = vld [vmem:[#allocation1] sm:$0xff]
      %4087 = vst [vmem:[#allocation1] ss:$9 sm:$0xff] %v1848
      %v4088 = vld [vmem:[#allocation1] sm:$0xff]
      %4090 = vst [vmem:[#allocation1] ss:$9 sm:$0xff] %v1851
      %v4091 = vld [vmem:[#allocation1] sm:$0xff]
      %4093 = vst [vmem:[#allocation1] ss:$9 sm:$0xff] %v1854
      %v4094 = vld [vmem:[#allocation1] sm:$0xff]
      %4096 = vst [vmem:[#allocation1] ss:$9 sm:$0xff] %v1857
      %v4097 = vld [vmem:[#allocation1] sm:$0xff]
      %4099 = vst [vmem:[#allocation1] ss:$9 sm:$0xff] %v1860
      %v4100 = vld [vmem:[#allocation1] sm:$0xff]
      %4102 = vst [vmem:[#allocation1] ss:$9 sm:$0xff] %v1863
      %v4103 = vld [vmem:[#allocation1] sm:$0xff]
      %4105 = vst [vmem:[#allocation1] ss:$9 sm:$0xff] %v1866
      %v4106 = vld [vmem:[#allocation1] sm:$0xff]
      %4108 = vst [vmem:[#allocation1] ss:$9 sm:$0xff] %v1869
      %v4109 = vld [vmem:[#allocation1] sm:$0xff]
      %4111 = vst [vmem:[#allocation1] ss:$9 sm:$0xff] %v1872
      %v4112 = vld [vmem:[#allocation1] sm:$0xff]
      %4114 = vst [vmem:[#allocation1] ss:$9 sm:$0xff] %v1875
      %v4115 = vld [vmem:[#allocation1] sm:$0xff]
      %4117 = vst [vmem:[#allocation1] ss:$9 sm:$0xff] %v1878
      %v4118 = vld [vmem:[#allocation1] sm:$0xff]
      %4120 = vst [vmem:[#allocation1] ss:$9 sm:$0xff] %v1881
      %v4121 = vld [vmem:[#allocation1] sm:$0xff]
      %4123 = vst [vmem:[#allocation1] ss:$9 sm:$0xff] %v1884
      %v4124 = vld [vmem:[#allocation1] sm:$0xff]
      %4126 = vst [vmem:[#allocation1] ss:$9 sm:$0xff] %v1887
      %v4127 = vld [vmem:[#allocation1] sm:$0xff]
      %4129 = vst [vmem:[#allocation1] ss:$9 sm:$0xff] %v1890
      %v4130 = vld [vmem:[#allocation1] sm:$0xff]
      %4132 = vst [vmem:[#allocation1] ss:$9 sm:$0xff] %v1893
      %v4133 = vld [vmem:[#allocation1] sm:$0xff]
      %4135 = vst [vmem:[#allocation1] ss:$9 sm:$0xff] %v1896
      %v4136 = vld [vmem:[#allocation1] sm:$0xff]
      %4138 = vst [vmem:[#allocation1] ss:$9 sm:$0xff] %v1899
      %v4139 = vld [vmem:[#allocation1] sm:$0xff]
      %4141 = vst [vmem:[#allocation1] ss:$9 sm:$0xff] %v1902
      %v4142 = vld [vmem:[#allocation1] sm:$0xff]
      %4144 = vst [vmem:[#allocation1] ss:$9 sm:$0xff] %v1905
      %v4145 = vld [vmem:[#allocation1] sm:$0xff]
      %4147 = vst [vmem:[#allocation1] ss:$9 sm:$0xff] %v1908
      %v4148 = vld [vmem:[#allocation1] sm:$0xff]
      %4150 = vst [vmem:[#allocation1] ss:$9 sm:$0xff] %v1911
      %v4151 = vld [vmem:[#allocation1] sm:$0xff]
      %4153 = vst [vmem:[#allocation1] ss:$9 sm:$0xff] %v1914
      %v4154 = vld [vmem:[#allocation1] sm:$0xff]
      %4156 = vst [vmem:[#allocation1] ss:$9 sm:$0xff] %v1917
      %v4157 = vld [vmem:[#allocation1] sm:$0xff]
      %4159 = vst [vmem:[#allocation1] ss:$9 sm:$0xff] %v1920
      %v4160 = vld [vmem:[#allocation1] sm:$0xff]
      %4162 = vst [vmem:[#allocation1] ss:$9 sm:$0xff] %v1923
      %v4163 = vld [vmem:[#allocation1] sm:$0xff]
      %4165 = vst [vmem:[#allocation1] ss:$9 sm:$0xff] %v1926
      %v4166 = vld [vmem:[#allocation1] sm:$0xff]
      %4168 = vst [vmem:[#allocation1] ss:$9 sm:$0xff] %v1929
      %v4169 = vld [vmem:[#allocation1] sm:$0xff]
      %v4171 = vunpack.c.l.b16 %v3980
      %v4172 = vunpack.c.l.b16 %v3983
      %v4173 = vunpack.c.l.b16 %v3986
      %v4174 = vunpack.c.l.b16 %v3989
      %v4175 = vunpack.c.l.b16 %v3992
      %v4176 = vunpack.c.l.b16 %v3995
      %v4177 = vunpack.c.l.b16 %v3998
      %v4178 = vunpack.c.l.b16 %v4001
      %v4179 = vunpack.c.l.b16 %v4004
      %v4180 = vunpack.c.l.b16 %v4007
      %v4181 = vunpack.c.l.b16 %v4010
      %v4182 = vunpack.c.l.b16 %v4013
      %v4183 = vunpack.c.l.b16 %v4016
      %v4184 = vunpack.c.l.b16 %v4019
      %v4185 = vunpack.c.l.b16 %v4022
      %v4186 = vunpack.c.l.b16 %v4025
      %v4187 = vunpack.c.l.b16 %v4028
      %v4188 = vunpack.c.l.b16 %v4031
      %v4189 = vunpack.c.l.b16 %v4034
      %v4190 = vunpack.c.l.b16 %v4037
      %v4191 = vunpack.c.l.b16 %v4040
      %v4192 = vunpack.c.l.b16 %v4043
      %v4193 = vunpack.c.l.b16 %v4046
      %v4194 = vunpack.c.l.b16 %v4049
      %v4195 = vunpack.c.l.b16 %v4052
      %v4196 = vunpack.c.l.b16 %v4055
      %v4197 = vunpack.c.l.b16 %v4058
      %v4198 = vunpack.c.l.b16 %v4061
      %v4199 = vunpack.c.l.b16 %v4064
      %v4200 = vunpack.c.l.b16 %v4067
      %v4201 = vunpack.c.l.b16 %v4070
      %v4202 = vunpack.c.l.b16 %v4073
      %v4203 = vunpack.c.l.b16 %v4076
      %v4204 = vunpack.c.l.b16 %v4079
      %v4205 = vunpack.c.l.b16 %v4082
      %v4206 = vunpack.c.l.b16 %v4085
      %v4207 = vunpack.c.l.b16 %v4088
      %v4208 = vunpack.c.l.b16 %v4091
      %v4209 = vunpack.c.l.b16 %v4094
      %v4210 = vunpack.c.l.b16 %v4097
      %v4211 = vunpack.c.l.b16 %v4100
      %v4212 = vunpack.c.l.b16 %v4103
      %v4213 = vunpack.c.l.b16 %v4106
      %v4214 = vunpack.c.l.b16 %v4109
      %v4215 = vunpack.c.l.b16 %v4112
      %v4216 = vunpack.c.l.b16 %v4115
      %v4217 = vunpack.c.l.b16 %v4118
      %v4218 = vunpack.c.l.b16 %v4121
      %v4219 = vunpack.c.l.b16 %v4124
      %v4220 = vunpack.c.l.b16 %v4127
      %v4221 = vunpack.c.l.b16 %v4130
      %v4222 = vunpack.c.l.b16 %v4133
      %v4223 = vunpack.c.l.b16 %v4136
      %v4224 = vunpack.c.l.b16 %v4139
      %v4225 = vunpack.c.l.b16 %v4142
      %v4226 = vunpack.c.l.b16 %v4145
      %v4227 = vunpack.c.l.b16 %v4148
      %v4228 = vunpack.c.l.b16 %v4151
      %v4229 = vunpack.c.l.b16 %v4154
      %v4230 = vunpack.c.l.b16 %v4157
      %v4231 = vunpack.c.l.b16 %v4160
      %v4232 = vunpack.c.l.b16 %v4163
      %v4233 = vunpack.c.l.b16 %v4166
      %v4234 = vunpack.c.l.b16 %v4169
      %v4235 = vrot.slane %v4172, 7
      %v4236 = vsel %vm868, %v4235, %v4171
      %v4237 = vrot.slane %v4173, 6
      %v4238 = vsel %vm872, %v4237, %v4236
      %v4239 = vrot.slane %v4174, 5
      %v4240 = vsel %vm876, %v4239, %v4238
      %v4241 = vrot.slane %v4175, 4
      %v4242 = vsel %vm3014, %v4241, %v4240
      %v4243 = vrot.slane %v4176, 3
      %v4244 = vsel %vm3017, %v4243, %v4242
      %v4245 = vrot.slane %v4177, 2
      %v4246 = vsel %vm3020, %v4245, %v4244
      %v4247 = vrot.slane %v4178, 1
      %v4248 = vsel %vm3023, %v4247, %v4246
      %v4249 = vrot.slane %v4180, 7
      %v4250 = vsel %vm868, %v4249, %v4179
      %v4251 = vrot.slane %v4181, 6
      %v4252 = vsel %vm872, %v4251, %v4250
      %v4253 = vrot.slane %v4182, 5
      %v4254 = vsel %vm876, %v4253, %v4252
      %v4255 = vrot.slane %v4183, 4
      %v4256 = vsel %vm3014, %v4255, %v4254
      %v4257 = vrot.slane %v4184, 3
      %v4258 = vsel %vm3017, %v4257, %v4256
      %v4259 = vrot.slane %v4185, 2
      %v4260 = vsel %vm3020, %v4259, %v4258
      %v4261 = vrot.slane %v4186, 1
      %v4262 = vsel %vm3023, %v4261, %v4260
      %v4263 = vrot.slane %v4188, 7
      %v4264 = vsel %vm868, %v4263, %v4187
      %v4265 = vrot.slane %v4189, 6
      %v4266 = vsel %vm872, %v4265, %v4264
      %v4267 = vrot.slane %v4190, 5
      %v4268 = vsel %vm876, %v4267, %v4266
      %v4269 = vrot.slane %v4191, 4
      %v4270 = vsel %vm3014, %v4269, %v4268
      %v4271 = vrot.slane %v4192, 3
      %v4272 = vsel %vm3017, %v4271, %v4270
      %v4273 = vrot.slane %v4193, 2
      %v4274 = vsel %vm3020, %v4273, %v4272
      %v4275 = vrot.slane %v4194, 1
      %v4276 = vsel %vm3023, %v4275, %v4274
      %v4277 = vrot.slane %v4196, 7
      %v4278 = vsel %vm868, %v4277, %v4195
      %v4279 = vrot.slane %v4197, 6
      %v4280 = vsel %vm872, %v4279, %v4278
      %v4281 = vrot.slane %v4198, 5
      %v4282 = vsel %vm876, %v4281, %v4280
      %v4283 = vrot.slane %v4199, 4
      %v4284 = vsel %vm3014, %v4283, %v4282
      %v4285 = vrot.slane %v4200, 3
      %v4286 = vsel %vm3017, %v4285, %v4284
      %v4287 = vrot.slane %v4201, 2
      %v4288 = vsel %vm3020, %v4287, %v4286
      %v4289 = vrot.slane %v4202, 1
      %v4290 = vsel %vm3023, %v4289, %v4288
      %v4291 = vrot.slane %v4204, 7
      %v4292 = vsel %vm868, %v4291, %v4203
      %v4293 = vrot.slane %v4205, 6
      %v4294 = vsel %vm872, %v4293, %v4292
      %v4295 = vrot.slane %v4206, 5
      %v4296 = vsel %vm876, %v4295, %v4294
      %v4297 = vrot.slane %v4207, 4
      %v4298 = vsel %vm3014, %v4297, %v4296
      %v4299 = vrot.slane %v4208, 3
      %v4300 = vsel %vm3017, %v4299, %v4298
      %v4301 = vrot.slane %v4209, 2
      %v4302 = vsel %vm3020, %v4301, %v4300
      %v4303 = vrot.slane %v4210, 1
      %v4304 = vsel %vm3023, %v4303, %v4302
      %v4305 = vrot.slane %v4212, 7
      %v4306 = vsel %vm868, %v4305, %v4211
      %v4307 = vrot.slane %v4213, 6
      %v4308 = vsel %vm872, %v4307, %v4306
      %v4309 = vrot.slane %v4214, 5
      %v4310 = vsel %vm876, %v4309, %v4308
      %v4311 = vrot.slane %v4215, 4
      %v4312 = vsel %vm3014, %v4311, %v4310
      %v4313 = vrot.slane %v4216, 3
      %v4314 = vsel %vm3017, %v4313, %v4312
      %v4315 = vrot.slane %v4217, 2
      %v4316 = vsel %vm3020, %v4315, %v4314
      %v4317 = vrot.slane %v4218, 1
      %v4318 = vsel %vm3023, %v4317, %v4316
      %v4319 = vrot.slane %v4220, 7
      %v4320 = vsel %vm868, %v4319, %v4219
      %v4321 = vrot.slane %v4221, 6
      %v4322 = vsel %vm872, %v4321, %v4320
      %v4323 = vrot.slane %v4222, 5
      %v4324 = vsel %vm876, %v4323, %v4322
      %v4325 = vrot.slane %v4223, 4
      %v4326 = vsel %vm3014, %v4325, %v4324
      %v4327 = vrot.slane %v4224, 3
      %v4328 = vsel %vm3017, %v4327, %v4326
      %v4329 = vrot.slane %v4225, 2
      %v4330 = vsel %vm3020, %v4329, %v4328
      %v4331 = vrot.slane %v4226, 1
      %v4332 = vsel %vm3023, %v4331, %v4330
      %v4333 = vrot.slane %v4228, 7
      %v4334 = vsel %vm868, %v4333, %v4227
      %v4335 = vrot.slane %v4229, 6
      %v4336 = vsel %vm872, %v4335, %v4334
      %v4337 = vrot.slane %v4230, 5
      %v4338 = vsel %vm876, %v4337, %v4336
      %v4339 = vrot.slane %v4231, 4
      %v4340 = vsel %vm3014, %v4339, %v4338
      %v4341 = vrot.slane %v4232, 3
      %v4342 = vsel %vm3017, %v4341, %v4340
      %v4343 = vrot.slane %v4233, 2
      %v4344 = vsel %vm3020, %v4343, %v4342
      %v4345 = vrot.slane %v4234, 1
      %v4346 = vsel %vm3023, %v4345, %v4344
      %v4347 = vpack.c.b16 %v4248, %v4248
      %v4348 = vpack.c.b16 %v4262, %v4262
      %v4349 = vpack.c.b16 %v4276, %v4276
      %v4350 = vpack.c.b16 %v4290, %v4290
      %v4351 = vpack.c.b16 %v4304, %v4304
      %v4352 = vpack.c.b16 %v4318, %v4318
      %v4353 = vpack.c.b16 %v4332, %v4332
      %v4354 = vpack.c.b16 %v4346, %v4346
      %4355 = vrot.lane.b32.xlu0 %v4347, 12
      %v4356 = vpop.permute.xlu0 %4355
      %4357 = vrot.lane.b32.xlu0 %v4348, 12
      %v4358 = vpop.permute.xlu0 %4357
      %4359 = vrot.lane.b32.xlu0 %v4349, 12
      %v4360 = vpop.permute.xlu0 %4359
      %4361 = vrot.lane.b32.xlu0 %v4350, 12
      %v4362 = vpop.permute.xlu0 %4361
      %4363 = vrot.lane.b32.xlu0 %v4351, 12
      %v4364 = vpop.permute.xlu0 %4363
      %4365 = vrot.lane.b32.xlu0 %v4352, 12
      %v4366 = vpop.permute.xlu0 %4365
      %4367 = vrot.lane.b32.xlu0 %v4353, 12
      %v4368 = vpop.permute.xlu0 %4367
      %4369 = vrot.lane.b32.xlu0 %v4354, 12
      %v4370 = vpop.permute.xlu0 %4369
      %4372 = vst [vmem:[#allocation1] ss:$9 sm:$0xff] %v1977
      %v4373 = vld [vmem:[#allocation1] sm:$0xff]
      %4376 = vst [vmem:[#allocation1] ss:$9 sm:$0xff] %v1985
      %v4377 = vld [vmem:[#allocation1] sm:$0xff]
      %4380 = vst [vmem:[#allocation1] ss:$9 sm:$0xff] %v1993
      %v4381 = vld [vmem:[#allocation1] sm:$0xff]
      %4384 = vst [vmem:[#allocation1] ss:$9 sm:$0xff] %v2000
      %v4385 = vld [vmem:[#allocation1] sm:$0xff]
      %4388 = vst [vmem:[#allocation1] ss:$9 sm:$0xff] %v2008
      %v4389 = vld [vmem:[#allocation1] sm:$0xff]
      %4392 = vst [vmem:[#allocation1] ss:$9 sm:$0xff] %v2016
      %v4393 = vld [vmem:[#allocation1] sm:$0xff]
      %4396 = vst [vmem:[#allocation1] ss:$9 sm:$0xff] %v2024
      %v4397 = vld [vmem:[#allocation1] sm:$0xff]
      %4400 = vst [vmem:[#allocation1] ss:$9 sm:$0xff] %v2031
      %v4401 = vld [vmem:[#allocation1] sm:$0xff]
      %4404 = vst [vmem:[#allocation1] ss:$9 sm:$0xff] %v2039
      %v4405 = vld [vmem:[#allocation1] sm:$0xff]
      %4408 = vst [vmem:[#allocation1] ss:$9 sm:$0xff] %v2047
      %v4409 = vld [vmem:[#allocation1] sm:$0xff]
      %4412 = vst [vmem:[#allocation1] ss:$9 sm:$0xff] %v2055
      %v4413 = vld [vmem:[#allocation1] sm:$0xff]
      %4416 = vst [vmem:[#allocation1] ss:$9 sm:$0xff] %v2062
      %v4417 = vld [vmem:[#allocation1] sm:$0xff]
      %4420 = vst [vmem:[#allocation1] ss:$9 sm:$0xff] %v2070
      %v4421 = vld [vmem:[#allocation1] sm:$0xff]
      %4424 = vst [vmem:[#allocation1] ss:$9 sm:$0xff] %v2078
      %v4425 = vld [vmem:[#allocation1] sm:$0xff]
      %4428 = vst [vmem:[#allocation1] ss:$9 sm:$0xff] %v2086
      %v4429 = vld [vmem:[#allocation1] sm:$0xff]
      %4432 = vst [vmem:[#allocation1] ss:$9 sm:$0xff] %v2093
      %v4433 = vld [vmem:[#allocation1] sm:$0xff]
      %4436 = vst [vmem:[#allocation1] ss:$9 sm:$0xff] %v2101
      %v4437 = vld [vmem:[#allocation1] sm:$0xff]
      %4440 = vst [vmem:[#allocation1] ss:$9 sm:$0xff] %v2109
      %v4441 = vld [vmem:[#allocation1] sm:$0xff]
      %4444 = vst [vmem:[#allocation1] ss:$9 sm:$0xff] %v2117
      %v4445 = vld [vmem:[#allocation1] sm:$0xff]
      %4448 = vst [vmem:[#allocation1] ss:$9 sm:$0xff] %v2124
      %v4449 = vld [vmem:[#allocation1] sm:$0xff]
      %4452 = vst [vmem:[#allocation1] ss:$9 sm:$0xff] %v2132
      %v4453 = vld [vmem:[#allocation1] sm:$0xff]
      %4456 = vst [vmem:[#allocation1] ss:$9 sm:$0xff] %v2140
      %v4457 = vld [vmem:[#allocation1] sm:$0xff]
      %4460 = vst [vmem:[#allocation1] ss:$9 sm:$0xff] %v2148
      %v4461 = vld [vmem:[#allocation1] sm:$0xff]
      %4464 = vst [vmem:[#allocation1] ss:$9 sm:$0xff] %v2155
      %v4465 = vld [vmem:[#allocation1] sm:$0xff]
      %4468 = vst [vmem:[#allocation1] ss:$9 sm:$0xff] %v2163
      %v4469 = vld [vmem:[#allocation1] sm:$0xff]
      %4472 = vst [vmem:[#allocation1] ss:$9 sm:$0xff] %v2171
      %v4473 = vld [vmem:[#allocation1] sm:$0xff]
      %4476 = vst [vmem:[#allocation1] ss:$9 sm:$0xff] %v2179
      %v4477 = vld [vmem:[#allocation1] sm:$0xff]
      %4480 = vst [vmem:[#allocation1] ss:$9 sm:$0xff] %v2186
      %v4481 = vld [vmem:[#allocation1] sm:$0xff]
      %4484 = vst [vmem:[#allocation1] ss:$9 sm:$0xff] %v2194
      %v4485 = vld [vmem:[#allocation1] sm:$0xff]
      %4488 = vst [vmem:[#allocation1] ss:$9 sm:$0xff] %v2202
      %v4489 = vld [vmem:[#allocation1] sm:$0xff]
      %4492 = vst [vmem:[#allocation1] ss:$9 sm:$0xff] %v2210
      %v4493 = vld [vmem:[#allocation1] sm:$0xff]
      %4496 = vst [vmem:[#allocation1] ss:$9 sm:$0xff] %v2217
      %v4497 = vld [vmem:[#allocation1] sm:$0xff]
      %4500 = vst [vmem:[#allocation1] ss:$9 sm:$0xff] %v2225
      %v4501 = vld [vmem:[#allocation1] sm:$0xff]
      %4504 = vst [vmem:[#allocation1] ss:$9 sm:$0xff] %v2233
      %v4505 = vld [vmem:[#allocation1] sm:$0xff]
      %4508 = vst [vmem:[#allocation1] ss:$9 sm:$0xff] %v2241
      %v4509 = vld [vmem:[#allocation1] sm:$0xff]
      %4512 = vst [vmem:[#allocation1] ss:$9 sm:$0xff] %v2248
      %v4513 = vld [vmem:[#allocation1] sm:$0xff]
      %4516 = vst [vmem:[#allocation1] ss:$9 sm:$0xff] %v2256
      %v4517 = vld [vmem:[#allocation1] sm:$0xff]
      %4520 = vst [vmem:[#allocation1] ss:$9 sm:$0xff] %v2264
      %v4521 = vld [vmem:[#allocation1] sm:$0xff]
      %4524 = vst [vmem:[#allocation1] ss:$9 sm:$0xff] %v2272
      %v4525 = vld [vmem:[#allocation1] sm:$0xff]
      %4528 = vst [vmem:[#allocation1] ss:$9 sm:$0xff] %v2279
      %v4529 = vld [vmem:[#allocation1] sm:$0xff]
      %4532 = vst [vmem:[#allocation1] ss:$9 sm:$0xff] %v2287
      %v4533 = vld [vmem:[#allocation1] sm:$0xff]
      %4536 = vst [vmem:[#allocation1] ss:$9 sm:$0xff] %v2295
      %v4537 = vld [vmem:[#allocation1] sm:$0xff]
      %4540 = vst [vmem:[#allocation1] ss:$9 sm:$0xff] %v2303
      %v4541 = vld [vmem:[#allocation1] sm:$0xff]
      %4544 = vst [vmem:[#allocation1] ss:$9 sm:$0xff] %v2310
      %v4545 = vld [vmem:[#allocation1] sm:$0xff]
      %4548 = vst [vmem:[#allocation1] ss:$9 sm:$0xff] %v2318
      %v4549 = vld [vmem:[#allocation1] sm:$0xff]
      %4552 = vst [vmem:[#allocation1] ss:$9 sm:$0xff] %v2326
      %v4553 = vld [vmem:[#allocation1] sm:$0xff]
      %4556 = vst [vmem:[#allocation1] ss:$9 sm:$0xff] %v2334
      %v4557 = vld [vmem:[#allocation1] sm:$0xff]
      %4560 = vst [vmem:[#allocation1] ss:$9 sm:$0xff] %v2341
      %v4561 = vld [vmem:[#allocation1] sm:$0xff]
      %4564 = vst [vmem:[#allocation1] ss:$9 sm:$0xff] %v2349
      %v4565 = vld [vmem:[#allocation1] sm:$0xff]
      %4568 = vst [vmem:[#allocation1] ss:$9 sm:$0xff] %v2357
      %v4569 = vld [vmem:[#allocation1] sm:$0xff]
      %4572 = vst [vmem:[#allocation1] ss:$9 sm:$0xff] %v2365
      %v4573 = vld [vmem:[#allocation1] sm:$0xff]
      %4576 = vst [vmem:[#allocation1] ss:$9 sm:$0xff] %v2372
      %v4577 = vld [vmem:[#allocation1] sm:$0xff]
      %4580 = vst [vmem:[#allocation1] ss:$9 sm:$0xff] %v2380
      %v4581 = vld [vmem:[#allocation1] sm:$0xff]
      %4584 = vst [vmem:[#allocation1] ss:$9 sm:$0xff] %v2388
      %v4585 = vld [vmem:[#allocation1] sm:$0xff]
      %4588 = vst [vmem:[#allocation1] ss:$9 sm:$0xff] %v2396
      %v4589 = vld [vmem:[#allocation1] sm:$0xff]
      %4592 = vst [vmem:[#allocation1] ss:$9 sm:$0xff] %v2403
      %v4593 = vld [vmem:[#allocation1] sm:$0xff]
      %4596 = vst [vmem:[#allocation1] ss:$9 sm:$0xff] %v2411
      %v4597 = vld [vmem:[#allocation1] sm:$0xff]
      %4600 = vst [vmem:[#allocation1] ss:$9 sm:$0xff] %v2419
      %v4601 = vld [vmem:[#allocation1] sm:$0xff]
      %4604 = vst [vmem:[#allocation1] ss:$9 sm:$0xff] %v2427
      %v4605 = vld [vmem:[#allocation1] sm:$0xff]
      %4608 = vst [vmem:[#allocation1] ss:$9 sm:$0xff] %v2434
      %v4609 = vld [vmem:[#allocation1] sm:$0xff]
      %4612 = vst [vmem:[#allocation1] ss:$9 sm:$0xff] %v2442
      %v4613 = vld [vmem:[#allocation1] sm:$0xff]
      %4616 = vst [vmem:[#allocation1] ss:$9 sm:$0xff] %v2450
      %v4617 = vld [vmem:[#allocation1] sm:$0xff]
      %4620 = vst [vmem:[#allocation1] ss:$9 sm:$0xff] %v2458
      %v4621 = vld [vmem:[#allocation1] sm:$0xff]
      %4624 = vst [vmem:[#allocation1] ss:$9 sm:$0xff] %v2465
      %v4625 = vld [vmem:[#allocation1] sm:$0xff]
      %v4627 = vunpack.c.l.b16 %v4373
      %v4628 = vunpack.c.l.b16 %v4377
      %v4629 = vunpack.c.l.b16 %v4381
      %v4630 = vunpack.c.l.b16 %v4385
      %v4631 = vunpack.c.l.b16 %v4389
      %v4632 = vunpack.c.l.b16 %v4393
      %v4633 = vunpack.c.l.b16 %v4397
      %v4634 = vunpack.c.l.b16 %v4401
      %v4635 = vunpack.c.l.b16 %v4405
      %v4636 = vunpack.c.l.b16 %v4409
      %v4637 = vunpack.c.l.b16 %v4413
      %v4638 = vunpack.c.l.b16 %v4417
      %v4639 = vunpack.c.l.b16 %v4421
      %v4640 = vunpack.c.l.b16 %v4425
      %v4641 = vunpack.c.l.b16 %v4429
      %v4642 = vunpack.c.l.b16 %v4433
      %v4643 = vunpack.c.l.b16 %v4437
      %v4644 = vunpack.c.l.b16 %v4441
      %v4645 = vunpack.c.l.b16 %v4445
      %v4646 = vunpack.c.l.b16 %v4449
      %v4647 = vunpack.c.l.b16 %v4453
      %v4648 = vunpack.c.l.b16 %v4457
      %v4649 = vunpack.c.l.b16 %v4461
      %v4650 = vunpack.c.l.b16 %v4465
      %v4651 = vunpack.c.l.b16 %v4469
      %v4652 = vunpack.c.l.b16 %v4473
      %v4653 = vunpack.c.l.b16 %v4477
      %v4654 = vunpack.c.l.b16 %v4481
      %v4655 = vunpack.c.l.b16 %v4485
      %v4656 = vunpack.c.l.b16 %v4489
      %v4657 = vunpack.c.l.b16 %v4493
      %v4658 = vunpack.c.l.b16 %v4497
      %v4659 = vunpack.c.l.b16 %v4501
      %v4660 = vunpack.c.l.b16 %v4505
      %v4661 = vunpack.c.l.b16 %v4509
      %v4662 = vunpack.c.l.b16 %v4513
      %v4663 = vunpack.c.l.b16 %v4517
      %v4664 = vunpack.c.l.b16 %v4521
      %v4665 = vunpack.c.l.b16 %v4525
      %v4666 = vunpack.c.l.b16 %v4529
      %v4667 = vunpack.c.l.b16 %v4533
      %v4668 = vunpack.c.l.b16 %v4537
      %v4669 = vunpack.c.l.b16 %v4541
      %v4670 = vunpack.c.l.b16 %v4545
      %v4671 = vunpack.c.l.b16 %v4549
      %v4672 = vunpack.c.l.b16 %v4553
      %v4673 = vunpack.c.l.b16 %v4557
      %v4674 = vunpack.c.l.b16 %v4561
      %v4675 = vunpack.c.l.b16 %v4565
      %v4676 = vunpack.c.l.b16 %v4569
      %v4677 = vunpack.c.l.b16 %v4573
      %v4678 = vunpack.c.l.b16 %v4577
      %v4679 = vunpack.c.l.b16 %v4581
      %v4680 = vunpack.c.l.b16 %v4585
      %v4681 = vunpack.c.l.b16 %v4589
      %v4682 = vunpack.c.l.b16 %v4593
      %v4683 = vunpack.c.l.b16 %v4597
      %v4684 = vunpack.c.l.b16 %v4601
      %v4685 = vunpack.c.l.b16 %v4605
      %v4686 = vunpack.c.l.b16 %v4609
      %v4687 = vunpack.c.l.b16 %v4613
      %v4688 = vunpack.c.l.b16 %v4617
      %v4689 = vunpack.c.l.b16 %v4621
      %v4690 = vunpack.c.l.b16 %v4625
      %v4691 = vrot.slane %v4628, 7
      %v4692 = vsel %vm868, %v4691, %v4627
      %v4693 = vrot.slane %v4629, 6
      %v4694 = vsel %vm872, %v4693, %v4692
      %v4695 = vrot.slane %v4630, 5
      %v4696 = vsel %vm876, %v4695, %v4694
      %v4697 = vrot.slane %v4631, 4
      %v4698 = vsel %vm3014, %v4697, %v4696
      %v4699 = vrot.slane %v4632, 3
      %v4700 = vsel %vm3017, %v4699, %v4698
      %v4701 = vrot.slane %v4633, 2
      %v4702 = vsel %vm3020, %v4701, %v4700
      %v4703 = vrot.slane %v4634, 1
      %v4704 = vsel %vm3023, %v4703, %v4702
      %v4705 = vrot.slane %v4636, 7
      %v4706 = vsel %vm868, %v4705, %v4635
      %v4707 = vrot.slane %v4637, 6
      %v4708 = vsel %vm872, %v4707, %v4706
      %v4709 = vrot.slane %v4638, 5
      %v4710 = vsel %vm876, %v4709, %v4708
      %v4711 = vrot.slane %v4639, 4
      %v4712 = vsel %vm3014, %v4711, %v4710
      %v4713 = vrot.slane %v4640, 3
      %v4714 = vsel %vm3017, %v4713, %v4712
      %v4715 = vrot.slane %v4641, 2
      %v4716 = vsel %vm3020, %v4715, %v4714
      %v4717 = vrot.slane %v4642, 1
      %v4718 = vsel %vm3023, %v4717, %v4716
      %v4719 = vrot.slane %v4644, 7
      %v4720 = vsel %vm868, %v4719, %v4643
      %v4721 = vrot.slane %v4645, 6
      %v4722 = vsel %vm872, %v4721, %v4720
      %v4723 = vrot.slane %v4646, 5
      %v4724 = vsel %vm876, %v4723, %v4722
      %v4725 = vrot.slane %v4647, 4
      %v4726 = vsel %vm3014, %v4725, %v4724
      %v4727 = vrot.slane %v4648, 3
      %v4728 = vsel %vm3017, %v4727, %v4726
      %v4729 = vrot.slane %v4649, 2
      %v4730 = vsel %vm3020, %v4729, %v4728
      %v4731 = vrot.slane %v4650, 1
      %v4732 = vsel %vm3023, %v4731, %v4730
      %v4733 = vrot.slane %v4652, 7
      %v4734 = vsel %vm868, %v4733, %v4651
      %v4735 = vrot.slane %v4653, 6
      %v4736 = vsel %vm872, %v4735, %v4734
      %v4737 = vrot.slane %v4654, 5
      %v4738 = vsel %vm876, %v4737, %v4736
      %v4739 = vrot.slane %v4655, 4
      %v4740 = vsel %vm3014, %v4739, %v4738
      %v4741 = vrot.slane %v4656, 3
      %v4742 = vsel %vm3017, %v4741, %v4740
      %v4743 = vrot.slane %v4657, 2
      %v4744 = vsel %vm3020, %v4743, %v4742
      %v4745 = vrot.slane %v4658, 1
      %v4746 = vsel %vm3023, %v4745, %v4744
      %v4747 = vrot.slane %v4660, 7
      %v4748 = vsel %vm868, %v4747, %v4659
      %v4749 = vrot.slane %v4661, 6
      %v4750 = vsel %vm872, %v4749, %v4748
      %v4751 = vrot.slane %v4662, 5
      %v4752 = vsel %vm876, %v4751, %v4750
      %v4753 = vrot.slane %v4663, 4
      %v4754 = vsel %vm3014, %v4753, %v4752
      %v4755 = vrot.slane %v4664, 3
      %v4756 = vsel %vm3017, %v4755, %v4754
      %v4757 = vrot.slane %v4665, 2
      %v4758 = vsel %vm3020, %v4757, %v4756
      %v4759 = vrot.slane %v4666, 1
      %v4760 = vsel %vm3023, %v4759, %v4758
      %v4761 = vrot.slane %v4668, 7
      %v4762 = vsel %vm868, %v4761, %v4667
      %v4763 = vrot.slane %v4669, 6
      %v4764 = vsel %vm872, %v4763, %v4762
      %v4765 = vrot.slane %v4670, 5
      %v4766 = vsel %vm876, %v4765, %v4764
      %v4767 = vrot.slane %v4671, 4
      %v4768 = vsel %vm3014, %v4767, %v4766
      %v4769 = vrot.slane %v4672, 3
      %v4770 = vsel %vm3017, %v4769, %v4768
      %v4771 = vrot.slane %v4673, 2
      %v4772 = vsel %vm3020, %v4771, %v4770
      %v4773 = vrot.slane %v4674, 1
      %v4774 = vsel %vm3023, %v4773, %v4772
      %v4775 = vrot.slane %v4676, 7
      %v4776 = vsel %vm868, %v4775, %v4675
      %v4777 = vrot.slane %v4677, 6
      %v4778 = vsel %vm872, %v4777, %v4776
      %v4779 = vrot.slane %v4678, 5
      %v4780 = vsel %vm876, %v4779, %v4778
      %v4781 = vrot.slane %v4679, 4
      %v4782 = vsel %vm3014, %v4781, %v4780
      %v4783 = vrot.slane %v4680, 3
      %v4784 = vsel %vm3017, %v4783, %v4782
      %v4785 = vrot.slane %v4681, 2
      %v4786 = vsel %vm3020, %v4785, %v4784
      %v4787 = vrot.slane %v4682, 1
      %v4788 = vsel %vm3023, %v4787, %v4786
      %v4789 = vrot.slane %v4684, 7
      %v4790 = vsel %vm868, %v4789, %v4683
      %v4791 = vrot.slane %v4685, 6
      %v4792 = vsel %vm872, %v4791, %v4790
      %v4793 = vrot.slane %v4686, 5
      %v4794 = vsel %vm876, %v4793, %v4792
      %v4795 = vrot.slane %v4687, 4
      %v4796 = vsel %vm3014, %v4795, %v4794
      %v4797 = vrot.slane %v4688, 3
      %v4798 = vsel %vm3017, %v4797, %v4796
      %v4799 = vrot.slane %v4689, 2
      %v4800 = vsel %vm3020, %v4799, %v4798
      %v4801 = vrot.slane %v4690, 1
      %v4802 = vsel %vm3023, %v4801, %v4800
      %v4803 = vpack.c.b16 %v4704, %v4704
      %v4804 = vpack.c.b16 %v4718, %v4718
      %v4805 = vpack.c.b16 %v4732, %v4732
      %v4806 = vpack.c.b16 %v4746, %v4746
      %v4807 = vpack.c.b16 %v4760, %v4760
      %v4808 = vpack.c.b16 %v4774, %v4774
      %v4809 = vpack.c.b16 %v4788, %v4788
      %v4810 = vpack.c.b16 %v4802, %v4802
      %4811 = vrot.lane.b32.xlu0 %v4803, 16
      %v4812 = vpop.permute.xlu0 %4811
      %4813 = vrot.lane.b32.xlu0 %v4804, 16
      %v4814 = vpop.permute.xlu0 %4813
      %4815 = vrot.lane.b32.xlu0 %v4805, 16
      %v4816 = vpop.permute.xlu0 %4815
      %4817 = vrot.lane.b32.xlu0 %v4806, 16
      %v4818 = vpop.permute.xlu0 %4817
      %4819 = vrot.lane.b32.xlu0 %v4807, 16
      %v4820 = vpop.permute.xlu0 %4819
      %4821 = vrot.lane.b32.xlu0 %v4808, 16
      %v4822 = vpop.permute.xlu0 %4821
      %4823 = vrot.lane.b32.xlu0 %v4809, 16
      %v4824 = vpop.permute.xlu0 %4823
      %4825 = vrot.lane.b32.xlu0 %v4810, 16
      %v4826 = vpop.permute.xlu0 %4825
      %4827 = vst [vmem:[#allocation1] ss:$9 sm:$0xff] %v2469
      %v4828 = vld [vmem:[#allocation1] sm:$0xff]
      %4830 = vst [vmem:[#allocation1] ss:$9 sm:$0xff] %v2471
      %v4831 = vld [vmem:[#allocation1] sm:$0xff]
      %4833 = vst [vmem:[#allocation1] ss:$9 sm:$0xff] %v2473
      %v4834 = vld [vmem:[#allocation1] sm:$0xff]
      %4836 = vst [vmem:[#allocation1] ss:$9 sm:$0xff] %v2475
      %v4837 = vld [vmem:[#allocation1] sm:$0xff]
      %4839 = vst [vmem:[#allocation1] ss:$9 sm:$0xff] %v2477
      %v4840 = vld [vmem:[#allocation1] sm:$0xff]
      %4842 = vst [vmem:[#allocation1] ss:$9 sm:$0xff] %v2479
      %v4843 = vld [vmem:[#allocation1] sm:$0xff]
      %4845 = vst [vmem:[#allocation1] ss:$9 sm:$0xff] %v2481
      %v4846 = vld [vmem:[#allocation1] sm:$0xff]
      %4848 = vst [vmem:[#allocation1] ss:$9 sm:$0xff] %v2483
      %v4849 = vld [vmem:[#allocation1] sm:$0xff]
      %4851 = vst [vmem:[#allocation1] ss:$9 sm:$0xff] %v2485
      %v4852 = vld [vmem:[#allocation1] sm:$0xff]
      %4854 = vst [vmem:[#allocation1] ss:$9 sm:$0xff] %v2486
      %v4855 = vld [vmem:[#allocation1] sm:$0xff]
      %4857 = vst [vmem:[#allocation1] ss:$9 sm:$0xff] %v2487
      %v4858 = vld [vmem:[#allocation1] sm:$0xff]
      %4860 = vst [vmem:[#allocation1] ss:$9 sm:$0xff] %v2490
      %v4861 = vld [vmem:[#allocation1] sm:$0xff]
      %4863 = vst [vmem:[#allocation1] ss:$9 sm:$0xff] %v2491
      %v4864 = vld [vmem:[#allocation1] sm:$0xff]
      %4866 = vst [vmem:[#allocation1] ss:$9 sm:$0xff] %v2492
      %v4867 = vld [vmem:[#allocation1] sm:$0xff]
      %4869 = vst [vmem:[#allocation1] ss:$9 sm:$0xff] %v2493
      %v4870 = vld [vmem:[#allocation1] sm:$0xff]
      %4872 = vst [vmem:[#allocation1] ss:$9 sm:$0xff] %v2494
      %v4873 = vld [vmem:[#allocation1] sm:$0xff]
      %4875 = vst [vmem:[#allocation1] ss:$9 sm:$0xff] %v2497
      %v4876 = vld [vmem:[#allocation1] sm:$0xff]
      %4878 = vst [vmem:[#allocation1] ss:$9 sm:$0xff] %v2498
      %v4879 = vld [vmem:[#allocation1] sm:$0xff]
      %4881 = vst [vmem:[#allocation1] ss:$9 sm:$0xff] %v2499
      %v4882 = vld [vmem:[#allocation1] sm:$0xff]
      %4884 = vst [vmem:[#allocation1] ss:$9 sm:$0xff] %v2500
      %v4885 = vld [vmem:[#allocation1] sm:$0xff]
      %4887 = vst [vmem:[#allocation1] ss:$9 sm:$0xff] %v2501
      %v4888 = vld [vmem:[#allocation1] sm:$0xff]
      %4890 = vst [vmem:[#allocation1] ss:$9 sm:$0xff] %v2502
      %v4891 = vld [vmem:[#allocation1] sm:$0xff]
      %4893 = vst [vmem:[#allocation1] ss:$9 sm:$0xff] %v2503
      %v4894 = vld [vmem:[#allocation1] sm:$0xff]
      %4896 = vst [vmem:[#allocation1] ss:$9 sm:$0xff] %v2505
      %v4897 = vld [vmem:[#allocation1] sm:$0xff]
      %4899 = vst [vmem:[#allocation1] ss:$9 sm:$0xff] %v2507
      %v4900 = vld [vmem:[#allocation1] sm:$0xff]
      %4902 = vst [vmem:[#allocation1] ss:$9 sm:$0xff] %v2508
      %v4903 = vld [vmem:[#allocation1] sm:$0xff]
      %4905 = vst [vmem:[#allocation1] ss:$9 sm:$0xff] %v2509
      %v4906 = vld [vmem:[#allocation1] sm:$0xff]
      %4908 = vst [vmem:[#allocation1] ss:$9 sm:$0xff] %v2512
      %v4909 = vld [vmem:[#allocation1] sm:$0xff]
      %4911 = vst [vmem:[#allocation1] ss:$9 sm:$0xff] %v2513
      %v4912 = vld [vmem:[#allocation1] sm:$0xff]
      %4914 = vst [vmem:[#allocation1] ss:$9 sm:$0xff] %v2514
      %v4915 = vld [vmem:[#allocation1] sm:$0xff]
      %4917 = vst [vmem:[#allocation1] ss:$9 sm:$0xff] %v2515
      %v4918 = vld [vmem:[#allocation1] sm:$0xff]
      %4920 = vst [vmem:[#allocation1] ss:$9 sm:$0xff] %v2516
      %v4921 = vld [vmem:[#allocation1] sm:$0xff]
      %4923 = vst [vmem:[#allocation1] ss:$9 sm:$0xff] %v2519
      %v4924 = vld [vmem:[#allocation1] sm:$0xff]
      %4926 = vst [vmem:[#allocation1] ss:$9 sm:$0xff] %v2520
      %v4927 = vld [vmem:[#allocation1] sm:$0xff]
      %4929 = vst [vmem:[#allocation1] ss:$9 sm:$0xff] %v2521
      %v4930 = vld [vmem:[#allocation1] sm:$0xff]
      %4932 = vst [vmem:[#allocation1] ss:$9 sm:$0xff] %v2522
      %v4933 = vld [vmem:[#allocation1] sm:$0xff]
      %4935 = vst [vmem:[#allocation1] ss:$9 sm:$0xff] %v2523
      %v4936 = vld [vmem:[#allocation1] sm:$0xff]
      %4938 = vst [vmem:[#allocation1] ss:$9 sm:$0xff] %v2524
      %v4939 = vld [vmem:[#allocation1] sm:$0xff]
      %4941 = vst [vmem:[#allocation1] ss:$9 sm:$0xff] %v2525
      %v4942 = vld [vmem:[#allocation1] sm:$0xff]
      %4944 = vst [vmem:[#allocation1] ss:$9 sm:$0xff] %v2527
      %v4945 = vld [vmem:[#allocation1] sm:$0xff]
      %4947 = vst [vmem:[#allocation1] ss:$9 sm:$0xff] %v2529
      %v4948 = vld [vmem:[#allocation1] sm:$0xff]
      %4950 = vst [vmem:[#allocation1] ss:$9 sm:$0xff] %v2530
      %v4951 = vld [vmem:[#allocation1] sm:$0xff]
      %4953 = vst [vmem:[#allocation1] ss:$9 sm:$0xff] %v2531
      %v4954 = vld [vmem:[#allocation1] sm:$0xff]
      %4956 = vst [vmem:[#allocation1] ss:$9 sm:$0xff] %v2534
      %v4957 = vld [vmem:[#allocation1] sm:$0xff]
      %4959 = vst [vmem:[#allocation1] ss:$9 sm:$0xff] %v2535
      %v4960 = vld [vmem:[#allocation1] sm:$0xff]
      %4962 = vst [vmem:[#allocation1] ss:$9 sm:$0xff] %v2536
      %v4963 = vld [vmem:[#allocation1] sm:$0xff]
      %4965 = vst [vmem:[#allocation1] ss:$9 sm:$0xff] %v2537
      %v4966 = vld [vmem:[#allocation1] sm:$0xff]
      %4968 = vst [vmem:[#allocation1] ss:$9 sm:$0xff] %v2538
      %v4969 = vld [vmem:[#allocation1] sm:$0xff]
      %4971 = vst [vmem:[#allocation1] ss:$9 sm:$0xff] %v2541
      %v4972 = vld [vmem:[#allocation1] sm:$0xff]
      %4974 = vst [vmem:[#allocation1] ss:$9 sm:$0xff] %v2542
      %v4975 = vld [vmem:[#allocation1] sm:$0xff]
      %4977 = vst [vmem:[#allocation1] ss:$9 sm:$0xff] %v2543
      %v4978 = vld [vmem:[#allocation1] sm:$0xff]
      %4980 = vst [vmem:[#allocation1] ss:$9 sm:$0xff] %v2544
      %v4981 = vld [vmem:[#allocation1] sm:$0xff]
      %4983 = vst [vmem:[#allocation1] ss:$9 sm:$0xff] %v2545
      %v4984 = vld [vmem:[#allocation1] sm:$0xff]
      %4986 = vst [vmem:[#allocation1] ss:$9 sm:$0xff] %v2546
      %v4987 = vld [vmem:[#allocation1] sm:$0xff]
      %4989 = vst [vmem:[#allocation1] ss:$9 sm:$0xff] %v2547
      %v4990 = vld [vmem:[#allocation1] sm:$0xff]
      %4992 = vst [vmem:[#allocation1] ss:$9 sm:$0xff] %v2549
      %v4993 = vld [vmem:[#allocation1] sm:$0xff]
      %4995 = vst [vmem:[#allocation1] ss:$9 sm:$0xff] %v2551
      %v4996 = vld [vmem:[#allocation1] sm:$0xff]
      %4998 = vst [vmem:[#allocation1] ss:$9 sm:$0xff] %v2552
      %v4999 = vld [vmem:[#allocation1] sm:$0xff]
      %5001 = vst [vmem:[#allocation1] ss:$9 sm:$0xff] %v2553
      %v5002 = vld [vmem:[#allocation1] sm:$0xff]
      %5004 = vst [vmem:[#allocation1] ss:$9 sm:$0xff] %v2556
      %v5005 = vld [vmem:[#allocation1] sm:$0xff]
      %5007 = vst [vmem:[#allocation1] ss:$9 sm:$0xff] %v2557
      %v5008 = vld [vmem:[#allocation1] sm:$0xff]
      %5010 = vst [vmem:[#allocation1] ss:$9 sm:$0xff] %v2558
      %v5011 = vld [vmem:[#allocation1] sm:$0xff]
      %5013 = vst [vmem:[#allocation1] ss:$9 sm:$0xff] %v2559
      %v5014 = vld [vmem:[#allocation1] sm:$0xff]
      %5016 = vst [vmem:[#allocation1] ss:$9 sm:$0xff] %v2560
      %v5017 = vld [vmem:[#allocation1] sm:$0xff]
      %v5019 = vunpack.c.l.b16 %v4828
      %v5020 = vunpack.c.l.b16 %v4831
      %v5021 = vunpack.c.l.b16 %v4834
      %v5022 = vunpack.c.l.b16 %v4837
      %v5023 = vunpack.c.l.b16 %v4840
      %v5024 = vunpack.c.l.b16 %v4843
      %v5025 = vunpack.c.l.b16 %v4846
      %v5026 = vunpack.c.l.b16 %v4849
      %v5027 = vunpack.c.l.b16 %v4852
      %v5028 = vunpack.c.l.b16 %v4855
      %v5029 = vunpack.c.l.b16 %v4858
      %v5030 = vunpack.c.l.b16 %v4861
      %v5031 = vunpack.c.l.b16 %v4864
      %v5032 = vunpack.c.l.b16 %v4867
      %v5033 = vunpack.c.l.b16 %v4870
      %v5034 = vunpack.c.l.b16 %v4873
      %v5035 = vunpack.c.l.b16 %v4876
      %v5036 = vunpack.c.l.b16 %v4879
      %v5037 = vunpack.c.l.b16 %v4882
      %v5038 = vunpack.c.l.b16 %v4885
      %v5039 = vunpack.c.l.b16 %v4888
      %v5040 = vunpack.c.l.b16 %v4891
      %v5041 = vunpack.c.l.b16 %v4894
      %v5042 = vunpack.c.l.b16 %v4897
      %v5043 = vunpack.c.l.b16 %v4900
      %v5044 = vunpack.c.l.b16 %v4903
      %v5045 = vunpack.c.l.b16 %v4906
      %v5046 = vunpack.c.l.b16 %v4909
      %v5047 = vunpack.c.l.b16 %v4912
      %v5048 = vunpack.c.l.b16 %v4915
      %v5049 = vunpack.c.l.b16 %v4918
      %v5050 = vunpack.c.l.b16 %v4921
      %v5051 = vunpack.c.l.b16 %v4924
      %v5052 = vunpack.c.l.b16 %v4927
      %v5053 = vunpack.c.l.b16 %v4930
      %v5054 = vunpack.c.l.b16 %v4933
      %v5055 = vunpack.c.l.b16 %v4936
      %v5056 = vunpack.c.l.b16 %v4939
      %v5057 = vunpack.c.l.b16 %v4942
      %v5058 = vunpack.c.l.b16 %v4945
      %v5059 = vunpack.c.l.b16 %v4948
      %v5060 = vunpack.c.l.b16 %v4951
      %v5061 = vunpack.c.l.b16 %v4954
      %v5062 = vunpack.c.l.b16 %v4957
      %v5063 = vunpack.c.l.b16 %v4960
      %v5064 = vunpack.c.l.b16 %v4963
      %v5065 = vunpack.c.l.b16 %v4966
      %v5066 = vunpack.c.l.b16 %v4969
      %v5067 = vunpack.c.l.b16 %v4972
      %v5068 = vunpack.c.l.b16 %v4975
      %v5069 = vunpack.c.l.b16 %v4978
      %v5070 = vunpack.c.l.b16 %v4981
      %v5071 = vunpack.c.l.b16 %v4984
      %v5072 = vunpack.c.l.b16 %v4987
      %v5073 = vunpack.c.l.b16 %v4990
      %v5074 = vunpack.c.l.b16 %v4993
      %v5075 = vunpack.c.l.b16 %v4996
      %v5076 = vunpack.c.l.b16 %v4999
      %v5077 = vunpack.c.l.b16 %v5002
      %v5078 = vunpack.c.l.b16 %v5005
      %v5079 = vunpack.c.l.b16 %v5008
      %v5080 = vunpack.c.l.b16 %v5011
      %v5081 = vunpack.c.l.b16 %v5014
      %v5082 = vunpack.c.l.b16 %v5017
      %v5083 = vrot.slane %v5020, 7
      %v5084 = vsel %vm868, %v5083, %v5019
      %v5085 = vrot.slane %v5021, 6
      %v5086 = vsel %vm872, %v5085, %v5084
      %v5087 = vrot.slane %v5022, 5
      %v5088 = vsel %vm876, %v5087, %v5086
      %v5089 = vrot.slane %v5023, 4
      %v5090 = vsel %vm3014, %v5089, %v5088
      %v5091 = vrot.slane %v5024, 3
      %v5092 = vsel %vm3017, %v5091, %v5090
      %v5093 = vrot.slane %v5025, 2
      %v5094 = vsel %vm3020, %v5093, %v5092
      %v5095 = vrot.slane %v5026, 1
      %v5096 = vsel %vm3023, %v5095, %v5094
      %v5097 = vrot.slane %v5028, 7
      %v5098 = vsel %vm868, %v5097, %v5027
      %v5099 = vrot.slane %v5029, 6
      %v5100 = vsel %vm872, %v5099, %v5098
      %v5101 = vrot.slane %v5030, 5
      %v5102 = vsel %vm876, %v5101, %v5100
      %v5103 = vrot.slane %v5031, 4
      %v5104 = vsel %vm3014, %v5103, %v5102
      %v5105 = vrot.slane %v5032, 3
      %v5106 = vsel %vm3017, %v5105, %v5104
      %v5107 = vrot.slane %v5033, 2
      %v5108 = vsel %vm3020, %v5107, %v5106
      %v5109 = vrot.slane %v5034, 1
      %v5110 = vsel %vm3023, %v5109, %v5108
      %v5111 = vrot.slane %v5036, 7
      %v5112 = vsel %vm868, %v5111, %v5035
      %v5113 = vrot.slane %v5037, 6
      %v5114 = vsel %vm872, %v5113, %v5112
      %v5115 = vrot.slane %v5038, 5
      %v5116 = vsel %vm876, %v5115, %v5114
      %v5117 = vrot.slane %v5039, 4
      %v5118 = vsel %vm3014, %v5117, %v5116
      %v5119 = vrot.slane %v5040, 3
      %v5120 = vsel %vm3017, %v5119, %v5118
      %v5121 = vrot.slane %v5041, 2
      %v5122 = vsel %vm3020, %v5121, %v5120
      %v5123 = vrot.slane %v5042, 1
      %v5124 = vsel %vm3023, %v5123, %v5122
      %v5125 = vrot.slane %v5044, 7
      %v5126 = vsel %vm868, %v5125, %v5043
      %v5127 = vrot.slane %v5045, 6
      %v5128 = vsel %vm872, %v5127, %v5126
      %v5129 = vrot.slane %v5046, 5
      %v5130 = vsel %vm876, %v5129, %v5128
      %v5131 = vrot.slane %v5047, 4
      %v5132 = vsel %vm3014, %v5131, %v5130
      %v5133 = vrot.slane %v5048, 3
      %v5134 = vsel %vm3017, %v5133, %v5132
      %v5135 = vrot.slane %v5049, 2
      %v5136 = vsel %vm3020, %v5135, %v5134
      %v5137 = vrot.slane %v5050, 1
      %v5138 = vsel %vm3023, %v5137, %v5136
      %v5139 = vrot.slane %v5052, 7
      %v5140 = vsel %vm868, %v5139, %v5051
      %v5141 = vrot.slane %v5053, 6
      %v5142 = vsel %vm872, %v5141, %v5140
      %v5143 = vrot.slane %v5054, 5
      %v5144 = vsel %vm876, %v5143, %v5142
      %v5145 = vrot.slane %v5055, 4
      %v5146 = vsel %vm3014, %v5145, %v5144
      %v5147 = vrot.slane %v5056, 3
      %v5148 = vsel %vm3017, %v5147, %v5146
      %v5149 = vrot.slane %v5057, 2
      %v5150 = vsel %vm3020, %v5149, %v5148
      %v5151 = vrot.slane %v5058, 1
      %v5152 = vsel %vm3023, %v5151, %v5150
      %v5153 = vrot.slane %v5060, 7
      %v5154 = vsel %vm868, %v5153, %v5059
      %v5155 = vrot.slane %v5061, 6
      %v5156 = vsel %vm872, %v5155, %v5154
      %v5157 = vrot.slane %v5062, 5
      %v5158 = vsel %vm876, %v5157, %v5156
      %v5159 = vrot.slane %v5063, 4
      %v5160 = vsel %vm3014, %v5159, %v5158
      %v5161 = vrot.slane %v5064, 3
      %v5162 = vsel %vm3017, %v5161, %v5160
      %v5163 = vrot.slane %v5065, 2
      %v5164 = vsel %vm3020, %v5163, %v5162
      %v5165 = vrot.slane %v5066, 1
      %v5166 = vsel %vm3023, %v5165, %v5164
      %v5167 = vrot.slane %v5068, 7
      %v5168 = vsel %vm868, %v5167, %v5067
      %v5169 = vrot.slane %v5069, 6
      %v5170 = vsel %vm872, %v5169, %v5168
      %v5171 = vrot.slane %v5070, 5
      %v5172 = vsel %vm876, %v5171, %v5170
      %v5173 = vrot.slane %v5071, 4
      %v5174 = vsel %vm3014, %v5173, %v5172
      %v5175 = vrot.slane %v5072, 3
      %v5176 = vsel %vm3017, %v5175, %v5174
      %v5177 = vrot.slane %v5073, 2
      %v5178 = vsel %vm3020, %v5177, %v5176
      %v5179 = vrot.slane %v5074, 1
      %v5180 = vsel %vm3023, %v5179, %v5178
      %v5181 = vrot.slane %v5076, 7
      %v5182 = vsel %vm868, %v5181, %v5075
      %v5183 = vrot.slane %v5077, 6
      %v5184 = vsel %vm872, %v5183, %v5182
      %v5185 = vrot.slane %v5078, 5
      %v5186 = vsel %vm876, %v5185, %v5184
      %v5187 = vrot.slane %v5079, 4
      %v5188 = vsel %vm3014, %v5187, %v5186
      %v5189 = vrot.slane %v5080, 3
      %v5190 = vsel %vm3017, %v5189, %v5188
      %v5191 = vrot.slane %v5081, 2
      %v5192 = vsel %vm3020, %v5191, %v5190
      %v5193 = vrot.slane %v5082, 1
      %v5194 = vsel %vm3023, %v5193, %v5192
      %v5195 = vpack.c.b16 %v5096, %v5096
      %v5196 = vpack.c.b16 %v5110, %v5110
      %v5197 = vpack.c.b16 %v5124, %v5124
      %v5198 = vpack.c.b16 %v5138, %v5138
      %v5199 = vpack.c.b16 %v5152, %v5152
      %v5200 = vpack.c.b16 %v5166, %v5166
      %v5201 = vpack.c.b16 %v5180, %v5180
      %v5202 = vpack.c.b16 %v5194, %v5194
      %5203 = vrot.lane.b32.xlu0 %v5195, 20
      %v5204 = vpop.permute.xlu0 %5203
      %5205 = vrot.lane.b32.xlu0 %v5196, 20
      %v5206 = vpop.permute.xlu0 %5205
      %5207 = vrot.lane.b32.xlu0 %v5197, 20
      %v5208 = vpop.permute.xlu0 %5207
      %5209 = vrot.lane.b32.xlu0 %v5198, 20
      %v5210 = vpop.permute.xlu0 %5209
      %5211 = vrot.lane.b32.xlu0 %v5199, 20
      %v5212 = vpop.permute.xlu0 %5211
      %5213 = vrot.lane.b32.xlu0 %v5200, 20
      %v5214 = vpop.permute.xlu0 %5213
      %5215 = vrot.lane.b32.xlu0 %v5201, 20
      %v5216 = vpop.permute.xlu0 %5215
      %5217 = vrot.lane.b32.xlu0 %v5202, 20
      %v5218 = vpop.permute.xlu0 %5217
      %5219 = vst [vmem:[#allocation1] ss:$9 sm:$0xff] %v894
      %v5220 = vld [vmem:[#allocation1] sm:$0xff]
      %5222 = vst [vmem:[#allocation1] ss:$9 sm:$0xff] %v897
      %v5223 = vld [vmem:[#allocation1] sm:$0xff]
      %5225 = vst [vmem:[#allocation1] ss:$9 sm:$0xff] %v900
      %v5226 = vld [vmem:[#allocation1] sm:$0xff]
      %5228 = vst [vmem:[#allocation1] ss:$9 sm:$0xff] %v903
      %v5229 = vld [vmem:[#allocation1] sm:$0xff]
      %5231 = vst [vmem:[#allocation1] ss:$9 sm:$0xff] %v906
      %v5232 = vld [vmem:[#allocation1] sm:$0xff]
      %5234 = vst [vmem:[#allocation1] ss:$9 sm:$0xff] %v909
      %v5235 = vld [vmem:[#allocation1] sm:$0xff]
      %5237 = vst [vmem:[#allocation1] ss:$9 sm:$0xff] %v912
      %v5238 = vld [vmem:[#allocation1] sm:$0xff]
      %5240 = vst [vmem:[#allocation1] ss:$9 sm:$0xff] %v915
      %v5241 = vld [vmem:[#allocation1] sm:$0xff]
      %5243 = vst [vmem:[#allocation1] ss:$9 sm:$0xff] %v918
      %v5244 = vld [vmem:[#allocation1] sm:$0xff]
      %5246 = vst [vmem:[#allocation1] ss:$9 sm:$0xff] %v921
      %v5247 = vld [vmem:[#allocation1] sm:$0xff]
      %5249 = vst [vmem:[#allocation1] ss:$9 sm:$0xff] %v924
      %v5250 = vld [vmem:[#allocation1] sm:$0xff]
      %5252 = vst [vmem:[#allocation1] ss:$9 sm:$0xff] %v927
      %v5253 = vld [vmem:[#allocation1] sm:$0xff]
      %5255 = vst [vmem:[#allocation1] ss:$9 sm:$0xff] %v930
      %v5256 = vld [vmem:[#allocation1] sm:$0xff]
      %5258 = vst [vmem:[#allocation1] ss:$9 sm:$0xff] %v933
      %v5259 = vld [vmem:[#allocation1] sm:$0xff]
      %5261 = vst [vmem:[#allocation1] ss:$9 sm:$0xff] %v936
      %v5262 = vld [vmem:[#allocation1] sm:$0xff]
      %5264 = vst [vmem:[#allocation1] ss:$9 sm:$0xff] %v939
      %v5265 = vld [vmem:[#allocation1] sm:$0xff]
      %5267 = vst [vmem:[#allocation1] ss:$9 sm:$0xff] %v942
      %v5268 = vld [vmem:[#allocation1] sm:$0xff]
      %5270 = vst [vmem:[#allocation1] ss:$9 sm:$0xff] %v945
      %v5271 = vld [vmem:[#allocation1] sm:$0xff]
      %5273 = vst [vmem:[#allocation1] ss:$9 sm:$0xff] %v948
      %v5274 = vld [vmem:[#allocation1] sm:$0xff]
      %5276 = vst [vmem:[#allocation1] ss:$9 sm:$0xff] %v951
      %v5277 = vld [vmem:[#allocation1] sm:$0xff]
      %5279 = vst [vmem:[#allocation1] ss:$9 sm:$0xff] %v954
      %v5280 = vld [vmem:[#allocation1] sm:$0xff]
      %5282 = vst [vmem:[#allocation1] ss:$9 sm:$0xff] %v957
      %v5283 = vld [vmem:[#allocation1] sm:$0xff]
      %5285 = vst [vmem:[#allocation1] ss:$9 sm:$0xff] %v960
      %v5286 = vld [vmem:[#allocation1] sm:$0xff]
      %5288 = vst [vmem:[#allocation1] ss:$9 sm:$0xff] %v963
      %v5289 = vld [vmem:[#allocation1] sm:$0xff]
      %5291 = vst [vmem:[#allocation1] ss:$9 sm:$0xff] %v966
      %v5292 = vld [vmem:[#allocation1] sm:$0xff]
      %5294 = vst [vmem:[#allocation1] ss:$9 sm:$0xff] %v969
      %v5295 = vld [vmem:[#allocation1] sm:$0xff]
      %5297 = vst [vmem:[#allocation1] ss:$9 sm:$0xff] %v972
      %v5298 = vld [vmem:[#allocation1] sm:$0xff]
      %5300 = vst [vmem:[#allocation1] ss:$9 sm:$0xff] %v975
      %v5301 = vld [vmem:[#allocation1] sm:$0xff]
      %5303 = vst [vmem:[#allocation1] ss:$9 sm:$0xff] %v978
      %v5304 = vld [vmem:[#allocation1] sm:$0xff]
      %5306 = vst [vmem:[#allocation1] ss:$9 sm:$0xff] %v981
      %v5307 = vld [vmem:[#allocation1] sm:$0xff]
      %5309 = vst [vmem:[#allocation1] ss:$9 sm:$0xff] %v984
      %v5310 = vld [vmem:[#allocation1] sm:$0xff]
      %5312 = vst [vmem:[#allocation1] ss:$9 sm:$0xff] %v987
      %v5313 = vld [vmem:[#allocation1] sm:$0xff]
      %5315 = vst [vmem:[#allocation1] ss:$9 sm:$0xff] %v990
      %v5316 = vld [vmem:[#allocation1] sm:$0xff]
      %5318 = vst [vmem:[#allocation1] ss:$9 sm:$0xff] %v993
      %v5319 = vld [vmem:[#allocation1] sm:$0xff]
      %5321 = vst [vmem:[#allocation1] ss:$9 sm:$0xff] %v996
      %v5322 = vld [vmem:[#allocation1] sm:$0xff]
      %5324 = vst [vmem:[#allocation1] ss:$9 sm:$0xff] %v999
      %v5325 = vld [vmem:[#allocation1] sm:$0xff]
      %5327 = vst [vmem:[#allocation1] ss:$9 sm:$0xff] %v1002
      %v5328 = vld [vmem:[#allocation1] sm:$0xff]
      %5330 = vst [vmem:[#allocation1] ss:$9 sm:$0xff] %v1005
      %v5331 = vld [vmem:[#allocation1] sm:$0xff]
      %5333 = vst [vmem:[#allocation1] ss:$9 sm:$0xff] %v1008
      %v5334 = vld [vmem:[#allocation1] sm:$0xff]
      %5336 = vst [vmem:[#allocation1] ss:$9 sm:$0xff] %v1011
      %v5337 = vld [vmem:[#allocation1] sm:$0xff]
      %5339 = vst [vmem:[#allocation1] ss:$9 sm:$0xff] %v1014
      %v5340 = vld [vmem:[#allocation1] sm:$0xff]
      %5342 = vst [vmem:[#allocation1] ss:$9 sm:$0xff] %v1017
      %v5343 = vld [vmem:[#allocation1] sm:$0xff]
      %5345 = vst [vmem:[#allocation1] ss:$9 sm:$0xff] %v1020
      %v5346 = vld [vmem:[#allocation1] sm:$0xff]
      %5348 = vst [vmem:[#allocation1] ss:$9 sm:$0xff] %v1023
      %v5349 = vld [vmem:[#allocation1] sm:$0xff]
      %5351 = vst [vmem:[#allocation1] ss:$9 sm:$0xff] %v1026
      %v5352 = vld [vmem:[#allocation1] sm:$0xff]
      %5354 = vst [vmem:[#allocation1] ss:$9 sm:$0xff] %v1029
      %v5355 = vld [vmem:[#allocation1] sm:$0xff]
      %5357 = vst [vmem:[#allocation1] ss:$9 sm:$0xff] %v1032
      %v5358 = vld [vmem:[#allocation1] sm:$0xff]
      %5360 = vst [vmem:[#allocation1] ss:$9 sm:$0xff] %v1035
      %v5361 = vld [vmem:[#allocation1] sm:$0xff]
      %5363 = vst [vmem:[#allocation1] ss:$9 sm:$0xff] %v1038
      %v5364 = vld [vmem:[#allocation1] sm:$0xff]
      %5366 = vst [vmem:[#allocation1] ss:$9 sm:$0xff] %v1041
      %v5367 = vld [vmem:[#allocation1] sm:$0xff]
      %5369 = vst [vmem:[#allocation1] ss:$9 sm:$0xff] %v1044
      %v5370 = vld [vmem:[#allocation1] sm:$0xff]
      %5372 = vst [vmem:[#allocation1] ss:$9 sm:$0xff] %v1047
      %v5373 = vld [vmem:[#allocation1] sm:$0xff]
      %5375 = vst [vmem:[#allocation1] ss:$9 sm:$0xff] %v1050
      %v5376 = vld [vmem:[#allocation1] sm:$0xff]
      %5378 = vst [vmem:[#allocation1] ss:$9 sm:$0xff] %v1053
      %v5379 = vld [vmem:[#allocation1] sm:$0xff]
      %5381 = vst [vmem:[#allocation1] ss:$9 sm:$0xff] %v1056
      %v5382 = vld [vmem:[#allocation1] sm:$0xff]
      %5384 = vst [vmem:[#allocation1] ss:$9 sm:$0xff] %v1059
      %v5385 = vld [vmem:[#allocation1] sm:$0xff]
      %5387 = vst [vmem:[#allocation1] ss:$9 sm:$0xff] %v2567
      %v5388 = vld [vmem:[#allocation1] sm:$0xff]
      %5390 = vst [vmem:[#allocation1] ss:$9 sm:$0xff] %v2570
      %v5391 = vld [vmem:[#allocation1] sm:$0xff]
      %5393 = vst [vmem:[#allocation1] ss:$9 sm:$0xff] %v2573
      %v5394 = vld [vmem:[#allocation1] sm:$0xff]
      %5396 = vst [vmem:[#allocation1] ss:$9 sm:$0xff] %v2576
      %v5397 = vld [vmem:[#allocation1] sm:$0xff]
      %5399 = vst [vmem:[#allocation1] ss:$9 sm:$0xff] %v2579
      %v5400 = vld [vmem:[#allocation1] sm:$0xff]
      %5402 = vst [vmem:[#allocation1] ss:$9 sm:$0xff] %v2582
      %v5403 = vld [vmem:[#allocation1] sm:$0xff]
      %5405 = vst [vmem:[#allocation1] ss:$9 sm:$0xff] %v2585
      %v5406 = vld [vmem:[#allocation1] sm:$0xff]
      %5408 = vst [vmem:[#allocation1] ss:$9 sm:$0xff] %v2588
      %v5409 = vld [vmem:[#allocation1] sm:$0xff]
      %v5411 = vunpack.c.l.b16 %v5220
      %v5412 = vunpack.c.l.b16 %v5223
      %v5413 = vunpack.c.l.b16 %v5226
      %v5414 = vunpack.c.l.b16 %v5229
      %v5415 = vunpack.c.l.b16 %v5232
      %v5416 = vunpack.c.l.b16 %v5235
      %v5417 = vunpack.c.l.b16 %v5238
      %v5418 = vunpack.c.l.b16 %v5241
      %v5419 = vunpack.c.l.b16 %v5244
      %v5420 = vunpack.c.l.b16 %v5247
      %v5421 = vunpack.c.l.b16 %v5250
      %v5422 = vunpack.c.l.b16 %v5253
      %v5423 = vunpack.c.l.b16 %v5256
      %v5424 = vunpack.c.l.b16 %v5259
      %v5425 = vunpack.c.l.b16 %v5262
      %v5426 = vunpack.c.l.b16 %v5265
      %v5427 = vunpack.c.l.b16 %v5268
      %v5428 = vunpack.c.l.b16 %v5271
      %v5429 = vunpack.c.l.b16 %v5274
      %v5430 = vunpack.c.l.b16 %v5277
      %v5431 = vunpack.c.l.b16 %v5280
      %v5432 = vunpack.c.l.b16 %v5283
      %v5433 = vunpack.c.l.b16 %v5286
      %v5434 = vunpack.c.l.b16 %v5289
      %v5435 = vunpack.c.l.b16 %v5292
      %v5436 = vunpack.c.l.b16 %v5295
      %v5437 = vunpack.c.l.b16 %v5298
      %v5438 = vunpack.c.l.b16 %v5301
      %v5439 = vunpack.c.l.b16 %v5304
      %v5440 = vunpack.c.l.b16 %v5307
      %v5441 = vunpack.c.l.b16 %v5310
      %v5442 = vunpack.c.l.b16 %v5313
      %v5443 = vunpack.c.l.b16 %v5316
      %v5444 = vunpack.c.l.b16 %v5319
      %v5445 = vunpack.c.l.b16 %v5322
      %v5446 = vunpack.c.l.b16 %v5325
      %v5447 = vunpack.c.l.b16 %v5328
      %v5448 = vunpack.c.l.b16 %v5331
      %v5449 = vunpack.c.l.b16 %v5334
      %v5450 = vunpack.c.l.b16 %v5337
      %v5451 = vunpack.c.l.b16 %v5340
      %v5452 = vunpack.c.l.b16 %v5343
      %v5453 = vunpack.c.l.b16 %v5346
      %v5454 = vunpack.c.l.b16 %v5349
      %v5455 = vunpack.c.l.b16 %v5352
      %v5456 = vunpack.c.l.b16 %v5355
      %v5457 = vunpack.c.l.b16 %v5358
      %v5458 = vunpack.c.l.b16 %v5361
      %v5459 = vunpack.c.l.b16 %v5364
      %v5460 = vunpack.c.l.b16 %v5367
      %v5461 = vunpack.c.l.b16 %v5370
      %v5462 = vunpack.c.l.b16 %v5373
      %v5463 = vunpack.c.l.b16 %v5376
      %v5464 = vunpack.c.l.b16 %v5379
      %v5465 = vunpack.c.l.b16 %v5382
      %v5466 = vunpack.c.l.b16 %v5385
      %v5467 = vunpack.c.l.b16 %v5388
      %v5468 = vunpack.c.l.b16 %v5391
      %v5469 = vunpack.c.l.b16 %v5394
      %v5470 = vunpack.c.l.b16 %v5397
      %v5471 = vunpack.c.l.b16 %v5400
      %v5472 = vunpack.c.l.b16 %v5403
      %v5473 = vunpack.c.l.b16 %v5406
      %v5474 = vunpack.c.l.b16 %v5409
      %v5475 = vrot.slane %v5412, 7
      %v5476 = vsel %vm868, %v5475, %v5411
      %v5477 = vrot.slane %v5413, 6
      %v5478 = vsel %vm872, %v5477, %v5476
      %v5479 = vrot.slane %v5414, 5
      %v5480 = vsel %vm876, %v5479, %v5478
      %v5481 = vrot.slane %v5415, 4
      %v5482 = vsel %vm3014, %v5481, %v5480
      %v5483 = vrot.slane %v5416, 3
      %v5484 = vsel %vm3017, %v5483, %v5482
      %v5485 = vrot.slane %v5417, 2
      %v5486 = vsel %vm3020, %v5485, %v5484
      %v5487 = vrot.slane %v5418, 1
      %v5488 = vsel %vm3023, %v5487, %v5486
      %v5489 = vrot.slane %v5420, 7
      %v5490 = vsel %vm868, %v5489, %v5419
      %v5491 = vrot.slane %v5421, 6
      %v5492 = vsel %vm872, %v5491, %v5490
      %v5493 = vrot.slane %v5422, 5
      %v5494 = vsel %vm876, %v5493, %v5492
      %v5495 = vrot.slane %v5423, 4
      %v5496 = vsel %vm3014, %v5495, %v5494
      %v5497 = vrot.slane %v5424, 3
      %v5498 = vsel %vm3017, %v5497, %v5496
      %v5499 = vrot.slane %v5425, 2
      %v5500 = vsel %vm3020, %v5499, %v5498
      %v5501 = vrot.slane %v5426, 1
      %v5502 = vsel %vm3023, %v5501, %v5500
      %v5503 = vrot.slane %v5428, 7
      %v5504 = vsel %vm868, %v5503, %v5427
      %v5505 = vrot.slane %v5429, 6
      %v5506 = vsel %vm872, %v5505, %v5504
      %v5507 = vrot.slane %v5430, 5
      %v5508 = vsel %vm876, %v5507, %v5506
      %v5509 = vrot.slane %v5431, 4
      %v5510 = vsel %vm3014, %v5509, %v5508
      %v5511 = vrot.slane %v5432, 3
      %v5512 = vsel %vm3017, %v5511, %v5510
      %v5513 = vrot.slane %v5433, 2
      %v5514 = vsel %vm3020, %v5513, %v5512
      %v5515 = vrot.slane %v5434, 1
      %v5516 = vsel %vm3023, %v5515, %v5514
      %v5517 = vrot.slane %v5436, 7
      %v5518 = vsel %vm868, %v5517, %v5435
      %v5519 = vrot.slane %v5437, 6
      %v5520 = vsel %vm872, %v5519, %v5518
      %v5521 = vrot.slane %v5438, 5
      %v5522 = vsel %vm876, %v5521, %v5520
      %v5523 = vrot.slane %v5439, 4
      %v5524 = vsel %vm3014, %v5523, %v5522
      %v5525 = vrot.slane %v5440, 3
      %v5526 = vsel %vm3017, %v5525, %v5524
      %v5527 = vrot.slane %v5441, 2
      %v5528 = vsel %vm3020, %v5527, %v5526
      %v5529 = vrot.slane %v5442, 1
      %v5530 = vsel %vm3023, %v5529, %v5528
      %v5531 = vrot.slane %v5444, 7
      %v5532 = vsel %vm868, %v5531, %v5443
      %v5533 = vrot.slane %v5445, 6
      %v5534 = vsel %vm872, %v5533, %v5532
      %v5535 = vrot.slane %v5446, 5
      %v5536 = vsel %vm876, %v5535, %v5534
      %v5537 = vrot.slane %v5447, 4
      %v5538 = vsel %vm3014, %v5537, %v5536
      %v5539 = vrot.slane %v5448, 3
      %v5540 = vsel %vm3017, %v5539, %v5538
      %v5541 = vrot.slane %v5449, 2
      %v5542 = vsel %vm3020, %v5541, %v5540
      %v5543 = vrot.slane %v5450, 1
      %v5544 = vsel %vm3023, %v5543, %v5542
      %v5545 = vrot.slane %v5452, 7
      %v5546 = vsel %vm868, %v5545, %v5451
      %v5547 = vrot.slane %v5453, 6
      %v5548 = vsel %vm872, %v5547, %v5546
      %v5549 = vrot.slane %v5454, 5
      %v5550 = vsel %vm876, %v5549, %v5548
      %v5551 = vrot.slane %v5455, 4
      %v5552 = vsel %vm3014, %v5551, %v5550
      %v5553 = vrot.slane %v5456, 3
      %v5554 = vsel %vm3017, %v5553, %v5552
      %v5555 = vrot.slane %v5457, 2
      %v5556 = vsel %vm3020, %v5555, %v5554
      %v5557 = vrot.slane %v5458, 1
      %v5558 = vsel %vm3023, %v5557, %v5556
      %v5559 = vrot.slane %v5460, 7
      %v5560 = vsel %vm868, %v5559, %v5459
      %v5561 = vrot.slane %v5461, 6
      %v5562 = vsel %vm872, %v5561, %v5560
      %v5563 = vrot.slane %v5462, 5
      %v5564 = vsel %vm876, %v5563, %v5562
      %v5565 = vrot.slane %v5463, 4
      %v5566 = vsel %vm3014, %v5565, %v5564
      %v5567 = vrot.slane %v5464, 3
      %v5568 = vsel %vm3017, %v5567, %v5566
      %v5569 = vrot.slane %v5465, 2
      %v5570 = vsel %vm3020, %v5569, %v5568
      %v5571 = vrot.slane %v5466, 1
      %v5572 = vsel %vm3023, %v5571, %v5570
      %v5573 = vrot.slane %v5468, 7
      %v5574 = vsel %vm868, %v5573, %v5467
      %v5575 = vrot.slane %v5469, 6
      %v5576 = vsel %vm872, %v5575, %v5574
      %v5577 = vrot.slane %v5470, 5
      %v5578 = vsel %vm876, %v5577, %v5576
      %v5579 = vrot.slane %v5471, 4
      %v5580 = vsel %vm3014, %v5579, %v5578
      %v5581 = vrot.slane %v5472, 3
      %v5582 = vsel %vm3017, %v5581, %v5580
      %v5583 = vrot.slane %v5473, 2
      %v5584 = vsel %vm3020, %v5583, %v5582
      %v5585 = vrot.slane %v5474, 1
      %v5586 = vsel %vm3023, %v5585, %v5584
      %v5587 = vpack.c.b16 %v5488, %v5488
      %v5588 = vpack.c.b16 %v5502, %v5502
      %v5589 = vpack.c.b16 %v5516, %v5516
      %v5590 = vpack.c.b16 %v5530, %v5530
      %v5591 = vpack.c.b16 %v5544, %v5544
      %v5592 = vpack.c.b16 %v5558, %v5558
      %v5593 = vpack.c.b16 %v5572, %v5572
      %v5594 = vpack.c.b16 %v5586, %v5586
      %5595 = vrot.lane.b32.xlu0 %v5587, 24
      %v5596 = vpop.permute.xlu0 %5595
      %5597 = vrot.lane.b32.xlu0 %v5588, 24
      %v5598 = vpop.permute.xlu0 %5597
      %5599 = vrot.lane.b32.xlu0 %v5589, 24
      %v5600 = vpop.permute.xlu0 %5599
      %5601 = vrot.lane.b32.xlu0 %v5590, 24
      %v5602 = vpop.permute.xlu0 %5601
      %5603 = vrot.lane.b32.xlu0 %v5591, 24
      %v5604 = vpop.permute.xlu0 %5603
      %5605 = vrot.lane.b32.xlu0 %v5592, 24
      %v5606 = vpop.permute.xlu0 %5605
      %5607 = vrot.lane.b32.xlu0 %v5593, 24
      %v5608 = vpop.permute.xlu0 %5607
      %5609 = vrot.lane.b32.xlu0 %v5594, 24
      %v5610 = vpop.permute.xlu0 %5609
      %5611 = vst [vmem:[#allocation1] ss:$9 sm:$0xff] %v1184
      %v5612 = vld [vmem:[#allocation1] sm:$0xff]
      %5614 = vst [vmem:[#allocation1] ss:$9 sm:$0xff] %v1192
      %v5615 = vld [vmem:[#allocation1] sm:$0xff]
      %5617 = vst [vmem:[#allocation1] ss:$9 sm:$0xff] %v1200
      %v5618 = vld [vmem:[#allocation1] sm:$0xff]
      %5620 = vst [vmem:[#allocation1] ss:$9 sm:$0xff] %v1207
      %v5621 = vld [vmem:[#allocation1] sm:$0xff]
      %5623 = vst [vmem:[#allocation1] ss:$9 sm:$0xff] %v1215
      %v5624 = vld [vmem:[#allocation1] sm:$0xff]
      %5626 = vst [vmem:[#allocation1] ss:$9 sm:$0xff] %v1223
      %v5627 = vld [vmem:[#allocation1] sm:$0xff]
      %5629 = vst [vmem:[#allocation1] ss:$9 sm:$0xff] %v1231
      %v5630 = vld [vmem:[#allocation1] sm:$0xff]
      %5632 = vst [vmem:[#allocation1] ss:$9 sm:$0xff] %v1238
      %v5633 = vld [vmem:[#allocation1] sm:$0xff]
      %5635 = vst [vmem:[#allocation1] ss:$9 sm:$0xff] %v1246
      %v5636 = vld [vmem:[#allocation1] sm:$0xff]
      %5638 = vst [vmem:[#allocation1] ss:$9 sm:$0xff] %v1254
      %v5639 = vld [vmem:[#allocation1] sm:$0xff]
      %5641 = vst [vmem:[#allocation1] ss:$9 sm:$0xff] %v1262
      %v5642 = vld [vmem:[#allocation1] sm:$0xff]
      %5644 = vst [vmem:[#allocation1] ss:$9 sm:$0xff] %v1269
      %v5645 = vld [vmem:[#allocation1] sm:$0xff]
      %5647 = vst [vmem:[#allocation1] ss:$9 sm:$0xff] %v1277
      %v5648 = vld [vmem:[#allocation1] sm:$0xff]
      %5650 = vst [vmem:[#allocation1] ss:$9 sm:$0xff] %v1285
      %v5651 = vld [vmem:[#allocation1] sm:$0xff]
      %5653 = vst [vmem:[#allocation1] ss:$9 sm:$0xff] %v1293
      %v5654 = vld [vmem:[#allocation1] sm:$0xff]
      %5656 = vst [vmem:[#allocation1] ss:$9 sm:$0xff] %v1300
      %v5657 = vld [vmem:[#allocation1] sm:$0xff]
      %5659 = vst [vmem:[#allocation1] ss:$9 sm:$0xff] %v1308
      %v5660 = vld [vmem:[#allocation1] sm:$0xff]
      %5662 = vst [vmem:[#allocation1] ss:$9 sm:$0xff] %v1316
      %v5663 = vld [vmem:[#allocation1] sm:$0xff]
      %5665 = vst [vmem:[#allocation1] ss:$9 sm:$0xff] %v1324
      %v5666 = vld [vmem:[#allocation1] sm:$0xff]
      %5668 = vst [vmem:[#allocation1] ss:$9 sm:$0xff] %v1331
      %v5669 = vld [vmem:[#allocation1] sm:$0xff]
      %5671 = vst [vmem:[#allocation1] ss:$9 sm:$0xff] %v1339
      %v5672 = vld [vmem:[#allocation1] sm:$0xff]
      %5674 = vst [vmem:[#allocation1] ss:$9 sm:$0xff] %v1347
      %v5675 = vld [vmem:[#allocation1] sm:$0xff]
      %5677 = vst [vmem:[#allocation1] ss:$9 sm:$0xff] %v1355
      %v5678 = vld [vmem:[#allocation1] sm:$0xff]
      %5680 = vst [vmem:[#allocation1] ss:$9 sm:$0xff] %v1362
      %v5681 = vld [vmem:[#allocation1] sm:$0xff]
      %5683 = vst [vmem:[#allocation1] ss:$9 sm:$0xff] %v1370
      %v5684 = vld [vmem:[#allocation1] sm:$0xff]
      %5686 = vst [vmem:[#allocation1] ss:$9 sm:$0xff] %v1378
      %v5687 = vld [vmem:[#allocation1] sm:$0xff]
      %5689 = vst [vmem:[#allocation1] ss:$9 sm:$0xff] %v1386
      %v5690 = vld [vmem:[#allocation1] sm:$0xff]
      %5692 = vst [vmem:[#allocation1] ss:$9 sm:$0xff] %v1393
      %v5693 = vld [vmem:[#allocation1] sm:$0xff]
      %5695 = vst [vmem:[#allocation1] ss:$9 sm:$0xff] %v1401
      %v5696 = vld [vmem:[#allocation1] sm:$0xff]
      %5698 = vst [vmem:[#allocation1] ss:$9 sm:$0xff] %v1409
      %v5699 = vld [vmem:[#allocation1] sm:$0xff]
      %5701 = vst [vmem:[#allocation1] ss:$9 sm:$0xff] %v1417
      %v5702 = vld [vmem:[#allocation1] sm:$0xff]
      %5704 = vst [vmem:[#allocation1] ss:$9 sm:$0xff] %v1424
      %v5705 = vld [vmem:[#allocation1] sm:$0xff]
      %5707 = vst [vmem:[#allocation1] ss:$9 sm:$0xff] %v1432
      %v5708 = vld [vmem:[#allocation1] sm:$0xff]
      %5710 = vst [vmem:[#allocation1] ss:$9 sm:$0xff] %v1440
      %v5711 = vld [vmem:[#allocation1] sm:$0xff]
      %5713 = vst [vmem:[#allocation1] ss:$9 sm:$0xff] %v1448
      %v5714 = vld [vmem:[#allocation1] sm:$0xff]
      %5716 = vst [vmem:[#allocation1] ss:$9 sm:$0xff] %v1455
      %v5717 = vld [vmem:[#allocation1] sm:$0xff]
      %5719 = vst [vmem:[#allocation1] ss:$9 sm:$0xff] %v1463
      %v5720 = vld [vmem:[#allocation1] sm:$0xff]
      %5722 = vst [vmem:[#allocation1] ss:$9 sm:$0xff] %v1471
      %v5723 = vld [vmem:[#allocation1] sm:$0xff]
      %5725 = vst [vmem:[#allocation1] ss:$9 sm:$0xff] %v1479
      %v5726 = vld [vmem:[#allocation1] sm:$0xff]
      %5728 = vst [vmem:[#allocation1] ss:$9 sm:$0xff] %v1486
      %v5729 = vld [vmem:[#allocation1] sm:$0xff]
      %5731 = vst [vmem:[#allocation1] ss:$9 sm:$0xff] %v1494
      %v5732 = vld [vmem:[#allocation1] sm:$0xff]
      %5734 = vst [vmem:[#allocation1] ss:$9 sm:$0xff] %v1502
      %v5735 = vld [vmem:[#allocation1] sm:$0xff]
      %5737 = vst [vmem:[#allocation1] ss:$9 sm:$0xff] %v1510
      %v5738 = vld [vmem:[#allocation1] sm:$0xff]
      %5740 = vst [vmem:[#allocation1] ss:$9 sm:$0xff] %v1517
      %v5741 = vld [vmem:[#allocation1] sm:$0xff]
      %5743 = vst [vmem:[#allocation1] ss:$9 sm:$0xff] %v1525
      %v5744 = vld [vmem:[#allocation1] sm:$0xff]
      %5746 = vst [vmem:[#allocation1] ss:$9 sm:$0xff] %v1533
      %v5747 = vld [vmem:[#allocation1] sm:$0xff]
      %5749 = vst [vmem:[#allocation1] ss:$9 sm:$0xff] %v1541
      %v5750 = vld [vmem:[#allocation1] sm:$0xff]
      %5752 = vst [vmem:[#allocation1] ss:$9 sm:$0xff] %v1548
      %v5753 = vld [vmem:[#allocation1] sm:$0xff]
      %5755 = vst [vmem:[#allocation1] ss:$9 sm:$0xff] %v1556
      %v5756 = vld [vmem:[#allocation1] sm:$0xff]
      %5758 = vst [vmem:[#allocation1] ss:$9 sm:$0xff] %v1564
      %v5759 = vld [vmem:[#allocation1] sm:$0xff]
      %5761 = vst [vmem:[#allocation1] ss:$9 sm:$0xff] %v1572
      %v5762 = vld [vmem:[#allocation1] sm:$0xff]
      %5764 = vst [vmem:[#allocation1] ss:$9 sm:$0xff] %v1579
      %v5765 = vld [vmem:[#allocation1] sm:$0xff]
      %5767 = vst [vmem:[#allocation1] ss:$9 sm:$0xff] %v1587
      %v5768 = vld [vmem:[#allocation1] sm:$0xff]
      %5770 = vst [vmem:[#allocation1] ss:$9 sm:$0xff] %v1595
      %v5771 = vld [vmem:[#allocation1] sm:$0xff]
      %5773 = vst [vmem:[#allocation1] ss:$9 sm:$0xff] %v1603
      %v5774 = vld [vmem:[#allocation1] sm:$0xff]
      %5776 = vst [vmem:[#allocation1] ss:$9 sm:$0xff] %v1610
      %v5777 = vld [vmem:[#allocation1] sm:$0xff]
      %5780 = vst [vmem:[#allocation1] ss:$9 sm:$0xff] %v2601
      %v5781 = vld [vmem:[#allocation1] sm:$0xff]
      %5784 = vst [vmem:[#allocation1] ss:$9 sm:$0xff] %v2609
      %v5785 = vld [vmem:[#allocation1] sm:$0xff]
      %5788 = vst [vmem:[#allocation1] ss:$9 sm:$0xff] %v2617
      %v5789 = vld [vmem:[#allocation1] sm:$0xff]
      %5792 = vst [vmem:[#allocation1] ss:$9 sm:$0xff] %v2624
      %v5793 = vld [vmem:[#allocation1] sm:$0xff]
      %5796 = vst [vmem:[#allocation1] ss:$9 sm:$0xff] %v2632
      %v5797 = vld [vmem:[#allocation1] sm:$0xff]
      %5800 = vst [vmem:[#allocation1] ss:$9 sm:$0xff] %v2640
      %v5801 = vld [vmem:[#allocation1] sm:$0xff]
      %5804 = vst [vmem:[#allocation1] ss:$9 sm:$0xff] %v2648
      %v5805 = vld [vmem:[#allocation1] sm:$0xff]
      %5808 = vst [vmem:[#allocation1] ss:$9 sm:$0xff] %v2655
      %v5809 = vld [vmem:[#allocation1] sm:$0xff]
      %v5811 = vunpack.c.l.b16 %v5612
      %v5812 = vunpack.c.l.b16 %v5615
      %v5813 = vunpack.c.l.b16 %v5618
      %v5814 = vunpack.c.l.b16 %v5621
      %v5815 = vunpack.c.l.b16 %v5624
      %v5816 = vunpack.c.l.b16 %v5627
      %v5817 = vunpack.c.l.b16 %v5630
      %v5818 = vunpack.c.l.b16 %v5633
      %v5819 = vunpack.c.l.b16 %v5636
      %v5820 = vunpack.c.l.b16 %v5639
      %v5821 = vunpack.c.l.b16 %v5642
      %v5822 = vunpack.c.l.b16 %v5645
      %v5823 = vunpack.c.l.b16 %v5648
      %v5824 = vunpack.c.l.b16 %v5651
      %v5825 = vunpack.c.l.b16 %v5654
      %v5826 = vunpack.c.l.b16 %v5657
      %v5827 = vunpack.c.l.b16 %v5660
      %v5828 = vunpack.c.l.b16 %v5663
      %v5829 = vunpack.c.l.b16 %v5666
      %v5830 = vunpack.c.l.b16 %v5669
      %v5831 = vunpack.c.l.b16 %v5672
      %v5832 = vunpack.c.l.b16 %v5675
      %v5833 = vunpack.c.l.b16 %v5678
      %v5834 = vunpack.c.l.b16 %v5681
      %v5835 = vunpack.c.l.b16 %v5684
      %v5836 = vunpack.c.l.b16 %v5687
      %v5837 = vunpack.c.l.b16 %v5690
      %v5838 = vunpack.c.l.b16 %v5693
      %v5839 = vunpack.c.l.b16 %v5696
      %v5840 = vunpack.c.l.b16 %v5699
      %v5841 = vunpack.c.l.b16 %v5702
      %v5842 = vunpack.c.l.b16 %v5705
      %v5843 = vunpack.c.l.b16 %v5708
      %v5844 = vunpack.c.l.b16 %v5711
      %v5845 = vunpack.c.l.b16 %v5714
      %v5846 = vunpack.c.l.b16 %v5717
      %v5847 = vunpack.c.l.b16 %v5720
      %v5848 = vunpack.c.l.b16 %v5723
      %v5849 = vunpack.c.l.b16 %v5726
      %v5850 = vunpack.c.l.b16 %v5729
      %v5851 = vunpack.c.l.b16 %v5732
      %v5852 = vunpack.c.l.b16 %v5735
      %v5853 = vunpack.c.l.b16 %v5738
      %v5854 = vunpack.c.l.b16 %v5741
      %v5855 = vunpack.c.l.b16 %v5744
      %v5856 = vunpack.c.l.b16 %v5747
      %v5857 = vunpack.c.l.b16 %v5750
      %v5858 = vunpack.c.l.b16 %v5753
      %v5859 = vunpack.c.l.b16 %v5756
      %v5860 = vunpack.c.l.b16 %v5759
      %v5861 = vunpack.c.l.b16 %v5762
      %v5862 = vunpack.c.l.b16 %v5765
      %v5863 = vunpack.c.l.b16 %v5768
      %v5864 = vunpack.c.l.b16 %v5771
      %v5865 = vunpack.c.l.b16 %v5774
      %v5866 = vunpack.c.l.b16 %v5777
      %v5867 = vunpack.c.l.b16 %v5781
      %v5868 = vunpack.c.l.b16 %v5785
      %v5869 = vunpack.c.l.b16 %v5789
      %v5870 = vunpack.c.l.b16 %v5793
      %v5871 = vunpack.c.l.b16 %v5797
      %v5872 = vunpack.c.l.b16 %v5801
      %v5873 = vunpack.c.l.b16 %v5805
      %v5874 = vunpack.c.l.b16 %v5809
      %v5875 = vrot.slane %v5812, 7
      %v5876 = vsel %vm868, %v5875, %v5811
      %v5877 = vrot.slane %v5813, 6
      %v5878 = vsel %vm872, %v5877, %v5876
      %v5879 = vrot.slane %v5814, 5
      %v5880 = vsel %vm876, %v5879, %v5878
      %v5881 = vrot.slane %v5815, 4
      %v5882 = vsel %vm3014, %v5881, %v5880
      %v5883 = vrot.slane %v5816, 3
      %v5884 = vsel %vm3017, %v5883, %v5882
      %v5885 = vrot.slane %v5817, 2
      %v5886 = vsel %vm3020, %v5885, %v5884
      %v5887 = vrot.slane %v5818, 1
      %v5888 = vsel %vm3023, %v5887, %v5886
      %v5889 = vrot.slane %v5820, 7
      %v5890 = vsel %vm868, %v5889, %v5819
      %v5891 = vrot.slane %v5821, 6
      %v5892 = vsel %vm872, %v5891, %v5890
      %v5893 = vrot.slane %v5822, 5
      %v5894 = vsel %vm876, %v5893, %v5892
      %v5895 = vrot.slane %v5823, 4
      %v5896 = vsel %vm3014, %v5895, %v5894
      %v5897 = vrot.slane %v5824, 3
      %v5898 = vsel %vm3017, %v5897, %v5896
      %v5899 = vrot.slane %v5825, 2
      %v5900 = vsel %vm3020, %v5899, %v5898
      %v5901 = vrot.slane %v5826, 1
      %v5902 = vsel %vm3023, %v5901, %v5900
      %v5903 = vrot.slane %v5828, 7
      %v5904 = vsel %vm868, %v5903, %v5827
      %v5905 = vrot.slane %v5829, 6
      %v5906 = vsel %vm872, %v5905, %v5904
      %v5907 = vrot.slane %v5830, 5
      %v5908 = vsel %vm876, %v5907, %v5906
      %v5909 = vrot.slane %v5831, 4
      %v5910 = vsel %vm3014, %v5909, %v5908
      %v5911 = vrot.slane %v5832, 3
      %v5912 = vsel %vm3017, %v5911, %v5910
      %v5913 = vrot.slane %v5833, 2
      %v5914 = vsel %vm3020, %v5913, %v5912
      %v5915 = vrot.slane %v5834, 1
      %v5916 = vsel %vm3023, %v5915, %v5914
      %v5917 = vrot.slane %v5836, 7
      %v5918 = vsel %vm868, %v5917, %v5835
      %v5919 = vrot.slane %v5837, 6
      %v5920 = vsel %vm872, %v5919, %v5918
      %v5921 = vrot.slane %v5838, 5
      %v5922 = vsel %vm876, %v5921, %v5920
      %v5923 = vrot.slane %v5839, 4
      %v5924 = vsel %vm3014, %v5923, %v5922
      %v5925 = vrot.slane %v5840, 3
      %v5926 = vsel %vm3017, %v5925, %v5924
      %v5927 = vrot.slane %v5841, 2
      %v5928 = vsel %vm3020, %v5927, %v5926
      %v5929 = vrot.slane %v5842, 1
      %v5930 = vsel %vm3023, %v5929, %v5928
      %v5931 = vrot.slane %v5844, 7
      %v5932 = vsel %vm868, %v5931, %v5843
      %v5933 = vrot.slane %v5845, 6
      %v5934 = vsel %vm872, %v5933, %v5932
      %v5935 = vrot.slane %v5846, 5
      %v5936 = vsel %vm876, %v5935, %v5934
      %v5937 = vrot.slane %v5847, 4
      %v5938 = vsel %vm3014, %v5937, %v5936
      %v5939 = vrot.slane %v5848, 3
      %v5940 = vsel %vm3017, %v5939, %v5938
      %v5941 = vrot.slane %v5849, 2
      %v5942 = vsel %vm3020, %v5941, %v5940
      %v5943 = vrot.slane %v5850, 1
      %v5944 = vsel %vm3023, %v5943, %v5942
      %v5945 = vrot.slane %v5852, 7
      %v5946 = vsel %vm868, %v5945, %v5851
      %v5947 = vrot.slane %v5853, 6
      %v5948 = vsel %vm872, %v5947, %v5946
      %v5949 = vrot.slane %v5854, 5
      %v5950 = vsel %vm876, %v5949, %v5948
      %v5951 = vrot.slane %v5855, 4
      %v5952 = vsel %vm3014, %v5951, %v5950
      %v5953 = vrot.slane %v5856, 3
      %v5954 = vsel %vm3017, %v5953, %v5952
      %v5955 = vrot.slane %v5857, 2
      %v5956 = vsel %vm3020, %v5955, %v5954
      %v5957 = vrot.slane %v5858, 1
      %v5958 = vsel %vm3023, %v5957, %v5956
      %v5959 = vrot.slane %v5860, 7
      %v5960 = vsel %vm868, %v5959, %v5859
      %v5961 = vrot.slane %v5861, 6
      %v5962 = vsel %vm872, %v5961, %v5960
      %v5963 = vrot.slane %v5862, 5
      %v5964 = vsel %vm876, %v5963, %v5962
      %v5965 = vrot.slane %v5863, 4
      %v5966 = vsel %vm3014, %v5965, %v5964
      %v5967 = vrot.slane %v5864, 3
      %v5968 = vsel %vm3017, %v5967, %v5966
      %v5969 = vrot.slane %v5865, 2
      %v5970 = vsel %vm3020, %v5969, %v5968
      %v5971 = vrot.slane %v5866, 1
      %v5972 = vsel %vm3023, %v5971, %v5970
      %v5973 = vrot.slane %v5868, 7
      %v5974 = vsel %vm868, %v5973, %v5867
      %v5975 = vrot.slane %v5869, 6
      %v5976 = vsel %vm872, %v5975, %v5974
      %v5977 = vrot.slane %v5870, 5
      %v5978 = vsel %vm876, %v5977, %v5976
      %v5979 = vrot.slane %v5871, 4
      %v5980 = vsel %vm3014, %v5979, %v5978
      %v5981 = vrot.slane %v5872, 3
      %v5982 = vsel %vm3017, %v5981, %v5980
      %v5983 = vrot.slane %v5873, 2
      %v5984 = vsel %vm3020, %v5983, %v5982
      %v5985 = vrot.slane %v5874, 1
      %v5986 = vsel %vm3023, %v5985, %v5984
      %v5987 = vpack.c.b16 %v5888, %v5888
      %v5988 = vpack.c.b16 %v5902, %v5902
      %v5989 = vpack.c.b16 %v5916, %v5916
      %v5990 = vpack.c.b16 %v5930, %v5930
      %v5991 = vpack.c.b16 %v5944, %v5944
      %v5992 = vpack.c.b16 %v5958, %v5958
      %v5993 = vpack.c.b16 %v5972, %v5972
      %v5994 = vpack.c.b16 %v5986, %v5986
      %5995 = vrot.lane.b32.xlu0 %v5987, 28
      %v5996 = vpop.permute.xlu0 %5995
      %5997 = vrot.lane.b32.xlu0 %v5988, 28
      %v5998 = vpop.permute.xlu0 %5997
      %5999 = vrot.lane.b32.xlu0 %v5989, 28
      %v6000 = vpop.permute.xlu0 %5999
      %6001 = vrot.lane.b32.xlu0 %v5990, 28
      %v6002 = vpop.permute.xlu0 %6001
      %6003 = vrot.lane.b32.xlu0 %v5991, 28
      %v6004 = vpop.permute.xlu0 %6003
      %6005 = vrot.lane.b32.xlu0 %v5992, 28
      %v6006 = vpop.permute.xlu0 %6005
      %6007 = vrot.lane.b32.xlu0 %v5993, 28
      %v6008 = vpop.permute.xlu0 %6007
      %6009 = vrot.lane.b32.xlu0 %v5994, 28
      %v6010 = vpop.permute.xlu0 %6009
      %6011 = vst [vmem:[#allocation1] ss:$9 sm:$0xff] %v2659
      %v6012 = vld [vmem:[#allocation1] sm:$0xff]
      %6014 = vst [vmem:[#allocation1] ss:$9 sm:$0xff] %v2661
      %v6015 = vld [vmem:[#allocation1] sm:$0xff]
      %6017 = vst [vmem:[#allocation1] ss:$9 sm:$0xff] %v2663
      %v6018 = vld [vmem:[#allocation1] sm:$0xff]
      %6020 = vst [vmem:[#allocation1] ss:$9 sm:$0xff] %v2665
      %v6021 = vld [vmem:[#allocation1] sm:$0xff]
      %6023 = vst [vmem:[#allocation1] ss:$9 sm:$0xff] %v2667
      %v6024 = vld [vmem:[#allocation1] sm:$0xff]
      %6026 = vst [vmem:[#allocation1] ss:$9 sm:$0xff] %v2669
      %v6027 = vld [vmem:[#allocation1] sm:$0xff]
      %6029 = vst [vmem:[#allocation1] ss:$9 sm:$0xff] %v2671
      %v6030 = vld [vmem:[#allocation1] sm:$0xff]
      %6032 = vst [vmem:[#allocation1] ss:$9 sm:$0xff] %v2673
      %v6033 = vld [vmem:[#allocation1] sm:$0xff]
      %6035 = vst [vmem:[#allocation1] ss:$9 sm:$0xff] %v2675
      %v6036 = vld [vmem:[#allocation1] sm:$0xff]
      %6038 = vst [vmem:[#allocation1] ss:$9 sm:$0xff] %v2676
      %v6039 = vld [vmem:[#allocation1] sm:$0xff]
      %6041 = vst [vmem:[#allocation1] ss:$9 sm:$0xff] %v2677
      %v6042 = vld [vmem:[#allocation1] sm:$0xff]
      %6044 = vst [vmem:[#allocation1] ss:$9 sm:$0xff] %v2680
      %v6045 = vld [vmem:[#allocation1] sm:$0xff]
      %6047 = vst [vmem:[#allocation1] ss:$9 sm:$0xff] %v2681
      %v6048 = vld [vmem:[#allocation1] sm:$0xff]
      %6050 = vst [vmem:[#allocation1] ss:$9 sm:$0xff] %v2682
      %v6051 = vld [vmem:[#allocation1] sm:$0xff]
      %6053 = vst [vmem:[#allocation1] ss:$9 sm:$0xff] %v2683
      %v6054 = vld [vmem:[#allocation1] sm:$0xff]
      %6056 = vst [vmem:[#allocation1] ss:$9 sm:$0xff] %v2684
      %v6057 = vld [vmem:[#allocation1] sm:$0xff]
      %6059 = vst [vmem:[#allocation1] ss:$9 sm:$0xff] %v2687
      %v6060 = vld [vmem:[#allocation1] sm:$0xff]
      %6062 = vst [vmem:[#allocation1] ss:$9 sm:$0xff] %v2688
      %v6063 = vld [vmem:[#allocation1] sm:$0xff]
      %6065 = vst [vmem:[#allocation1] ss:$9 sm:$0xff] %v2689
      %v6066 = vld [vmem:[#allocation1] sm:$0xff]
      %6068 = vst [vmem:[#allocation1] ss:$9 sm:$0xff] %v2690
      %v6069 = vld [vmem:[#allocation1] sm:$0xff]
      %6071 = vst [vmem:[#allocation1] ss:$9 sm:$0xff] %v2691
      %v6072 = vld [vmem:[#allocation1] sm:$0xff]
      %6074 = vst [vmem:[#allocation1] ss:$9 sm:$0xff] %v2692
      %v6075 = vld [vmem:[#allocation1] sm:$0xff]
      %6077 = vst [vmem:[#allocation1] ss:$9 sm:$0xff] %v2693
      %v6078 = vld [vmem:[#allocation1] sm:$0xff]
      %6080 = vst [vmem:[#allocation1] ss:$9 sm:$0xff] %v2695
      %v6081 = vld [vmem:[#allocation1] sm:$0xff]
      %6083 = vst [vmem:[#allocation1] ss:$9 sm:$0xff] %v2697
      %v6084 = vld [vmem:[#allocation1] sm:$0xff]
      %6086 = vst [vmem:[#allocation1] ss:$9 sm:$0xff] %v2698
      %v6087 = vld [vmem:[#allocation1] sm:$0xff]
      %6089 = vst [vmem:[#allocation1] ss:$9 sm:$0xff] %v2699
      %v6090 = vld [vmem:[#allocation1] sm:$0xff]
      %6092 = vst [vmem:[#allocation1] ss:$9 sm:$0xff] %v2702
      %v6093 = vld [vmem:[#allocation1] sm:$0xff]
      %6095 = vst [vmem:[#allocation1] ss:$9 sm:$0xff] %v2703
      %v6096 = vld [vmem:[#allocation1] sm:$0xff]
      %6098 = vst [vmem:[#allocation1] ss:$9 sm:$0xff] %v2704
      %v6099 = vld [vmem:[#allocation1] sm:$0xff]
      %6101 = vst [vmem:[#allocation1] ss:$9 sm:$0xff] %v2705
      %v6102 = vld [vmem:[#allocation1] sm:$0xff]
      %6104 = vst [vmem:[#allocation1] ss:$9 sm:$0xff] %v2706
      %v6105 = vld [vmem:[#allocation1] sm:$0xff]
      %6107 = vst [vmem:[#allocation1] ss:$9 sm:$0xff] %v2709
      %v6108 = vld [vmem:[#allocation1] sm:$0xff]
      %6110 = vst [vmem:[#allocation1] ss:$9 sm:$0xff] %v2710
      %v6111 = vld [vmem:[#allocation1] sm:$0xff]
      %6113 = vst [vmem:[#allocation1] ss:$9 sm:$0xff] %v2711
      %v6114 = vld [vmem:[#allocation1] sm:$0xff]
      %6116 = vst [vmem:[#allocation1] ss:$9 sm:$0xff] %v2712
      %v6117 = vld [vmem:[#allocation1] sm:$0xff]
      %6119 = vst [vmem:[#allocation1] ss:$9 sm:$0xff] %v2713
      %v6120 = vld [vmem:[#allocation1] sm:$0xff]
      %6122 = vst [vmem:[#allocation1] ss:$9 sm:$0xff] %v2714
      %v6123 = vld [vmem:[#allocation1] sm:$0xff]
      %6125 = vst [vmem:[#allocation1] ss:$9 sm:$0xff] %v2715
      %v6126 = vld [vmem:[#allocation1] sm:$0xff]
      %6128 = vst [vmem:[#allocation1] ss:$9 sm:$0xff] %v2717
      %v6129 = vld [vmem:[#allocation1] sm:$0xff]
      %6131 = vst [vmem:[#allocation1] ss:$9 sm:$0xff] %v2719
      %v6132 = vld [vmem:[#allocation1] sm:$0xff]
      %6134 = vst [vmem:[#allocation1] ss:$9 sm:$0xff] %v2720
      %v6135 = vld [vmem:[#allocation1] sm:$0xff]
      %6137 = vst [vmem:[#allocation1] ss:$9 sm:$0xff] %v2721
      %v6138 = vld [vmem:[#allocation1] sm:$0xff]
      %6140 = vst [vmem:[#allocation1] ss:$9 sm:$0xff] %v2724
      %v6141 = vld [vmem:[#allocation1] sm:$0xff]
      %6143 = vst [vmem:[#allocation1] ss:$9 sm:$0xff] %v2725
      %v6144 = vld [vmem:[#allocation1] sm:$0xff]
      %6146 = vst [vmem:[#allocation1] ss:$9 sm:$0xff] %v2726
      %v6147 = vld [vmem:[#allocation1] sm:$0xff]
      %6149 = vst [vmem:[#allocation1] ss:$9 sm:$0xff] %v2727
      %v6150 = vld [vmem:[#allocation1] sm:$0xff]
      %6152 = vst [vmem:[#allocation1] ss:$9 sm:$0xff] %v2728
      %v6153 = vld [vmem:[#allocation1] sm:$0xff]
      %6155 = vst [vmem:[#allocation1] ss:$9 sm:$0xff] %v2731
      %v6156 = vld [vmem:[#allocation1] sm:$0xff]
      %6158 = vst [vmem:[#allocation1] ss:$9 sm:$0xff] %v2732
      %v6159 = vld [vmem:[#allocation1] sm:$0xff]
      %6161 = vst [vmem:[#allocation1] ss:$9 sm:$0xff] %v2733
      %v6162 = vld [vmem:[#allocation1] sm:$0xff]
      %6164 = vst [vmem:[#allocation1] ss:$9 sm:$0xff] %v2734
      %v6165 = vld [vmem:[#allocation1] sm:$0xff]
      %6167 = vst [vmem:[#allocation1] ss:$9 sm:$0xff] %v2735
      %v6168 = vld [vmem:[#allocation1] sm:$0xff]
      %6170 = vst [vmem:[#allocation1] ss:$9 sm:$0xff] %v2736
      %v6171 = vld [vmem:[#allocation1] sm:$0xff]
      %6173 = vst [vmem:[#allocation1] ss:$9 sm:$0xff] %v2737
      %v6174 = vld [vmem:[#allocation1] sm:$0xff]
      %6176 = vst [vmem:[#allocation1] ss:$9 sm:$0xff] %v2739
      %v6177 = vld [vmem:[#allocation1] sm:$0xff]
      %6179 = vst [vmem:[#allocation1] ss:$9 sm:$0xff] %v2741
      %v6180 = vld [vmem:[#allocation1] sm:$0xff]
      %6182 = vst [vmem:[#allocation1] ss:$9 sm:$0xff] %v2742
      %v6183 = vld [vmem:[#allocation1] sm:$0xff]
      %6185 = vst [vmem:[#allocation1] ss:$9 sm:$0xff] %v2743
      %v6186 = vld [vmem:[#allocation1] sm:$0xff]
      %6188 = vst [vmem:[#allocation1] ss:$9 sm:$0xff] %v2746
      %v6189 = vld [vmem:[#allocation1] sm:$0xff]
      %6191 = vst [vmem:[#allocation1] ss:$9 sm:$0xff] %v2747
      %v6192 = vld [vmem:[#allocation1] sm:$0xff]
      %6194 = vst [vmem:[#allocation1] ss:$9 sm:$0xff] %v2748
      %v6195 = vld [vmem:[#allocation1] sm:$0xff]
      %6197 = vst [vmem:[#allocation1] ss:$9 sm:$0xff] %v2749
      %v6198 = vld [vmem:[#allocation1] sm:$0xff]
      %6200 = vst [vmem:[#allocation1] ss:$9 sm:$0xff] %v2750
      %v6201 = vld [vmem:[#allocation1] sm:$0xff]
      %v6203 = vunpack.c.l.b16 %v6012
      %v6204 = vunpack.c.l.b16 %v6015
      %v6205 = vunpack.c.l.b16 %v6018
      %v6206 = vunpack.c.l.b16 %v6021
      %v6207 = vunpack.c.l.b16 %v6024
      %v6208 = vunpack.c.l.b16 %v6027
      %v6209 = vunpack.c.l.b16 %v6030
      %v6210 = vunpack.c.l.b16 %v6033
      %v6211 = vunpack.c.l.b16 %v6036
      %v6212 = vunpack.c.l.b16 %v6039
      %v6213 = vunpack.c.l.b16 %v6042
      %v6214 = vunpack.c.l.b16 %v6045
      %v6215 = vunpack.c.l.b16 %v6048
      %v6216 = vunpack.c.l.b16 %v6051
      %v6217 = vunpack.c.l.b16 %v6054
      %v6218 = vunpack.c.l.b16 %v6057
      %v6219 = vunpack.c.l.b16 %v6060
      %v6220 = vunpack.c.l.b16 %v6063
      %v6221 = vunpack.c.l.b16 %v6066
      %v6222 = vunpack.c.l.b16 %v6069
      %v6223 = vunpack.c.l.b16 %v6072
      %v6224 = vunpack.c.l.b16 %v6075
      %v6225 = vunpack.c.l.b16 %v6078
      %v6226 = vunpack.c.l.b16 %v6081
      %v6227 = vunpack.c.l.b16 %v6084
      %v6228 = vunpack.c.l.b16 %v6087
      %v6229 = vunpack.c.l.b16 %v6090
      %v6230 = vunpack.c.l.b16 %v6093
      %v6231 = vunpack.c.l.b16 %v6096
      %v6232 = vunpack.c.l.b16 %v6099
      %v6233 = vunpack.c.l.b16 %v6102
      %v6234 = vunpack.c.l.b16 %v6105
      %v6235 = vunpack.c.l.b16 %v6108
      %v6236 = vunpack.c.l.b16 %v6111
      %v6237 = vunpack.c.l.b16 %v6114
      %v6238 = vunpack.c.l.b16 %v6117
      %v6239 = vunpack.c.l.b16 %v6120
      %v6240 = vunpack.c.l.b16 %v6123
      %v6241 = vunpack.c.l.b16 %v6126
      %v6242 = vunpack.c.l.b16 %v6129
      %v6243 = vunpack.c.l.b16 %v6132
      %v6244 = vunpack.c.l.b16 %v6135
      %v6245 = vunpack.c.l.b16 %v6138
      %v6246 = vunpack.c.l.b16 %v6141
      %v6247 = vunpack.c.l.b16 %v6144
      %v6248 = vunpack.c.l.b16 %v6147
      %v6249 = vunpack.c.l.b16 %v6150
      %v6250 = vunpack.c.l.b16 %v6153
      %v6251 = vunpack.c.l.b16 %v6156
      %v6252 = vunpack.c.l.b16 %v6159
      %v6253 = vunpack.c.l.b16 %v6162
      %v6254 = vunpack.c.l.b16 %v6165
      %v6255 = vunpack.c.l.b16 %v6168
      %v6256 = vunpack.c.l.b16 %v6171
      %v6257 = vunpack.c.l.b16 %v6174
      %v6258 = vunpack.c.l.b16 %v6177
      %v6259 = vunpack.c.l.b16 %v6180
      %v6260 = vunpack.c.l.b16 %v6183
      %v6261 = vunpack.c.l.b16 %v6186
      %v6262 = vunpack.c.l.b16 %v6189
      %v6263 = vunpack.c.l.b16 %v6192
      %v6264 = vunpack.c.l.b16 %v6195
      %v6265 = vunpack.c.l.b16 %v6198
      %v6266 = vunpack.c.l.b16 %v6201
      %v6267 = vrot.slane %v6204, 7
      %v6268 = vsel %vm868, %v6267, %v6203
      %v6269 = vrot.slane %v6205, 6
      %v6270 = vsel %vm872, %v6269, %v6268
      %v6271 = vrot.slane %v6206, 5
      %v6272 = vsel %vm876, %v6271, %v6270
      %v6273 = vrot.slane %v6207, 4
      %v6274 = vsel %vm3014, %v6273, %v6272
      %v6275 = vrot.slane %v6208, 3
      %v6276 = vsel %vm3017, %v6275, %v6274
      %v6277 = vrot.slane %v6209, 2
      %v6278 = vsel %vm3020, %v6277, %v6276
      %v6279 = vrot.slane %v6210, 1
      %v6280 = vsel %vm3023, %v6279, %v6278
      %v6281 = vrot.slane %v6212, 7
      %v6282 = vsel %vm868, %v6281, %v6211
      %v6283 = vrot.slane %v6213, 6
      %v6284 = vsel %vm872, %v6283, %v6282
      %v6285 = vrot.slane %v6214, 5
      %v6286 = vsel %vm876, %v6285, %v6284
      %v6287 = vrot.slane %v6215, 4
      %v6288 = vsel %vm3014, %v6287, %v6286
      %v6289 = vrot.slane %v6216, 3
      %v6290 = vsel %vm3017, %v6289, %v6288
      %v6291 = vrot.slane %v6217, 2
      %v6292 = vsel %vm3020, %v6291, %v6290
      %v6293 = vrot.slane %v6218, 1
      %v6294 = vsel %vm3023, %v6293, %v6292
      %v6295 = vrot.slane %v6220, 7
      %v6296 = vsel %vm868, %v6295, %v6219
      %v6297 = vrot.slane %v6221, 6
      %v6298 = vsel %vm872, %v6297, %v6296
      %v6299 = vrot.slane %v6222, 5
      %v6300 = vsel %vm876, %v6299, %v6298
      %v6301 = vrot.slane %v6223, 4
      %v6302 = vsel %vm3014, %v6301, %v6300
      %v6303 = vrot.slane %v6224, 3
      %v6304 = vsel %vm3017, %v6303, %v6302
      %v6305 = vrot.slane %v6225, 2
      %v6306 = vsel %vm3020, %v6305, %v6304
      %v6307 = vrot.slane %v6226, 1
      %v6308 = vsel %vm3023, %v6307, %v6306
      %v6309 = vrot.slane %v6228, 7
      %v6310 = vsel %vm868, %v6309, %v6227
      %v6311 = vrot.slane %v6229, 6
      %v6312 = vsel %vm872, %v6311, %v6310
      %v6313 = vrot.slane %v6230, 5
      %v6314 = vsel %vm876, %v6313, %v6312
      %v6315 = vrot.slane %v6231, 4
      %v6316 = vsel %vm3014, %v6315, %v6314
      %v6317 = vrot.slane %v6232, 3
      %v6318 = vsel %vm3017, %v6317, %v6316
      %v6319 = vrot.slane %v6233, 2
      %v6320 = vsel %vm3020, %v6319, %v6318
      %v6321 = vrot.slane %v6234, 1
      %v6322 = vsel %vm3023, %v6321, %v6320
      %v6323 = vrot.slane %v6236, 7
      %v6324 = vsel %vm868, %v6323, %v6235
      %v6325 = vrot.slane %v6237, 6
      %v6326 = vsel %vm872, %v6325, %v6324
      %v6327 = vrot.slane %v6238, 5
      %v6328 = vsel %vm876, %v6327, %v6326
      %v6329 = vrot.slane %v6239, 4
      %v6330 = vsel %vm3014, %v6329, %v6328
      %v6331 = vrot.slane %v6240, 3
      %v6332 = vsel %vm3017, %v6331, %v6330
      %v6333 = vrot.slane %v6241, 2
      %v6334 = vsel %vm3020, %v6333, %v6332
      %v6335 = vrot.slane %v6242, 1
      %v6336 = vsel %vm3023, %v6335, %v6334
      %v6337 = vrot.slane %v6244, 7
      %v6338 = vsel %vm868, %v6337, %v6243
      %v6339 = vrot.slane %v6245, 6
      %v6340 = vsel %vm872, %v6339, %v6338
      %v6341 = vrot.slane %v6246, 5
      %v6342 = vsel %vm876, %v6341, %v6340
      %v6343 = vrot.slane %v6247, 4
      %v6344 = vsel %vm3014, %v6343, %v6342
      %v6345 = vrot.slane %v6248, 3
      %v6346 = vsel %vm3017, %v6345, %v6344
      %v6347 = vrot.slane %v6249, 2
      %v6348 = vsel %vm3020, %v6347, %v6346
      %v6349 = vrot.slane %v6250, 1
      %v6350 = vsel %vm3023, %v6349, %v6348
      %v6351 = vrot.slane %v6252, 7
      %v6352 = vsel %vm868, %v6351, %v6251
      %v6353 = vrot.slane %v6253, 6
      %v6354 = vsel %vm872, %v6353, %v6352
      %v6355 = vrot.slane %v6254, 5
      %v6356 = vsel %vm876, %v6355, %v6354
      %v6357 = vrot.slane %v6255, 4
      %v6358 = vsel %vm3014, %v6357, %v6356
      %v6359 = vrot.slane %v6256, 3
      %v6360 = vsel %vm3017, %v6359, %v6358
      %v6361 = vrot.slane %v6257, 2
      %v6362 = vsel %vm3020, %v6361, %v6360
      %v6363 = vrot.slane %v6258, 1
      %v6364 = vsel %vm3023, %v6363, %v6362
      %v6365 = vrot.slane %v6260, 7
      %v6366 = vsel %vm868, %v6365, %v6259
      %v6367 = vrot.slane %v6261, 6
      %v6368 = vsel %vm872, %v6367, %v6366
      %v6369 = vrot.slane %v6262, 5
      %v6370 = vsel %vm876, %v6369, %v6368
      %v6371 = vrot.slane %v6263, 4
      %v6372 = vsel %vm3014, %v6371, %v6370
      %v6373 = vrot.slane %v6264, 3
      %v6374 = vsel %vm3017, %v6373, %v6372
      %v6375 = vrot.slane %v6265, 2
      %v6376 = vsel %vm3020, %v6375, %v6374
      %v6377 = vrot.slane %v6266, 1
      %v6378 = vsel %vm3023, %v6377, %v6376
      %v6379 = vpack.c.b16 %v6280, %v6280
      %v6380 = vpack.c.b16 %v6294, %v6294
      %v6381 = vpack.c.b16 %v6308, %v6308
      %v6382 = vpack.c.b16 %v6322, %v6322
      %v6383 = vpack.c.b16 %v6336, %v6336
      %v6384 = vpack.c.b16 %v6350, %v6350
      %v6385 = vpack.c.b16 %v6364, %v6364
      %v6386 = vpack.c.b16 %v6378, %v6378
      %6387 = vrot.lane.b32.xlu0 %v6379, 32
      %v6388 = vpop.permute.xlu0 %6387
      %6389 = vrot.lane.b32.xlu0 %v6380, 32
      %v6390 = vpop.permute.xlu0 %6389
      %6391 = vrot.lane.b32.xlu0 %v6381, 32
      %v6392 = vpop.permute.xlu0 %6391
      %6393 = vrot.lane.b32.xlu0 %v6382, 32
      %v6394 = vpop.permute.xlu0 %6393
      %6395 = vrot.lane.b32.xlu0 %v6383, 32
      %v6396 = vpop.permute.xlu0 %6395
      %6397 = vrot.lane.b32.xlu0 %v6384, 32
      %v6398 = vpop.permute.xlu0 %6397
      %6399 = vrot.lane.b32.xlu0 %v6385, 32
      %v6400 = vpop.permute.xlu0 %6399
      %6401 = vrot.lane.b32.xlu0 %v6386, 32
      %v6402 = vpop.permute.xlu0 %6401
      %vm6403 = vcmask 31744
      %v6406 = vsel %vm6403, %v3123, %v3572
      %v6409 = vsel %vm6403, %v3124, %v3574
      %v6412 = vsel %vm6403, %v3125, %v3576
      %v6415 = vsel %vm6403, %v3126, %v3578
      %v6418 = vsel %vm6403, %v3127, %v3580
      %v6421 = vsel %vm6403, %v3128, %v3582
      %v6424 = vsel %vm6403, %v3129, %v3584
      %v6427 = vsel %vm6403, %v3130, %v3586
      %vm6428 = vcmask 64512
      %v6430 = vsel %vm6428, %v6406, %v3964
      %v6432 = vsel %vm6428, %v6409, %v3966
      %v6434 = vsel %vm6428, %v6412, %v3968
      %v6436 = vsel %vm6428, %v6415, %v3970
      %v6438 = vsel %vm6428, %v6418, %v3972
      %v6440 = vsel %vm6428, %v6421, %v3974
      %v6442 = vsel %vm6428, %v6424, %v3976
      %v6444 = vsel %vm6428, %v6427, %v3978
      %vm6445 = vcmask 97280
      %v6447 = vsel %vm6445, %v6430, %v4356
      %v6449 = vsel %vm6445, %v6432, %v4358
      %v6451 = vsel %vm6445, %v6434, %v4360
      %v6453 = vsel %vm6445, %v6436, %v4362
      %v6455 = vsel %vm6445, %v6438, %v4364
      %v6457 = vsel %vm6445, %v6440, %v4366
      %v6459 = vsel %vm6445, %v6442, %v4368
      %v6461 = vsel %vm6445, %v6444, %v4370
      %vm6462 = vcmask 130048
      %v6464 = vsel %vm6462, %v6447, %v4812
      %v6466 = vsel %vm6462, %v6449, %v4814
      %v6468 = vsel %vm6462, %v6451, %v4816
      %v6470 = vsel %vm6462, %v6453, %v4818
      %v6472 = vsel %vm6462, %v6455, %v4820
      %v6474 = vsel %vm6462, %v6457, %v4822
      %v6476 = vsel %vm6462, %v6459, %v4824
      %v6478 = vsel %vm6462, %v6461, %v4826
      %vm6479 = vcmask 162816
      %v6481 = vsel %vm6479, %v6464, %v5204
      %v6483 = vsel %vm6479, %v6466, %v5206
      %v6485 = vsel %vm6479, %v6468, %v5208
      %v6487 = vsel %vm6479, %v6470, %v5210
      %v6489 = vsel %vm6479, %v6472, %v5212
      %v6491 = vsel %vm6479, %v6474, %v5214
      %v6493 = vsel %vm6479, %v6476, %v5216
      %v6495 = vsel %vm6479, %v6478, %v5218
      %vm6496 = vcmask 195584
      %v6498 = vsel %vm6496, %v6481, %v5596
      %v6500 = vsel %vm6496, %v6483, %v5598
      %v6502 = vsel %vm6496, %v6485, %v5600
      %v6504 = vsel %vm6496, %v6487, %v5602
      %v6506 = vsel %vm6496, %v6489, %v5604
      %v6508 = vsel %vm6496, %v6491, %v5606
      %v6510 = vsel %vm6496, %v6493, %v5608
      %v6512 = vsel %vm6496, %v6495, %v5610
      %vm6513 = vcmask 228352
      %v6515 = vsel %vm6513, %v6498, %v5996
      %v6517 = vsel %vm6513, %v6500, %v5998
      %v6519 = vsel %vm6513, %v6502, %v6000
      %v6521 = vsel %vm6513, %v6504, %v6002
      %v6523 = vsel %vm6513, %v6506, %v6004
      %v6525 = vsel %vm6513, %v6508, %v6006
      %v6527 = vsel %vm6513, %v6510, %v6008
      %v6529 = vsel %vm6513, %v6512, %v6010
      %vm6530 = vcmask 261120
      %v6532 = vsel %vm6530, %v6515, %v6388
      %v6534 = vsel %vm6530, %v6517, %v6390
      %v6536 = vsel %vm6530, %v6519, %v6392
      %v6538 = vsel %vm6530, %v6521, %v6394
      %v6540 = vsel %vm6530, %v6523, %v6396
      %v6542 = vsel %vm6530, %v6525, %v6398
      %v6544 = vsel %vm6530, %v6527, %v6400
      %v6546 = vsel %vm6530, %v6529, %v6402
      %v6547 = vld [vmem:[%s4] sm:$0xf]
      %v6548 = vld [vmem:[%s4 + $0x4] sm:$0xf]
      %v6549 = vld [vmem:[%s4 + $0x8] sm:$0xf]
      %v6550 = vld [vmem:[%s4 + $0xc] sm:$0xf]
      %v6551 = vld [vmem:[%s4 + $0x10] sm:$0x3]
      %v6560 = vunpack.c.l.b16 %v6532
      %v6561 = vunpack.c.l.b16 %v6534
      %v6562 = vunpack.c.l.b16 %v6536
      %v6563 = vunpack.c.l.b16 %v6538
      %v6564 = vunpack.c.l.b16 %v6540
      %v6565 = vunpack.c.l.b16 %v6542
      %v6566 = vunpack.c.l.b16 %v6544
      %v6567 = vunpack.c.l.b16 %v6546
      %v6568 = vpack.c.b16 %v6561, %v6560
      %v6569 = vpack.c.b16 %v6563, %v6562
      %v6570 = vpack.c.b16 %v6565, %v6564
      %v6571 = vpack.c.b16 %v6567, %v6566
      %v6577 = vunpack.c.l.b16 %v6547
      %v6578 = vunpack.c.l.b16 %v6548
      %v6579 = vunpack.c.l.b16 %v6549
      %v6580 = vunpack.c.l.b16 %v6550
      %v6581 = vunpack.c.l.b16 %v6551
      %v6582 = vpack.c.b16 %v6578, %v6577
      %v6583 = vpack.c.b16 %v6580, %v6579
      %v6584 = vpack.c.b16 %v6581, %v6581
      %vm6587 = vcmask 293888
      %v6589 = vsel %vm6587, %v6568, 0
      %v6592 = vsel %vm6587, %v6569, 0
      %v6595 = vsel %vm6587, %v6570, 0
      %v6598 = vsel %vm6587, %v6571, 0
      %vm6600 = vcmask 1041408
      %v6602 = vsel %vm6600, %v6584, 0
      %6604 = vmatpush.bf16.msra.mxu0 0
      %6605 = vmatpush.bf16.msra.mxu0 0
      %6606 = vmatpush.bf16.msra.mxu0 0
      %6607 = vmatpush.bf16.msra.mxu0 0
      %6608 = vmatpush.bf16.msra.mxu0 0
      %6609 = vmatpush.bf16.msra.mxu0 %v6602
      %6610 = vmatpush.bf16.msra.mxu0 %v6583
      %6611 = vmatpush.bf16.msra.mxu0 %v6582
      %6612 = vmatmul.bf16.gmra.mxu0 %v6589
      %v6613 = vpop.f32.mrf.mxu0
      %v6614 = vadd.f32 0.0, %v6613
      %v6615 = vpop.f32.mrf.mxu0
      %v6616 = vadd.f32 0.0, %v6615
      %6617 = vmatmul.bf16.gmra.mxu0 %v6592
      %v6618 = vpop.f32.mrf.mxu0
      %v6619 = vadd.f32 0.0, %v6618
      %v6620 = vpop.f32.mrf.mxu0
      %v6621 = vadd.f32 0.0, %v6620
      %6622 = vmatmul.bf16.gmra.mxu0 %v6595
      %v6623 = vpop.f32.mrf.mxu0
      %v6624 = vadd.f32 0.0, %v6623
      %v6625 = vpop.f32.mrf.mxu0
      %v6626 = vadd.f32 0.0, %v6625
      %6627 = vmatmul.bf16.gmra.mxu0 %v6598
      %v6628 = vpop.f32.mrf.mxu0
      %v6629 = vadd.f32 0.0, %v6628
      %v6630 = vpop.f32.mrf.mxu0
      %v6631 = vadd.f32 0.0, %v6630
      %6632 = vdwg.mxu0
      %v6633 = vld [vmem:[%s5] sm:$0x1]
      %v6635 = vperm.slane %v6633, 0
      %v6637 = vmul.f32 %v6614, %v6635
      %v6638 = vmul.f32 %v6616, %v6635
      %v6639 = vmul.f32 %v6619, %v6635
      %v6640 = vmul.f32 %v6621, %v6635
      %v6641 = vmul.f32 %v6624, %v6635
      %v6642 = vmul.f32 %v6626, %v6635
      %v6643 = vmul.f32 %v6629, %v6635
      %v6644 = vmul.f32 %v6631, %v6635
      %v6645 = vld [vmem:[%s6] sm:$0x1]
      %v6647 = vperm.slane %v6645, 0
      %v6649 = vadd.f32 %v6637, %v6647
      %v6650 = vadd.f32 %v6638, %v6647
      %v6651 = vadd.f32 %v6639, %v6647
      %v6652 = vadd.f32 %v6640, %v6647
      %v6653 = vadd.f32 %v6641, %v6647
      %v6654 = vadd.f32 %v6642, %v6647
      %v6655 = vadd.f32 %v6643, %v6647
      %v6656 = vadd.f32 %v6644, %v6647
      %v6657 = vmax.f32 %v6649, 0.0
      %v6658 = vmax.f32 %v6650, 0.0
      %v6659 = vmax.f32 %v6651, 0.0
      %v6660 = vmax.f32 %v6652, 0.0
      %v6661 = vmax.f32 %v6653, 0.0
      %v6662 = vmax.f32 %v6654, 0.0
      %v6663 = vmax.f32 %v6655, 0.0
      %v6664 = vmax.f32 %v6656, 0.0
      %v6665 = vpack.c.bf16 %v6657, %v6657
      %v6666 = vpack.c.bf16 %v6658, %v6658
      %v6667 = vpack.c.bf16 %v6659, %v6659
      %v6668 = vpack.c.bf16 %v6660, %v6660
      %v6669 = vpack.c.bf16 %v6661, %v6661
      %v6670 = vpack.c.bf16 %v6662, %v6662
      %v6671 = vpack.c.bf16 %v6663, %v6663
      %v6672 = vpack.c.bf16 %v6664, %v6664
      %6673 = vst.msk [vmem:[%s278] sm:$0xf] %vm281, %v6665
      %6674 = vst.msk [vmem:[%s278 + $0x4] sm:$0xf] %vm281, %v6666
      %6675 = vst.msk [vmem:[%s278 + $0x8] sm:$0xf] %vm281, %v6667
      %6676 = vst.msk [vmem:[%s278 + $0xc] sm:$0xf] %vm281, %v6668
      %6677 = vst.msk [vmem:[%s278 + $0x10] sm:$0xf] %vm281, %v6669
      %6678 = vst.msk [vmem:[%s278 + $0x14] sm:$0xf] %vm281, %v6670
      %6679 = vst.msk [vmem:[%s278 + $0x18] sm:$0xf] %vm281, %v6671
      %6680 = vst.msk [vmem:[%s278 + $0x1c] sm:$0xf] %vm281, %v6672
      %s6681 = smul.u32 8, %s18
      %p6682 = scmp.lt.s32.totalorder %s6681, 15
      %s6683 = scalar_select %p6682, %s6681, 15
      %s6684 = smul.addr %s6683, 4
      %s6685 = scalar_lea.vmem %s7, %s6684
      // Predicated region
      $region56: #{bottleneck_forward.2} parent=47 // pred_check
        %p6686 = pneg %p188
      $region57: #{bottleneck_forward.2} parent=47 // pred_check_branch
        %6688 = sbr.rel (%p6686) target = $region59
      $region58: #{bottleneck_forward.2} parent=47 // pred_region
        %s6689 = smul.u32 8, %s18
      $region59: #{bottleneck_forward.2} parent=47 // pred_fallthru
        _
    $region48: #{bottleneck_forward.2} parent=5 // pred_fallthru
      _
    %p6690 = scmp.le.s32.totalorder 2, %s13
    // Predicated region
    $region60: #{bottleneck_forward.2} parent=5 // pred_check
      %p6691 = pneg %p6690
    $region61: #{bottleneck_forward.2} parent=5 // pred_check_branch
      %6693 = sbr.rel (%p6691) target = $region63
    $region62: #{bottleneck_forward.2} parent=5 // pred_region
      %s6694 = ssub.s32 %s13, 2
      // Predicated region
      $region64: #{bottleneck_forward.2} parent=62 // pred_check
        %p6695 = pneg %p194
      $region65: #{bottleneck_forward.2} parent=62 // pred_check_branch
        %6697 = sbr.rel (%p6695) target = $region67
      $region66: #{bottleneck_forward.2} parent=62 // pred_region
        %s6698 = smul.u32 8, %s19
        %p6699 = scmp.lt.s32.totalorder %s6698, 15
        %s6700 = scalar_select %p6699, %s6698, 15
        %s6701 = smul.addr %s6700, 4
        %s6702 = scalar_lea.vmem %s7, %s6701
      $region67: #{bottleneck_forward.2} parent=62 // pred_fallthru
        _
    $region63: #{bottleneck_forward.2} parent=5 // pred_fallthru
      _
  $region6: #{bottleneck_forward.2} parent=0 // loop_footer
    %s17 = sadd.s32 1, %s13
  $region7: #{bottleneck_forward.2} parent=0 // loop_footer_branch
    %12 = sbr.rel target = $region3
  $region8: #{bottleneck_forward.2} parent=0 // loop_exit
    _

</llo_original>
